<compile_context>
chip_gen: v6e
topology: v6e:2x2x1
jax: 0.10.0
libtpu: 0.0.40
codegen_flags: <defaults>
</compile_context>

<pallas_src>
import functools

import jax
import jax.numpy as jnp
from jax.experimental import pallas as pl
from jax.experimental.pallas import tpu as pltpu

# ---- static configuration (mirrors the module's __init__ arguments) ----
POS_WEIGHT = 10.0        # BCEWithLogitsLoss(pos_weight=10.0)
IOU_SMOOTH = 1.0         # IoULoss smooth term
VAR_WEIGHT = 1.0         # NDPushPullLoss(1.0, 1.0, 1.0, 5.0, 200)
DIST_WEIGHT = 1.0
MARGIN_VAR = 1.0
MARGIN_DIST = 5.0
IGNORE_LABEL = 200.0
MAX_INSTANCES = 4

EMB_DIM = 2              # instance-embedding channels
N_HEAD_CH = 1 + EMB_DIM + 1 + 1 + 1 + EMB_DIM   # pred, emb, off_y, z, pred2d, emb2d
LANE = 128
SUBLANE = 8

# ---- per-batch partial-sum rows (lane-partial (1,128); scalars live in lane 0) ----
_Q_BCE3, _Q_I3, _Q_P3, _Q_T3 = 0, 1, 2, 3
_Q_OFF, _Q_MSE = 4, 5
_Q_PLS3, _Q_PLC3, _Q_PSS3, _Q_PSC3 = 6, 7, 8, 9
_Q_BCE2, _Q_I2, _Q_P2, _Q_T2 = 10, 11, 12, 13
_Q_PLS2, _Q_PLC2, _Q_PSS2, _Q_PSC2 = 14, 15, 16, 17
N_Q = 18


# --------------------------------------------------------------------------
# in-kernel helpers (operate on (r_pad, 128) dense per-channel maps)
# --------------------------------------------------------------------------
def _lane_sum(m):
    # sublane-only reduce; the cross-lane reduce is deferred to the JAX finalize
    return jnp.sum(m, axis=0, keepdims=True)            # (1, 128)


def _seg_rows(logits, target, mask):
    """BCE-with-logits(pos_weight) + IoU partial rows; one shared exp, approx rcp."""
    z = jnp.exp(-jnp.abs(logits))                        # shared exp(-|x|)
    sp_neg = jnp.maximum(-logits, 0.0) + jnp.log(1.0 + z)   # softplus(-x)
    bce = (1.0 - target) * logits + (1.0 + (POS_WEIGHT - 1.0) * target) * sp_neg
    sig = jnp.where(logits >= 0.0, 1.0, z) * pl.reciprocal(1.0 + z, approx=True)
    if mask is not None:                                 # neutralize padded rows
        bce = bce * mask
        sig_for_psum = sig * mask
    else:
        sig_for_psum = sig
    return [_lane_sum(bce), _lane_sum(sig * target),
            _lane_sum(sig_for_psum), _lane_sum(target)]


def _offset_row(off_logits, gseg, goff):
    """BCELoss(gseg*sigmoid(off), goff) in logits form (gseg is binary)."""
    z = jnp.exp(-jnp.abs(off_logits))
    sp_neg = jnp.maximum(-off_logits, 0.0) + jnp.log(1.0 + z)   # -log(sigmoid(x))
    sp_pos = sp_neg + off_logits                                 # -log(1-sigmoid(x))
    nl_p = jnp.minimum(sp_neg, 100.0)        # PyTorch BCELoss clamps log at -100
    nl_1mp = jnp.minimum(sp_pos, 100.0)
    elem = (gseg * (goff * nl_p + (1.0 - goff) * nl_1mp)
            + (1.0 - gseg) * (100.0 * goff))             # gseg==0 -> p==0 branch
    return _lane_sum(elem)


def _push_pull_rows(feats, inst, lane0):
    """NDPushPullLoss partial rows for one image.

    Pull-hinge sums stay lane-partial; per-instance counts/centers need full
    in-kernel reductions because they feed the per-pixel distance map.
    """
    valid = jnp.where(inst < IGNORE_LABEL, 1.0, 0.0)
    pull_row = jnp.zeros((1, LANE), jnp.float32)
    pull_c = jnp.float32(0.0)
    push_s = jnp.float32(0.0)
    push_c = jnp.float32(0.0)
    centers, present = [], []
    for k in range(1, MAX_INSTANCES + 1):
        m = jnp.where(inst == jnp.float32(k), 1.0, 0.0) * valid   # (r_pad, 128)
        cnt = jnp.sum(m)
        pres = jnp.where(cnt > 0.0, 1.0, 0.0)
        inv = 1.0 / jnp.maximum(cnt, 1.0)
        cks = [jnp.sum(f * m) * inv for f in feats]               # scalar centers
        dist = jnp.abs(feats[0] - cks[0])
        for e in range(1, len(feats)):
            dist = dist + jnp.abs(feats[e] - cks[e])
        hinge = jnp.maximum(dist - MARGIN_VAR, 0.0) * m
        pull_row = pull_row + (pres * inv) * _lane_sum(hinge)
        pull_c = pull_c + pres
        centers.append(cks)
        present.append(pres)
    # pairwise push term: pure scalar math (K=4 -> 12 ordered pairs)
    for i in range(MAX_INSTANCES):
        for j in range(MAX_INSTANCES):
            if i == j:
                continue
            d = jnp.float32(0.0)
            for e in range(len(feats)):
                d = d + jnp.abs(centers[i][e] - centers[j][e])
            both = present[i] * present[j]
            push_s = push_s + both * jnp.maximum(MARGIN_DIST - d, 0.0)
            push_c = push_c + both
    return [pull_row, pull_c * lane0, push_s * lane0, push_c * lane0]


# --------------------------------------------------------------------------
# fused kernel: 1x1-conv head + all loss partial sums, parallel grid over batch
# --------------------------------------------------------------------------
def _fused_loss_kernel(w_ref, b_ref, x_ref,
                       gseg_ref, ginst_ref, goff_ref, gz_ref,
                       iseg_ref, iinst_ref,
                       pred_ref, part_ref, *, r_valid, r_pad):
    cin = x_ref.shape[1]

    def head(c):
        # 1x1-conv channel as VPU FMAs with SMEM scalar weights; x is re-loaded
        # from VMEM at the point of use so only a few full maps stay live.
        acc = x_ref[0, 0] * w_ref[c, 0]
        for ci in range(1, cin):
            acc = acc + x_ref[0, ci] * w_ref[c, ci]
        return acc + b_ref[c]

    lane0 = (jax.lax.broadcasted_iota(jnp.int32, (1, LANE), 1) == 0
             ).astype(jnp.float32)
    if r_valid < r_pad:
        mask = (jax.lax.broadcasted_iota(jnp.int32, (r_pad, LANE), 0) < r_valid
                ).astype(jnp.float32)
    else:
        mask = None

    rows = []

    # ---- 3D seg (pred channel), consumed immediately ----
    gseg = gseg_ref[0]
    pred = head(0)
    pred_ref[0] = pred                                   # lane-dense logits output
    rows += _seg_rows(pred, gseg, mask)

    # ---- offset loss (logits-form BCE, gseg binary) ----
    rows.append(_offset_row(head(3), gseg, goff_ref[0]))

    # ---- z loss (MSE on gseg*z) ----
    dz = gseg * head(4) - gz_ref[0]
    rows.append(_lane_sum(dz * dz))

    # ---- 3D embedding push-pull ----
    rows += _push_pull_rows([head(1), head(2)], ginst_ref[0], lane0)

    # ---- 2D seg ----
    rows += _seg_rows(head(5), iseg_ref[0], mask)

    # ---- 2D embedding push-pull ----
    rows += _push_pull_rows([head(6), head(7)], iinst_ref[0], lane0)

    part_ref[0] = jnp.concatenate(rows, axis=0)          # (N_Q, 128) lane-dense


# --------------------------------------------------------------------------
# eval-path kernel: head 'pred' channel only
# --------------------------------------------------------------------------
def _head_pred_kernel(w_ref, b_ref, x_ref, pred_ref):
    cin = x_ref.shape[1]
    acc = x_ref[0, 0] * w_ref[0, 0]
    for ci in range(1, cin):
        acc = acc + x_ref[0, ci] * w_ref[0, ci]
    pred_ref[0] = acc + b_ref[0]


# --------------------------------------------------------------------------
# Combine_Model_and_Loss.forward equivalent
# --------------------------------------------------------------------------
def combine_model_and_loss_forward(x, w, bias,
                                   gt_seg=None, gt_instance=None,
                                   gt_offset_y=None, gt_z=None,
                                   image_gt_segment=None, image_gt_instance=None,
                                   train=True):
    B, cin, H, W = x.shape
    hw = H * W
    assert hw % LANE == 0, "H*W must be a multiple of 128"
    R = hw // LANE
    r_pad = ((R + SUBLANE - 1) // SUBLANE) * SUBLANE     # (8,128)-aligned tiles

    def rmaps(t):
        t = t.reshape(B, -1, R, LANE).astype(jnp.float32)
        if r_pad != R:
            t = jnp.pad(t, ((0, 0), (0, 0), (0, r_pad - R), (0, 0)))
        return t

    xr = rmaps(x)                                        # (B, cin, r_pad, 128)
    wf = w.astype(jnp.float32)                           # (N_HEAD_CH, cin)
    bf = bias.astype(jnp.float32)                        # (N_HEAD_CH,)

    smem = pltpu.MemorySpace.SMEM
    x_spec = pl.BlockSpec((1, cin, r_pad, LANE), lambda b: (b, 0, 0, 0))
    map_spec = pl.BlockSpec((1, r_pad, LANE), lambda b: (b, 0, 0))
    cparams = pltpu.CompilerParams(
        dimension_semantics=("parallel",),               # megacore-parallel batch
        vmem_limit_bytes=64 * 1024 * 1024)

    if not train:
        pred_r = pl.pallas_call(
            _head_pred_kernel,
            out_shape=jax.ShapeDtypeStruct((B, r_pad, LANE), jnp.float32),
            grid_spec=pltpu.PrefetchScalarGridSpec(
                num_scalar_prefetch=0, grid=(B,),
                in_specs=[pl.BlockSpec(memory_space=smem),
                          pl.BlockSpec(memory_space=smem),
                          x_spec],
                out_specs=map_spec),
            compiler_params=cparams,
        )(wf, bf, xr)
        return pred_r.reshape(B, r_pad * LANE)[:, :hw].reshape(B, 1, H, W)

    def gt(t):
        return rmaps(t)[:, 0]                            # (B, r_pad, 128)

    kernel = functools.partial(_fused_loss_kernel, r_valid=R, r_pad=r_pad)

    cost = pl.CostEstimate(
        flops=int(B * r_pad * LANE * (2 * cin * N_HEAD_CH + 220)),
        transcendentals=int(B * r_pad * LANE * 8),
        bytes_accessed=int(4 * B * r_pad * LANE * (cin + 7) + 4 * B * N_Q * LANE))

    pred_r, partials = pl.pallas_call(
        kernel,
        out_shape=(jax.ShapeDtypeStruct((B, r_pad, LANE), jnp.float32),
                   jax.ShapeDtypeStruct((B, N_Q, LANE), jnp.float32)),
        grid_spec=pltpu.PrefetchScalarGridSpec(
            num_scalar_prefetch=0, grid=(B,),
            in_specs=[pl.BlockSpec(memory_space=smem),   # w  (SMEM scalars)
                      pl.BlockSpec(memory_space=smem),   # bias
                      x_spec,                            # x  (B, cin, r_pad, 128)
                      map_spec, map_spec, map_spec, map_spec,  # gt seg/inst/off/z
                      map_spec, map_spec],               # image seg/inst
            out_specs=(map_spec,                         # pred (lane-dense)
                       pl.BlockSpec((1, N_Q, LANE), lambda b: (b, 0, 0)))),
        compiler_params=cparams,
        cost_estimate=cost,
    )(wf, bf, xr,
      gt(gt_seg), gt(gt_instance), gt(gt_offset_y), gt(gt_z),
      gt(image_gt_segment), gt(image_gt_instance))

    pred = pred_r.reshape(B, r_pad * LANE)[:, :hw].reshape(B, 1, H, W)

    # ---- ~30-op finalize in plain JAX (keeps the batch grid axis parallel) ----
    s = jnp.sum(partials, axis=(0, 2))                   # (N_Q,)
    n = jnp.float32(B * hw)

    def iou(inter, psum, tsum):
        union = psum + tsum - inter
        return 1.0 - (inter + IOU_SMOOTH) / (union + IOU_SMOOTH)

    def mean_or_zero(v, c):
        return jnp.where(c > 0.0, v / jnp.maximum(c, 1.0), 0.0)

    loss_seg = s[_Q_BCE3] / n + iou(s[_Q_I3], s[_Q_P3], s[_Q_T3])
    loss_emb = (VAR_WEIGHT * mean_or_zero(s[_Q_PLS3], s[_Q_PLC3])
                + DIST_WEIGHT * mean_or_zero(s[_Q_PSS3], s[_Q_PSC3]))
    loss_offset = 60.0 * (s[_Q_OFF] / n)
    loss_z = 30.0 * (s[_Q_MSE] / n)
    loss_total = 3.0 * loss_seg + 0.5 * loss_emb

    loss_seg_2d = s[_Q_BCE2] / n + iou(s[_Q_I2], s[_Q_P2], s[_Q_T2])
    loss_emb_2d = (VAR_WEIGHT * mean_or_zero(s[_Q_PLS2], s[_Q_PLC2])
                   + DIST_WEIGHT * mean_or_zero(s[_Q_PSS2], s[_Q_PSC2]))
    loss_total_2d = 3.0 * loss_seg_2d + 0.5 * loss_emb_2d

    return (pred,
            loss_total.reshape(1),                       # == .unsqueeze(0)
            loss_total_2d.reshape(1),
            loss_offset.reshape(1),
            loss_z.reshape(1))


# --------------------------------------------------------------------------
if __name__ == "__main__":
    key = jax.random.PRNGKey(0)
    B, CIN, H, W = 2, 4, 16, 16

    keys = jax.random.split(key, 8)
    x = jax.random.normal(keys[0], (B, CIN, H, W), dtype=jnp.float32)

    # deterministic synthetic "model" parameters (1x1 conv head)
    w = 0.1 * jax.random.normal(keys[1], (N_HEAD_CH, CIN), dtype=jnp.float32)
    bias = jnp.zeros((N_HEAD_CH,), dtype=jnp.float32)

    # deterministic synthetic ground truth
    gt_seg = jax.random.bernoulli(keys[2], 0.3, (B, 1, H, W)).astype(jnp.float32)
    gt_instance = (jax.random.randint(keys[3], (B, 1, H, W), 0, MAX_INSTANCES + 1)
                   .astype(jnp.float32) * gt_seg)
    gt_offset_y = jax.random.uniform(keys[4], (B, 1, H, W), dtype=jnp.float32) * gt_seg
    gt_z = jax.random.normal(keys[5], (B, 1, H, W), dtype=jnp.float32) * gt_seg
    image_gt_segment = jax.random.bernoulli(keys[6], 0.3, (B, 1, H, W)).astype(jnp.float32)
    image_gt_instance = (jax.random.randint(keys[7], (B, 1, H, W), 0, MAX_INSTANCES + 1)
                         .astype(jnp.float32) * image_gt_segment)

    outs = combine_model_and_loss_forward(
        x, w, bias, gt_seg, gt_instance, gt_offset_y, gt_z,
        image_gt_segment, image_gt_instance, train=True)
    jax.block_until_ready(outs)

    pred_eval = combine_model_and_loss_forward(x, w, bias, train=False)
    jax.block_until_ready(pred_eval)

    print("KERNEL_OK")
</pallas_src>

<mosaic_0001>
module attributes {stable_mosaic.version = 11 : i64} {
  func.func @_fused_loss_kernel(%arg0: i32, %arg1: memref<8x4xf32, #tpu.memory_space<smem>>, %arg2: memref<8xf32, #tpu.memory_space<smem>>, %arg3: memref<1x4x8x128xf32, #tpu.memory_space<vmem>>, %arg4: memref<1x8x128xf32, #tpu.memory_space<vmem>>, %arg5: memref<1x8x128xf32, #tpu.memory_space<vmem>>, %arg6: memref<1x8x128xf32, #tpu.memory_space<vmem>>, %arg7: memref<1x8x128xf32, #tpu.memory_space<vmem>>, %arg8: memref<1x8x128xf32, #tpu.memory_space<vmem>>, %arg9: memref<1x8x128xf32, #tpu.memory_space<vmem>>, %arg10: memref<1x8x128xf32, #tpu.memory_space<vmem>>, %arg11: memref<1x18x128xf32, #tpu.memory_space<vmem>>) attributes {dimension_semantics = [#tpu.dimension_semantics<parallel>], iteration_bounds = array<i64: 2>, scalar_prefetch = 0 : i64, scratch_operands = 0 : i64, tpu.core_type = #tpu.core_type<tc>, window_params = [{transform_indices = @transform_0, window_bounds = array<i64: 8, 4>}, {transform_indices = @transform_1, window_bounds = array<i64: 8>}, {transform_indices = @transform_2, window_bounds = array<i64: 1, 4, 8, 128>}, {transform_indices = @transform_3, window_bounds = array<i64: 1, 8, 128>}, {transform_indices = @transform_4, window_bounds = array<i64: 1, 8, 128>}, {transform_indices = @transform_5, window_bounds = array<i64: 1, 8, 128>}, {transform_indices = @transform_6, window_bounds = array<i64: 1, 8, 128>}, {transform_indices = @transform_7, window_bounds = array<i64: 1, 8, 128>}, {transform_indices = @transform_8, window_bounds = array<i64: 1, 8, 128>}, {transform_indices = @transform_9, window_bounds = array<i64: 1, 8, 128>}, {transform_indices = @transform_10, window_bounds = array<i64: 1, 18, 128>}]} {
    %0 = tpu.iota {dimensions = array<i32: 1>} : vector<1x128xi32>
    %c0_i32 = arith.constant 0 : i32
    %1 = vector.broadcast %c0_i32 : i32 to vector<1x128xi32>
    %2 = arith.cmpi eq, %0, %1 : vector<1x128xi32>
    %3 = arith.extui %2 : vector<1x128xi1> to vector<1x128xi32>
    %4 = arith.sitofp %3 : vector<1x128xi32> to vector<1x128xf32>
    %5 = tpu.iota {dimensions = array<i32: 0>} : vector<8x128xi32>
    %c2_i32 = arith.constant 2 : i32
    %6 = vector.broadcast %c2_i32 : i32 to vector<8x128xi32>
    %7 = arith.cmpi slt, %5, %6 : vector<8x128xi32>
    %8 = arith.extui %7 : vector<8x128xi1> to vector<8x128xi32>
    %9 = arith.sitofp %8 : vector<8x128xi32> to vector<8x128xf32>
    %c0 = arith.constant 0 : index
    %c0_0 = arith.constant 0 : index
    %c0_1 = arith.constant 0 : index
    %10 = vector.load %arg4[%c0, %c0_0, %c0_1] : memref<1x8x128xf32, #tpu.memory_space<vmem>>, vector<1x8x128xf32>
    %11 = vector.shape_cast %10 : vector<1x8x128xf32> to vector<8x128xf32>
    %c0_2 = arith.constant 0 : index
    %c0_3 = arith.constant 0 : index
    %c0_4 = arith.constant 0 : index
    %c0_5 = arith.constant 0 : index
    %12 = vector.load %arg3[%c0_2, %c0_3, %c0_4, %c0_5] : memref<1x4x8x128xf32, #tpu.memory_space<vmem>>, vector<1x1x8x128xf32>
    %13 = vector.shape_cast %12 : vector<1x1x8x128xf32> to vector<8x128xf32>
    %c0_6 = arith.constant 0 : index
    %c0_7 = arith.constant 0 : index
    %14 = memref.load %arg1[%c0_6, %c0_7] : memref<8x4xf32, #tpu.memory_space<smem>>
    %15 = vector.broadcast %14 : f32 to vector<8x128xf32>
    %16 = arith.mulf %13, %15 : vector<8x128xf32>
    %c0_8 = arith.constant 0 : index
    %c1 = arith.constant 1 : index
    %c0_9 = arith.constant 0 : index
    %c0_10 = arith.constant 0 : index
    %17 = vector.load %arg3[%c0_8, %c1, %c0_9, %c0_10] : memref<1x4x8x128xf32, #tpu.memory_space<vmem>>, vector<1x1x8x128xf32>
    %18 = vector.shape_cast %17 : vector<1x1x8x128xf32> to vector<8x128xf32>
    %c0_11 = arith.constant 0 : index
    %c1_12 = arith.constant 1 : index
    %19 = memref.load %arg1[%c0_11, %c1_12] : memref<8x4xf32, #tpu.memory_space<smem>>
    %20 = vector.broadcast %19 : f32 to vector<8x128xf32>
    %21 = arith.mulf %18, %20 : vector<8x128xf32>
    %22 = arith.addf %16, %21 : vector<8x128xf32>
    %c0_13 = arith.constant 0 : index
    %c2 = arith.constant 2 : index
    %c0_14 = arith.constant 0 : index
    %c0_15 = arith.constant 0 : index
    %23 = vector.load %arg3[%c0_13, %c2, %c0_14, %c0_15] : memref<1x4x8x128xf32, #tpu.memory_space<vmem>>, vector<1x1x8x128xf32>
    %24 = vector.shape_cast %23 : vector<1x1x8x128xf32> to vector<8x128xf32>
    %c0_16 = arith.constant 0 : index
    %c2_17 = arith.constant 2 : index
    %25 = memref.load %arg1[%c0_16, %c2_17] : memref<8x4xf32, #tpu.memory_space<smem>>
    %26 = vector.broadcast %25 : f32 to vector<8x128xf32>
    %27 = arith.mulf %24, %26 : vector<8x128xf32>
    %28 = arith.addf %22, %27 : vector<8x128xf32>
    %c0_18 = arith.constant 0 : index
    %c3 = arith.constant 3 : index
    %c0_19 = arith.constant 0 : index
    %c0_20 = arith.constant 0 : index
    %29 = vector.load %arg3[%c0_18, %c3, %c0_19, %c0_20] : memref<1x4x8x128xf32, #tpu.memory_space<vmem>>, vector<1x1x8x128xf32>
    %30 = vector.shape_cast %29 : vector<1x1x8x128xf32> to vector<8x128xf32>
    %c0_21 = arith.constant 0 : index
    %c3_22 = arith.constant 3 : index
    %31 = memref.load %arg1[%c0_21, %c3_22] : memref<8x4xf32, #tpu.memory_space<smem>>
    %32 = vector.broadcast %31 : f32 to vector<8x128xf32>
    %33 = arith.mulf %30, %32 : vector<8x128xf32>
    %34 = arith.addf %28, %33 : vector<8x128xf32>
    %c0_23 = arith.constant 0 : index
    %35 = memref.load %arg2[%c0_23] : memref<8xf32, #tpu.memory_space<smem>>
    %36 = vector.broadcast %35 : f32 to vector<8x128xf32>
    %37 = arith.addf %34, %36 : vector<8x128xf32>
    %c0_24 = arith.constant 0 : index
    %c0_25 = arith.constant 0 : index
    %c0_26 = arith.constant 0 : index
    %38 = vector.load %arg10[%c0_24, %c0_25, %c0_26] : memref<1x8x128xf32, #tpu.memory_space<vmem>>, vector<1x8x128xf32>
    %39 = vector.shape_cast %38 : vector<1x8x128xf32> to vector<8x128xf32>
    %40 = vector.shape_cast %37 : vector<8x128xf32> to vector<1x8x128xf32>
    tpu.vector_store %arg10[%c0_24, %c0_25, %c0_26], %40 {strides = array<i32>} : memref<1x8x128xf32, #tpu.memory_space<vmem>>, vector<1x8x128xf32>,
    %41 = math.absf %37 : vector<8x128xf32>
    %cst = arith.constant 0.000000e+00 : f32
    %42 = vector.broadcast %cst : f32 to vector<8x128xf32>
    %43 = arith.subf %42, %41 : vector<8x128xf32>
    %44 = math.exp %43 : vector<8x128xf32>
    %cst_27 = arith.constant 0.000000e+00 : f32
    %45 = vector.broadcast %cst_27 : f32 to vector<8x128xf32>
    %46 = arith.subf %45, %37 : vector<8x128xf32>
    %cst_28 = arith.constant 0.000000e+00 : f32
    %47 = vector.broadcast %cst_28 : f32 to vector<8x128xf32>
    %48 = arith.maximumf %46, %47 : vector<8x128xf32>
    %cst_29 = arith.constant 1.000000e+00 : f32
    %49 = vector.broadcast %cst_29 : f32 to vector<8x128xf32>
    %50 = arith.addf %49, %44 : vector<8x128xf32>
    %51 = math.log %50 : vector<8x128xf32>
    %52 = arith.addf %48, %51 : vector<8x128xf32>
    %cst_30 = arith.constant 1.000000e+00 : f32
    %53 = vector.broadcast %cst_30 : f32 to vector<8x128xf32>
    %54 = arith.subf %53, %11 : vector<8x128xf32>
    %55 = arith.mulf %54, %37 : vector<8x128xf32>
    %cst_31 = arith.constant 9.000000e+00 : f32
    %56 = vector.broadcast %cst_31 : f32 to vector<8x128xf32>
    %57 = arith.mulf %56, %11 : vector<8x128xf32>
    %cst_32 = arith.constant 1.000000e+00 : f32
    %58 = vector.broadcast %cst_32 : f32 to vector<8x128xf32>
    %59 = arith.addf %58, %57 : vector<8x128xf32>
    %60 = arith.mulf %59, %52 : vector<8x128xf32>
    %61 = arith.addf %55, %60 : vector<8x128xf32>
    %cst_33 = arith.constant 0.000000e+00 : f32
    %62 = vector.broadcast %cst_33 : f32 to vector<8x128xf32>
    %63 = arith.cmpf oge, %37, %62 : vector<8x128xf32>
    %cst_34 = arith.constant 1.000000e+00 : f32
    %64 = vector.broadcast %cst_34 : f32 to vector<8x128xf32>
    %65 = arith.select %63, %64, %44 : vector<8x128xi1>, vector<8x128xf32>
    %cst_35 = arith.constant 1.000000e+00 : f32
    %66 = vector.broadcast %cst_35 : f32 to vector<8x128xf32>
    %67 = arith.addf %66, %44 : vector<8x128xf32>
    %68 = tpu.reciprocal %67 {approx = true} : vector<8x128xf32> -> vector<8x128xf32>
    %69 = arith.mulf %65, %68 : vector<8x128xf32>
    %70 = arith.mulf %61, %9 : vector<8x128xf32>
    %71 = arith.mulf %69, %9 : vector<8x128xf32>
    %cst_36 = arith.constant dense<0.000000e+00> : vector<128xf32>
    %72 = vector.multi_reduction <add>, %70, %cst_36 [0] : vector<8x128xf32> to vector<128xf32>
    %73 = vector.shape_cast %72 : vector<128xf32> to vector<1x128xf32>
    %74 = arith.mulf %69, %11 : vector<8x128xf32>
    %cst_37 = arith.constant dense<0.000000e+00> : vector<128xf32>
    %75 = vector.multi_reduction <add>, %74, %cst_37 [0] : vector<8x128xf32> to vector<128xf32>
    %76 = vector.shape_cast %75 : vector<128xf32> to vector<1x128xf32>
    %cst_38 = arith.constant dense<0.000000e+00> : vector<128xf32>
    %77 = vector.multi_reduction <add>, %71, %cst_38 [0] : vector<8x128xf32> to vector<128xf32>
    %78 = vector.shape_cast %77 : vector<128xf32> to vector<1x128xf32>
    %cst_39 = arith.constant dense<0.000000e+00> : vector<128xf32>
    %79 = vector.multi_reduction <add>, %11, %cst_39 [0] : vector<8x128xf32> to vector<128xf32>
    %80 = vector.shape_cast %79 : vector<128xf32> to vector<1x128xf32>
    %c0_40 = arith.constant 0 : index
    %c0_41 = arith.constant 0 : index
    %c0_42 = arith.constant 0 : index
    %c0_43 = arith.constant 0 : index
    %81 = vector.load %arg3[%c0_40, %c0_41, %c0_42, %c0_43] : memref<1x4x8x128xf32, #tpu.memory_space<vmem>>, vector<1x1x8x128xf32>
    %82 = vector.shape_cast %81 : vector<1x1x8x128xf32> to vector<8x128xf32>
    %c3_44 = arith.constant 3 : index
    %c0_45 = arith.constant 0 : index
    %83 = memref.load %arg1[%c3_44, %c0_45] : memref<8x4xf32, #tpu.memory_space<smem>>
    %84 = vector.broadcast %83 : f32 to vector<8x128xf32>
    %85 = arith.mulf %82, %84 : vector<8x128xf32>
    %c0_46 = arith.constant 0 : index
    %c1_47 = arith.constant 1 : index
    %c0_48 = arith.constant 0 : index
    %c0_49 = arith.constant 0 : index
    %86 = vector.load %arg3[%c0_46, %c1_47, %c0_48, %c0_49] : memref<1x4x8x128xf32, #tpu.memory_space<vmem>>, vector<1x1x8x128xf32>
    %87 = vector.shape_cast %86 : vector<1x1x8x128xf32> to vector<8x128xf32>
    %c3_50 = arith.constant 3 : index
    %c1_51 = arith.constant 1 : index
    %88 = memref.load %arg1[%c3_50, %c1_51] : memref<8x4xf32, #tpu.memory_space<smem>>
    %89 = vector.broadcast %88 : f32 to vector<8x128xf32>
    %90 = arith.mulf %87, %89 : vector<8x128xf32>
    %91 = arith.addf %85, %90 : vector<8x128xf32>
    %c0_52 = arith.constant 0 : index
    %c2_53 = arith.constant 2 : index
    %c0_54 = arith.constant 0 : index
    %c0_55 = arith.constant 0 : index
    %92 = vector.load %arg3[%c0_52, %c2_53, %c0_54, %c0_55] : memref<1x4x8x128xf32, #tpu.memory_space<vmem>>, vector<1x1x8x128xf32>
    %93 = vector.shape_cast %92 : vector<1x1x8x128xf32> to vector<8x128xf32>
    %c3_56 = arith.constant 3 : index
    %c2_57 = arith.constant 2 : index
    %94 = memref.load %arg1[%c3_56, %c2_57] : memref<8x4xf32, #tpu.memory_space<smem>>
    %95 = vector.broadcast %94 : f32 to vector<8x128xf32>
    %96 = arith.mulf %93, %95 : vector<8x128xf32>
    %97 = arith.addf %91, %96 : vector<8x128xf32>
    %c0_58 = arith.constant 0 : index
    %c3_59 = arith.constant 3 : index
    %c0_60 = arith.constant 0 : index
    %c0_61 = arith.constant 0 : index
    %98 = vector.load %arg3[%c0_58, %c3_59, %c0_60, %c0_61] : memref<1x4x8x128xf32, #tpu.memory_space<vmem>>, vector<1x1x8x128xf32>
    %99 = vector.shape_cast %98 : vector<1x1x8x128xf32> to vector<8x128xf32>
    %c3_62 = arith.constant 3 : index
    %c3_63 = arith.constant 3 : index
    %100 = memref.load %arg1[%c3_62, %c3_63] : memref<8x4xf32, #tpu.memory_space<smem>>
    %101 = vector.broadcast %100 : f32 to vector<8x128xf32>
    %102 = arith.mulf %99, %101 : vector<8x128xf32>
    %103 = arith.addf %97, %102 : vector<8x128xf32>
    %c3_64 = arith.constant 3 : index
    %104 = memref.load %arg2[%c3_64] : memref<8xf32, #tpu.memory_space<smem>>
    %105 = vector.broadcast %104 : f32 to vector<8x128xf32>
    %106 = arith.addf %103, %105 : vector<8x128xf32>
    %c0_65 = arith.constant 0 : index
    %c0_66 = arith.constant 0 : index
    %c0_67 = arith.constant 0 : index
    %107 = vector.load %arg6[%c0_65, %c0_66, %c0_67] : memref<1x8x128xf32, #tpu.memory_space<vmem>>, vector<1x8x128xf32>
    %108 = vector.shape_cast %107 : vector<1x8x128xf32> to vector<8x128xf32>
    %109 = math.absf %106 : vector<8x128xf32>
    %cst_68 = arith.constant 0.000000e+00 : f32
    %110 = vector.broadcast %cst_68 : f32 to vector<8x128xf32>
    %111 = arith.subf %110, %109 : vector<8x128xf32>
    %112 = math.exp %111 : vector<8x128xf32>
    %cst_69 = arith.constant 0.000000e+00 : f32
    %113 = vector.broadcast %cst_69 : f32 to vector<8x128xf32>
    %114 = arith.subf %113, %106 : vector<8x128xf32>
    %cst_70 = arith.constant 0.000000e+00 : f32
    %115 = vector.broadcast %cst_70 : f32 to vector<8x128xf32>
    %116 = arith.maximumf %114, %115 : vector<8x128xf32>
    %cst_71 = arith.constant 1.000000e+00 : f32
    %117 = vector.broadcast %cst_71 : f32 to vector<8x128xf32>
    %118 = arith.addf %117, %112 : vector<8x128xf32>
    %119 = math.log %118 : vector<8x128xf32>
    %120 = arith.addf %116, %119 : vector<8x128xf32>
    %121 = arith.addf %120, %106 : vector<8x128xf32>
    %cst_72 = arith.constant 1.000000e+02 : f32
    %122 = vector.broadcast %cst_72 : f32 to vector<8x128xf32>
    %123 = arith.minimumf %120, %122 : vector<8x128xf32>
    %cst_73 = arith.constant 1.000000e+02 : f32
    %124 = vector.broadcast %cst_73 : f32 to vector<8x128xf32>
    %125 = arith.minimumf %121, %124 : vector<8x128xf32>
    %126 = arith.mulf %108, %123 : vector<8x128xf32>
    %cst_74 = arith.constant 1.000000e+00 : f32
    %127 = vector.broadcast %cst_74 : f32 to vector<8x128xf32>
    %128 = arith.subf %127, %108 : vector<8x128xf32>
    %129 = arith.mulf %128, %125 : vector<8x128xf32>
    %130 = arith.addf %126, %129 : vector<8x128xf32>
    %131 = arith.mulf %11, %130 : vector<8x128xf32>
    %cst_75 = arith.constant 1.000000e+00 : f32
    %132 = vector.broadcast %cst_75 : f32 to vector<8x128xf32>
    %133 = arith.subf %132, %11 : vector<8x128xf32>
    %cst_76 = arith.constant 1.000000e+02 : f32
    %134 = vector.broadcast %cst_76 : f32 to vector<8x128xf32>
    %135 = arith.mulf %134, %108 : vector<8x128xf32>
    %136 = arith.mulf %133, %135 : vector<8x128xf32>
    %137 = arith.addf %131, %136 : vector<8x128xf32>
    %cst_77 = arith.constant dense<0.000000e+00> : vector<128xf32>
    %138 = vector.multi_reduction <add>, %137, %cst_77 [0] : vector<8x128xf32> to vector<128xf32>
    %139 = vector.shape_cast %138 : vector<128xf32> to vector<1x128xf32>
    %c0_78 = arith.constant 0 : index
    %c0_79 = arith.constant 0 : index
    %c0_80 = arith.constant 0 : index
    %c0_81 = arith.constant 0 : index
    %140 = vector.load %arg3[%c0_78, %c0_79, %c0_80, %c0_81] : memref<1x4x8x128xf32, #tpu.memory_space<vmem>>, vector<1x1x8x128xf32>
    %141 = vector.shape_cast %140 : vector<1x1x8x128xf32> to vector<8x128xf32>
    %c4 = arith.constant 4 : index
    %c0_82 = arith.constant 0 : index
    %142 = memref.load %arg1[%c4, %c0_82] : memref<8x4xf32, #tpu.memory_space<smem>>
    %143 = vector.broadcast %142 : f32 to vector<8x128xf32>
    %144 = arith.mulf %141, %143 : vector<8x128xf32>
    %c0_83 = arith.constant 0 : index
    %c1_84 = arith.constant 1 : index
    %c0_85 = arith.constant 0 : index
    %c0_86 = arith.constant 0 : index
    %145 = vector.load %arg3[%c0_83, %c1_84, %c0_85, %c0_86] : memref<1x4x8x128xf32, #tpu.memory_space<vmem>>, vector<1x1x8x128xf32>
    %146 = vector.shape_cast %145 : vector<1x1x8x128xf32> to vector<8x128xf32>
    %c4_87 = arith.constant 4 : index
    %c1_88 = arith.constant 1 : index
    %147 = memref.load %arg1[%c4_87, %c1_88] : memref<8x4xf32, #tpu.memory_space<smem>>
    %148 = vector.broadcast %147 : f32 to vector<8x128xf32>
    %149 = arith.mulf %146, %148 : vector<8x128xf32>
    %150 = arith.addf %144, %149 : vector<8x128xf32>
    %c0_89 = arith.constant 0 : index
    %c2_90 = arith.constant 2 : index
    %c0_91 = arith.constant 0 : index
    %c0_92 = arith.constant 0 : index
    %151 = vector.load %arg3[%c0_89, %c2_90, %c0_91, %c0_92] : memref<1x4x8x128xf32, #tpu.memory_space<vmem>>, vector<1x1x8x128xf32>
    %152 = vector.shape_cast %151 : vector<1x1x8x128xf32> to vector<8x128xf32>
    %c4_93 = arith.constant 4 : index
    %c2_94 = arith.constant 2 : index
    %153 = memref.load %arg1[%c4_93, %c2_94] : memref<8x4xf32, #tpu.memory_space<smem>>
    %154 = vector.broadcast %153 : f32 to vector<8x128xf32>
    %155 = arith.mulf %152, %154 : vector<8x128xf32>
    %156 = arith.addf %150, %155 : vector<8x128xf32>
    %c0_95 = arith.constant 0 : index
    %c3_96 = arith.constant 3 : index
    %c0_97 = arith.constant 0 : index
    %c0_98 = arith.constant 0 : index
    %157 = vector.load %arg3[%c0_95, %c3_96, %c0_97, %c0_98] : memref<1x4x8x128xf32, #tpu.memory_space<vmem>>, vector<1x1x8x128xf32>
    %158 = vector.shape_cast %157 : vector<1x1x8x128xf32> to vector<8x128xf32>
    %c4_99 = arith.constant 4 : index
    %c3_100 = arith.constant 3 : index
    %159 = memref.load %arg1[%c4_99, %c3_100] : memref<8x4xf32, #tpu.memory_space<smem>>
    %160 = vector.broadcast %159 : f32 to vector<8x128xf32>
    %161 = arith.mulf %158, %160 : vector<8x128xf32>
    %162 = arith.addf %156, %161 : vector<8x128xf32>
    %c4_101 = arith.constant 4 : index
    %163 = memref.load %arg2[%c4_101] : memref<8xf32, #tpu.memory_space<smem>>
    %164 = vector.broadcast %163 : f32 to vector<8x128xf32>
    %165 = arith.addf %162, %164 : vector<8x128xf32>
    %166 = arith.mulf %11, %165 : vector<8x128xf32>
    %c0_102 = arith.constant 0 : index
    %c0_103 = arith.constant 0 : index
    %c0_104 = arith.constant 0 : index
    %167 = vector.load %arg7[%c0_102, %c0_103, %c0_104] : memref<1x8x128xf32, #tpu.memory_space<vmem>>, vector<1x8x128xf32>
    %168 = vector.shape_cast %167 : vector<1x8x128xf32> to vector<8x128xf32>
    %169 = arith.subf %166, %168 : vector<8x128xf32>
    %170 = arith.mulf %169, %169 : vector<8x128xf32>
    %cst_105 = arith.constant dense<0.000000e+00> : vector<128xf32>
    %171 = vector.multi_reduction <add>, %170, %cst_105 [0] : vector<8x128xf32> to vector<128xf32>
    %172 = vector.shape_cast %171 : vector<128xf32> to vector<1x128xf32>
    %c0_106 = arith.constant 0 : index
    %c0_107 = arith.constant 0 : index
    %c0_108 = arith.constant 0 : index
    %c0_109 = arith.constant 0 : index
    %173 = vector.load %arg3[%c0_106, %c0_107, %c0_108, %c0_109] : memref<1x4x8x128xf32, #tpu.memory_space<vmem>>, vector<1x1x8x128xf32>
    %174 = vector.shape_cast %173 : vector<1x1x8x128xf32> to vector<8x128xf32>
    %c1_110 = arith.constant 1 : index
    %c0_111 = arith.constant 0 : index
    %175 = memref.load %arg1[%c1_110, %c0_111] : memref<8x4xf32, #tpu.memory_space<smem>>
    %176 = vector.broadcast %175 : f32 to vector<8x128xf32>
    %177 = arith.mulf %174, %176 : vector<8x128xf32>
    %c0_112 = arith.constant 0 : index
    %c1_113 = arith.constant 1 : index
    %c0_114 = arith.constant 0 : index
    %c0_115 = arith.constant 0 : index
    %178 = vector.load %arg3[%c0_112, %c1_113, %c0_114, %c0_115] : memref<1x4x8x128xf32, #tpu.memory_space<vmem>>, vector<1x1x8x128xf32>
    %179 = vector.shape_cast %178 : vector<1x1x8x128xf32> to vector<8x128xf32>
    %c1_116 = arith.constant 1 : index
    %c1_117 = arith.constant 1 : index
    %180 = memref.load %arg1[%c1_116, %c1_117] : memref<8x4xf32, #tpu.memory_space<smem>>
    %181 = vector.broadcast %180 : f32 to vector<8x128xf32>
    %182 = arith.mulf %179, %181 : vector<8x128xf32>
    %183 = arith.addf %177, %182 : vector<8x128xf32>
    %c0_118 = arith.constant 0 : index
    %c2_119 = arith.constant 2 : index
    %c0_120 = arith.constant 0 : index
    %c0_121 = arith.constant 0 : index
    %184 = vector.load %arg3[%c0_118, %c2_119, %c0_120, %c0_121] : memref<1x4x8x128xf32, #tpu.memory_space<vmem>>, vector<1x1x8x128xf32>
    %185 = vector.shape_cast %184 : vector<1x1x8x128xf32> to vector<8x128xf32>
    %c1_122 = arith.constant 1 : index
    %c2_123 = arith.constant 2 : index
    %186 = memref.load %arg1[%c1_122, %c2_123] : memref<8x4xf32, #tpu.memory_space<smem>>
    %187 = vector.broadcast %186 : f32 to vector<8x128xf32>
    %188 = arith.mulf %185, %187 : vector<8x128xf32>
    %189 = arith.addf %183, %188 : vector<8x128xf32>
    %c0_124 = arith.constant 0 : index
    %c3_125 = arith.constant 3 : index
    %c0_126 = arith.constant 0 : index
    %c0_127 = arith.constant 0 : index
    %190 = vector.load %arg3[%c0_124, %c3_125, %c0_126, %c0_127] : memref<1x4x8x128xf32, #tpu.memory_space<vmem>>, vector<1x1x8x128xf32>
    %191 = vector.shape_cast %190 : vector<1x1x8x128xf32> to vector<8x128xf32>
    %c1_128 = arith.constant 1 : index
    %c3_129 = arith.constant 3 : index
    %192 = memref.load %arg1[%c1_128, %c3_129] : memref<8x4xf32, #tpu.memory_space<smem>>
    %193 = vector.broadcast %192 : f32 to vector<8x128xf32>
    %194 = arith.mulf %191, %193 : vector<8x128xf32>
    %195 = arith.addf %189, %194 : vector<8x128xf32>
    %c1_130 = arith.constant 1 : index
    %196 = memref.load %arg2[%c1_130] : memref<8xf32, #tpu.memory_space<smem>>
    %197 = vector.broadcast %196 : f32 to vector<8x128xf32>
    %198 = arith.addf %195, %197 : vector<8x128xf32>
    %c0_131 = arith.constant 0 : index
    %c0_132 = arith.constant 0 : index
    %c0_133 = arith.constant 0 : index
    %c0_134 = arith.constant 0 : index
    %199 = vector.load %arg3[%c0_131, %c0_132, %c0_133, %c0_134] : memref<1x4x8x128xf32, #tpu.memory_space<vmem>>, vector<1x1x8x128xf32>
    %200 = vector.shape_cast %199 : vector<1x1x8x128xf32> to vector<8x128xf32>
    %c2_135 = arith.constant 2 : index
    %c0_136 = arith.constant 0 : index
    %201 = memref.load %arg1[%c2_135, %c0_136] : memref<8x4xf32, #tpu.memory_space<smem>>
    %202 = vector.broadcast %201 : f32 to vector<8x128xf32>
    %203 = arith.mulf %200, %202 : vector<8x128xf32>
    %c0_137 = arith.constant 0 : index
    %c1_138 = arith.constant 1 : index
    %c0_139 = arith.constant 0 : index
    %c0_140 = arith.constant 0 : index
    %204 = vector.load %arg3[%c0_137, %c1_138, %c0_139, %c0_140] : memref<1x4x8x128xf32, #tpu.memory_space<vmem>>, vector<1x1x8x128xf32>
    %205 = vector.shape_cast %204 : vector<1x1x8x128xf32> to vector<8x128xf32>
    %c2_141 = arith.constant 2 : index
    %c1_142 = arith.constant 1 : index
    %206 = memref.load %arg1[%c2_141, %c1_142] : memref<8x4xf32, #tpu.memory_space<smem>>
    %207 = vector.broadcast %206 : f32 to vector<8x128xf32>
    %208 = arith.mulf %205, %207 : vector<8x128xf32>
    %209 = arith.addf %203, %208 : vector<8x128xf32>
    %c0_143 = arith.constant 0 : index
    %c2_144 = arith.constant 2 : index
    %c0_145 = arith.constant 0 : index
    %c0_146 = arith.constant 0 : index
    %210 = vector.load %arg3[%c0_143, %c2_144, %c0_145, %c0_146] : memref<1x4x8x128xf32, #tpu.memory_space<vmem>>, vector<1x1x8x128xf32>
    %211 = vector.shape_cast %210 : vector<1x1x8x128xf32> to vector<8x128xf32>
    %c2_147 = arith.constant 2 : index
    %c2_148 = arith.constant 2 : index
    %212 = memref.load %arg1[%c2_147, %c2_148] : memref<8x4xf32, #tpu.memory_space<smem>>
    %213 = vector.broadcast %212 : f32 to vector<8x128xf32>
    %214 = arith.mulf %211, %213 : vector<8x128xf32>
    %215 = arith.addf %209, %214 : vector<8x128xf32>
    %c0_149 = arith.constant 0 : index
    %c3_150 = arith.constant 3 : index
    %c0_151 = arith.constant 0 : index
    %c0_152 = arith.constant 0 : index
    %216 = vector.load %arg3[%c0_149, %c3_150, %c0_151, %c0_152] : memref<1x4x8x128xf32, #tpu.memory_space<vmem>>, vector<1x1x8x128xf32>
    %217 = vector.shape_cast %216 : vector<1x1x8x128xf32> to vector<8x128xf32>
    %c2_153 = arith.constant 2 : index
    %c3_154 = arith.constant 3 : index
    %218 = memref.load %arg1[%c2_153, %c3_154] : memref<8x4xf32, #tpu.memory_space<smem>>
    %219 = vector.broadcast %218 : f32 to vector<8x128xf32>
    %220 = arith.mulf %217, %219 : vector<8x128xf32>
    %221 = arith.addf %215, %220 : vector<8x128xf32>
    %c2_155 = arith.constant 2 : index
    %222 = memref.load %arg2[%c2_155] : memref<8xf32, #tpu.memory_space<smem>>
    %223 = vector.broadcast %222 : f32 to vector<8x128xf32>
    %224 = arith.addf %221, %223 : vector<8x128xf32>
    %c0_156 = arith.constant 0 : index
    %c0_157 = arith.constant 0 : index
    %c0_158 = arith.constant 0 : index
    %225 = vector.load %arg5[%c0_156, %c0_157, %c0_158] : memref<1x8x128xf32, #tpu.memory_space<vmem>>, vector<1x8x128xf32>
    %226 = vector.shape_cast %225 : vector<1x8x128xf32> to vector<8x128xf32>
    %cst_159 = arith.constant 2.000000e+02 : f32
    %227 = vector.broadcast %cst_159 : f32 to vector<8x128xf32>
    %228 = arith.cmpf olt, %226, %227 : vector<8x128xf32>
    %cst_160 = arith.constant 1.000000e+00 : f32
    %cst_161 = arith.constant 0.000000e+00 : f32
    %229 = vector.broadcast %cst_160 : f32 to vector<8x128xf32>
    %230 = vector.broadcast %cst_161 : f32 to vector<8x128xf32>
    %231 = arith.select %228, %229, %230 : vector<8x128xi1>, vector<8x128xf32>
    %cst_162 = arith.constant 0.000000e+00 : f32
    %232 = vector.broadcast %cst_162 : f32 to vector<1x128xf32>
    %cst_163 = arith.constant 1.000000e+00 : f32
    %233 = vector.broadcast %cst_163 : f32 to vector<8x128xf32>
    %234 = arith.cmpf oeq, %226, %233 : vector<8x128xf32>
    %cst_164 = arith.constant 1.000000e+00 : f32
    %cst_165 = arith.constant 0.000000e+00 : f32
    %235 = vector.broadcast %cst_164 : f32 to vector<8x128xf32>
    %236 = vector.broadcast %cst_165 : f32 to vector<8x128xf32>
    %237 = arith.select %234, %235, %236 : vector<8x128xi1>, vector<8x128xf32>
    %238 = arith.mulf %237, %231 : vector<8x128xf32>
    %239 = vector.shape_cast %238 : vector<8x128xf32> to vector<1x8x128xf32>
    %cst_166 = arith.constant dense<0.000000e+00> : vector<1xf32>
    %240 = vector.multi_reduction <add>, %239, %cst_166 [1, 2] : vector<1x8x128xf32> to vector<1xf32>
    %241 = vector.shape_cast %240 : vector<1xf32> to vector<1x1x1xf32>
    %242 = vector.extract %241[0, 0, 0] : f32 from vector<1x1x1xf32>
    %cst_167 = arith.constant 0.000000e+00 : f32
    %243 = arith.cmpf ogt, %242, %cst_167 : f32
    %cst_168 = arith.constant 1.000000e+00 : f32
    %cst_169 = arith.constant 0.000000e+00 : f32
    %244 = arith.select %243, %cst_168, %cst_169 : f32
    %cst_170 = arith.constant 1.000000e+00 : f32
    %245 = arith.maximumf %242, %cst_170 : f32
    %cst_171 = arith.constant 1.000000e+00 : f32
    %246 = arith.divf %cst_171, %245 : f32
    %247 = arith.mulf %198, %238 : vector<8x128xf32>
    %248 = vector.shape_cast %247 : vector<8x128xf32> to vector<1x8x128xf32>
    %cst_172 = arith.constant dense<0.000000e+00> : vector<1xf32>
    %249 = vector.multi_reduction <add>, %248, %cst_172 [1, 2] : vector<1x8x128xf32> to vector<1xf32>
    %250 = vector.shape_cast %249 : vector<1xf32> to vector<1x1x1xf32>
    %251 = vector.extract %250[0, 0, 0] : f32 from vector<1x1x1xf32>
    %252 = arith.mulf %251, %246 : f32
    %253 = arith.mulf %224, %238 : vector<8x128xf32>
    %254 = vector.shape_cast %253 : vector<8x128xf32> to vector<1x8x128xf32>
    %cst_173 = arith.constant dense<0.000000e+00> : vector<1xf32>
    %255 = vector.multi_reduction <add>, %254, %cst_173 [1, 2] : vector<1x8x128xf32> to vector<1xf32>
    %256 = vector.shape_cast %255 : vector<1xf32> to vector<1x1x1xf32>
    %257 = vector.extract %256[0, 0, 0] : f32 from vector<1x1x1xf32>
    %258 = arith.mulf %257, %246 : f32
    %259 = vector.broadcast %252 : f32 to vector<8x128xf32>
    %260 = arith.subf %198, %259 : vector<8x128xf32>
    %261 = math.absf %260 : vector<8x128xf32>
    %262 = vector.broadcast %258 : f32 to vector<8x128xf32>
    %263 = arith.subf %224, %262 : vector<8x128xf32>
    %264 = math.absf %263 : vector<8x128xf32>
    %265 = arith.addf %261, %264 : vector<8x128xf32>
    %cst_174 = arith.constant 1.000000e+00 : f32
    %266 = vector.broadcast %cst_174 : f32 to vector<8x128xf32>
    %267 = arith.subf %265, %266 : vector<8x128xf32>
    %cst_175 = arith.constant 0.000000e+00 : f32
    %268 = vector.broadcast %cst_175 : f32 to vector<8x128xf32>
    %269 = arith.maximumf %267, %268 : vector<8x128xf32>
    %270 = arith.mulf %269, %238 : vector<8x128xf32>
    %271 = arith.mulf %244, %246 : f32
    %cst_176 = arith.constant dense<0.000000e+00> : vector<128xf32>
    %272 = vector.multi_reduction <add>, %270, %cst_176 [0] : vector<8x128xf32> to vector<128xf32>
    %273 = vector.shape_cast %272 : vector<128xf32> to vector<1x128xf32>
    %274 = vector.broadcast %271 : f32 to vector<1x128xf32>
    %275 = arith.mulf %274, %273 : vector<1x128xf32>
    %276 = arith.addf %232, %275 : vector<1x128xf32>
    %cst_177 = arith.constant 0.000000e+00 : f32
    %277 = arith.addf %cst_177, %244 : f32
    %cst_178 = arith.constant 2.000000e+00 : f32
    %278 = vector.broadcast %cst_178 : f32 to vector<8x128xf32>
    %279 = arith.cmpf oeq, %226, %278 : vector<8x128xf32>
    %cst_179 = arith.constant 1.000000e+00 : f32
    %cst_180 = arith.constant 0.000000e+00 : f32
    %280 = vector.broadcast %cst_179 : f32 to vector<8x128xf32>
    %281 = vector.broadcast %cst_180 : f32 to vector<8x128xf32>
    %282 = arith.select %279, %280, %281 : vector<8x128xi1>, vector<8x128xf32>
    %283 = arith.mulf %282, %231 : vector<8x128xf32>
    %284 = vector.shape_cast %283 : vector<8x128xf32> to vector<1x8x128xf32>
    %cst_181 = arith.constant dense<0.000000e+00> : vector<1xf32>
    %285 = vector.multi_reduction <add>, %284, %cst_181 [1, 2] : vector<1x8x128xf32> to vector<1xf32>
    %286 = vector.shape_cast %285 : vector<1xf32> to vector<1x1x1xf32>
    %287 = vector.extract %286[0, 0, 0] : f32 from vector<1x1x1xf32>
    %cst_182 = arith.constant 0.000000e+00 : f32
    %288 = arith.cmpf ogt, %287, %cst_182 : f32
    %cst_183 = arith.constant 1.000000e+00 : f32
    %cst_184 = arith.constant 0.000000e+00 : f32
    %289 = arith.select %288, %cst_183, %cst_184 : f32
    %cst_185 = arith.constant 1.000000e+00 : f32
    %290 = arith.maximumf %287, %cst_185 : f32
    %cst_186 = arith.constant 1.000000e+00 : f32
    %291 = arith.divf %cst_186, %290 : f32
    %292 = arith.mulf %198, %283 : vector<8x128xf32>
    %293 = vector.shape_cast %292 : vector<8x128xf32> to vector<1x8x128xf32>
    %cst_187 = arith.constant dense<0.000000e+00> : vector<1xf32>
    %294 = vector.multi_reduction <add>, %293, %cst_187 [1, 2] : vector<1x8x128xf32> to vector<1xf32>
    %295 = vector.shape_cast %294 : vector<1xf32> to vector<1x1x1xf32>
    %296 = vector.extract %295[0, 0, 0] : f32 from vector<1x1x1xf32>
    %297 = arith.mulf %296, %291 : f32
    %298 = arith.mulf %224, %283 : vector<8x128xf32>
    %299 = vector.shape_cast %298 : vector<8x128xf32> to vector<1x8x128xf32>
    %cst_188 = arith.constant dense<0.000000e+00> : vector<1xf32>
    %300 = vector.multi_reduction <add>, %299, %cst_188 [1, 2] : vector<1x8x128xf32> to vector<1xf32>
    %301 = vector.shape_cast %300 : vector<1xf32> to vector<1x1x1xf32>
    %302 = vector.extract %301[0, 0, 0] : f32 from vector<1x1x1xf32>
    %303 = arith.mulf %302, %291 : f32
    %304 = vector.broadcast %297 : f32 to vector<8x128xf32>
    %305 = arith.subf %198, %304 : vector<8x128xf32>
    %306 = math.absf %305 : vector<8x128xf32>
    %307 = vector.broadcast %303 : f32 to vector<8x128xf32>
    %308 = arith.subf %224, %307 : vector<8x128xf32>
    %309 = math.absf %308 : vector<8x128xf32>
    %310 = arith.addf %306, %309 : vector<8x128xf32>
    %cst_189 = arith.constant 1.000000e+00 : f32
    %311 = vector.broadcast %cst_189 : f32 to vector<8x128xf32>
    %312 = arith.subf %310, %311 : vector<8x128xf32>
    %cst_190 = arith.constant 0.000000e+00 : f32
    %313 = vector.broadcast %cst_190 : f32 to vector<8x128xf32>
    %314 = arith.maximumf %312, %313 : vector<8x128xf32>
    %315 = arith.mulf %314, %283 : vector<8x128xf32>
    %316 = arith.mulf %289, %291 : f32
    %cst_191 = arith.constant dense<0.000000e+00> : vector<128xf32>
    %317 = vector.multi_reduction <add>, %315, %cst_191 [0] : vector<8x128xf32> to vector<128xf32>
    %318 = vector.shape_cast %317 : vector<128xf32> to vector<1x128xf32>
    %319 = vector.broadcast %316 : f32 to vector<1x128xf32>
    %320 = arith.mulf %319, %318 : vector<1x128xf32>
    %321 = arith.addf %276, %320 : vector<1x128xf32>
    %322 = arith.addf %277, %289 : f32
    %cst_192 = arith.constant 3.000000e+00 : f32
    %323 = vector.broadcast %cst_192 : f32 to vector<8x128xf32>
    %324 = arith.cmpf oeq, %226, %323 : vector<8x128xf32>
    %cst_193 = arith.constant 1.000000e+00 : f32
    %cst_194 = arith.constant 0.000000e+00 : f32
    %325 = vector.broadcast %cst_193 : f32 to vector<8x128xf32>
    %326 = vector.broadcast %cst_194 : f32 to vector<8x128xf32>
    %327 = arith.select %324, %325, %326 : vector<8x128xi1>, vector<8x128xf32>
    %328 = arith.mulf %327, %231 : vector<8x128xf32>
    %329 = vector.shape_cast %328 : vector<8x128xf32> to vector<1x8x128xf32>
    %cst_195 = arith.constant dense<0.000000e+00> : vector<1xf32>
    %330 = vector.multi_reduction <add>, %329, %cst_195 [1, 2] : vector<1x8x128xf32> to vector<1xf32>
    %331 = vector.shape_cast %330 : vector<1xf32> to vector<1x1x1xf32>
    %332 = vector.extract %331[0, 0, 0] : f32 from vector<1x1x1xf32>
    %cst_196 = arith.constant 0.000000e+00 : f32
    %333 = arith.cmpf ogt, %332, %cst_196 : f32
    %cst_197 = arith.constant 1.000000e+00 : f32
    %cst_198 = arith.constant 0.000000e+00 : f32
    %334 = arith.select %333, %cst_197, %cst_198 : f32
    %cst_199 = arith.constant 1.000000e+00 : f32
    %335 = arith.maximumf %332, %cst_199 : f32
    %cst_200 = arith.constant 1.000000e+00 : f32
    %336 = arith.divf %cst_200, %335 : f32
    %337 = arith.mulf %198, %328 : vector<8x128xf32>
    %338 = vector.shape_cast %337 : vector<8x128xf32> to vector<1x8x128xf32>
    %cst_201 = arith.constant dense<0.000000e+00> : vector<1xf32>
    %339 = vector.multi_reduction <add>, %338, %cst_201 [1, 2] : vector<1x8x128xf32> to vector<1xf32>
    %340 = vector.shape_cast %339 : vector<1xf32> to vector<1x1x1xf32>
    %341 = vector.extract %340[0, 0, 0] : f32 from vector<1x1x1xf32>
    %342 = arith.mulf %341, %336 : f32
    %343 = arith.mulf %224, %328 : vector<8x128xf32>
    %344 = vector.shape_cast %343 : vector<8x128xf32> to vector<1x8x128xf32>
    %cst_202 = arith.constant dense<0.000000e+00> : vector<1xf32>
    %345 = vector.multi_reduction <add>, %344, %cst_202 [1, 2] : vector<1x8x128xf32> to vector<1xf32>
    %346 = vector.shape_cast %345 : vector<1xf32> to vector<1x1x1xf32>
    %347 = vector.extract %346[0, 0, 0] : f32 from vector<1x1x1xf32>
    %348 = arith.mulf %347, %336 : f32
    %349 = vector.broadcast %342 : f32 to vector<8x128xf32>
    %350 = arith.subf %198, %349 : vector<8x128xf32>
    %351 = math.absf %350 : vector<8x128xf32>
    %352 = vector.broadcast %348 : f32 to vector<8x128xf32>
    %353 = arith.subf %224, %352 : vector<8x128xf32>
    %354 = math.absf %353 : vector<8x128xf32>
    %355 = arith.addf %351, %354 : vector<8x128xf32>
    %cst_203 = arith.constant 1.000000e+00 : f32
    %356 = vector.broadcast %cst_203 : f32 to vector<8x128xf32>
    %357 = arith.subf %355, %356 : vector<8x128xf32>
    %cst_204 = arith.constant 0.000000e+00 : f32
    %358 = vector.broadcast %cst_204 : f32 to vector<8x128xf32>
    %359 = arith.maximumf %357, %358 : vector<8x128xf32>
    %360 = arith.mulf %359, %328 : vector<8x128xf32>
    %361 = arith.mulf %334, %336 : f32
    %cst_205 = arith.constant dense<0.000000e+00> : vector<128xf32>
    %362 = vector.multi_reduction <add>, %360, %cst_205 [0] : vector<8x128xf32> to vector<128xf32>
    %363 = vector.shape_cast %362 : vector<128xf32> to vector<1x128xf32>
    %364 = vector.broadcast %361 : f32 to vector<1x128xf32>
    %365 = arith.mulf %364, %363 : vector<1x128xf32>
    %366 = arith.addf %321, %365 : vector<1x128xf32>
    %367 = arith.addf %322, %334 : f32
    %cst_206 = arith.constant 4.000000e+00 : f32
    %368 = vector.broadcast %cst_206 : f32 to vector<8x128xf32>
    %369 = arith.cmpf oeq, %226, %368 : vector<8x128xf32>
    %cst_207 = arith.constant 1.000000e+00 : f32
    %cst_208 = arith.constant 0.000000e+00 : f32
    %370 = vector.broadcast %cst_207 : f32 to vector<8x128xf32>
    %371 = vector.broadcast %cst_208 : f32 to vector<8x128xf32>
    %372 = arith.select %369, %370, %371 : vector<8x128xi1>, vector<8x128xf32>
    %373 = arith.mulf %372, %231 : vector<8x128xf32>
    %374 = vector.shape_cast %373 : vector<8x128xf32> to vector<1x8x128xf32>
    %cst_209 = arith.constant dense<0.000000e+00> : vector<1xf32>
    %375 = vector.multi_reduction <add>, %374, %cst_209 [1, 2] : vector<1x8x128xf32> to vector<1xf32>
    %376 = vector.shape_cast %375 : vector<1xf32> to vector<1x1x1xf32>
    %377 = vector.extract %376[0, 0, 0] : f32 from vector<1x1x1xf32>
    %cst_210 = arith.constant 0.000000e+00 : f32
    %378 = arith.cmpf ogt, %377, %cst_210 : f32
    %cst_211 = arith.constant 1.000000e+00 : f32
    %cst_212 = arith.constant 0.000000e+00 : f32
    %379 = arith.select %378, %cst_211, %cst_212 : f32
    %cst_213 = arith.constant 1.000000e+00 : f32
    %380 = arith.maximumf %377, %cst_213 : f32
    %cst_214 = arith.constant 1.000000e+00 : f32
    %381 = arith.divf %cst_214, %380 : f32
    %382 = arith.mulf %198, %373 : vector<8x128xf32>
    %383 = vector.shape_cast %382 : vector<8x128xf32> to vector<1x8x128xf32>
    %cst_215 = arith.constant dense<0.000000e+00> : vector<1xf32>
    %384 = vector.multi_reduction <add>, %383, %cst_215 [1, 2] : vector<1x8x128xf32> to vector<1xf32>
    %385 = vector.shape_cast %384 : vector<1xf32> to vector<1x1x1xf32>
    %386 = vector.extract %385[0, 0, 0] : f32 from vector<1x1x1xf32>
    %387 = arith.mulf %386, %381 : f32
    %388 = arith.mulf %224, %373 : vector<8x128xf32>
    %389 = vector.shape_cast %388 : vector<8x128xf32> to vector<1x8x128xf32>
    %cst_216 = arith.constant dense<0.000000e+00> : vector<1xf32>
    %390 = vector.multi_reduction <add>, %389, %cst_216 [1, 2] : vector<1x8x128xf32> to vector<1xf32>
    %391 = vector.shape_cast %390 : vector<1xf32> to vector<1x1x1xf32>
    %392 = vector.extract %391[0, 0, 0] : f32 from vector<1x1x1xf32>
    %393 = arith.mulf %392, %381 : f32
    %394 = vector.broadcast %387 : f32 to vector<8x128xf32>
    %395 = arith.subf %198, %394 : vector<8x128xf32>
    %396 = math.absf %395 : vector<8x128xf32>
    %397 = vector.broadcast %393 : f32 to vector<8x128xf32>
    %398 = arith.subf %224, %397 : vector<8x128xf32>
    %399 = math.absf %398 : vector<8x128xf32>
    %400 = arith.addf %396, %399 : vector<8x128xf32>
    %cst_217 = arith.constant 1.000000e+00 : f32
    %401 = vector.broadcast %cst_217 : f32 to vector<8x128xf32>
    %402 = arith.subf %400, %401 : vector<8x128xf32>
    %cst_218 = arith.constant 0.000000e+00 : f32
    %403 = vector.broadcast %cst_218 : f32 to vector<8x128xf32>
    %404 = arith.maximumf %402, %403 : vector<8x128xf32>
    %405 = arith.mulf %404, %373 : vector<8x128xf32>
    %406 = arith.mulf %379, %381 : f32
    %cst_219 = arith.constant dense<0.000000e+00> : vector<128xf32>
    %407 = vector.multi_reduction <add>, %405, %cst_219 [0] : vector<8x128xf32> to vector<128xf32>
    %408 = vector.shape_cast %407 : vector<128xf32> to vector<1x128xf32>
    %409 = vector.broadcast %406 : f32 to vector<1x128xf32>
    %410 = arith.mulf %409, %408 : vector<1x128xf32>
    %411 = arith.addf %366, %410 : vector<1x128xf32>
    %412 = arith.addf %367, %379 : f32
    %413 = arith.subf %252, %297 : f32
    %414 = math.absf %413 : f32
    %cst_220 = arith.constant 0.000000e+00 : f32
    %415 = arith.addf %cst_220, %414 : f32
    %416 = arith.subf %258, %303 : f32
    %417 = math.absf %416 : f32
    %418 = arith.addf %415, %417 : f32
    %419 = arith.mulf %244, %289 : f32
    %cst_221 = arith.constant 5.000000e+00 : f32
    %420 = arith.subf %cst_221, %418 : f32
    %cst_222 = arith.constant 0.000000e+00 : f32
    %421 = arith.maximumf %420, %cst_222 : f32
    %422 = arith.mulf %419, %421 : f32
    %cst_223 = arith.constant 0.000000e+00 : f32
    %423 = arith.addf %cst_223, %422 : f32
    %cst_224 = arith.constant 0.000000e+00 : f32
    %424 = arith.addf %cst_224, %419 : f32
    %425 = arith.subf %252, %342 : f32
    %426 = math.absf %425 : f32
    %cst_225 = arith.constant 0.000000e+00 : f32
    %427 = arith.addf %cst_225, %426 : f32
    %428 = arith.subf %258, %348 : f32
    %429 = math.absf %428 : f32
    %430 = arith.addf %427, %429 : f32
    %431 = arith.mulf %244, %334 : f32
    %cst_226 = arith.constant 5.000000e+00 : f32
    %432 = arith.subf %cst_226, %430 : f32
    %cst_227 = arith.constant 0.000000e+00 : f32
    %433 = arith.maximumf %432, %cst_227 : f32
    %434 = arith.mulf %431, %433 : f32
    %435 = arith.addf %423, %434 : f32
    %436 = arith.addf %424, %431 : f32
    %437 = arith.subf %252, %387 : f32
    %438 = math.absf %437 : f32
    %cst_228 = arith.constant 0.000000e+00 : f32
    %439 = arith.addf %cst_228, %438 : f32
    %440 = arith.subf %258, %393 : f32
    %441 = math.absf %440 : f32
    %442 = arith.addf %439, %441 : f32
    %443 = arith.mulf %244, %379 : f32
    %cst_229 = arith.constant 5.000000e+00 : f32
    %444 = arith.subf %cst_229, %442 : f32
    %cst_230 = arith.constant 0.000000e+00 : f32
    %445 = arith.maximumf %444, %cst_230 : f32
    %446 = arith.mulf %443, %445 : f32
    %447 = arith.addf %435, %446 : f32
    %448 = arith.addf %436, %443 : f32
    %449 = arith.subf %297, %252 : f32
    %450 = math.absf %449 : f32
    %cst_231 = arith.constant 0.000000e+00 : f32
    %451 = arith.addf %cst_231, %450 : f32
    %452 = arith.subf %303, %258 : f32
    %453 = math.absf %452 : f32
    %454 = arith.addf %451, %453 : f32
    %455 = arith.mulf %289, %244 : f32
    %cst_232 = arith.constant 5.000000e+00 : f32
    %456 = arith.subf %cst_232, %454 : f32
    %cst_233 = arith.constant 0.000000e+00 : f32
    %457 = arith.maximumf %456, %cst_233 : f32
    %458 = arith.mulf %455, %457 : f32
    %459 = arith.addf %447, %458 : f32
    %460 = arith.addf %448, %455 : f32
    %461 = arith.subf %297, %342 : f32
    %462 = math.absf %461 : f32
    %cst_234 = arith.constant 0.000000e+00 : f32
    %463 = arith.addf %cst_234, %462 : f32
    %464 = arith.subf %303, %348 : f32
    %465 = math.absf %464 : f32
    %466 = arith.addf %463, %465 : f32
    %467 = arith.mulf %289, %334 : f32
    %cst_235 = arith.constant 5.000000e+00 : f32
    %468 = arith.subf %cst_235, %466 : f32
    %cst_236 = arith.constant 0.000000e+00 : f32
    %469 = arith.maximumf %468, %cst_236 : f32
    %470 = arith.mulf %467, %469 : f32
    %471 = arith.addf %459, %470 : f32
    %472 = arith.addf %460, %467 : f32
    %473 = arith.subf %297, %387 : f32
    %474 = math.absf %473 : f32
    %cst_237 = arith.constant 0.000000e+00 : f32
    %475 = arith.addf %cst_237, %474 : f32
    %476 = arith.subf %303, %393 : f32
    %477 = math.absf %476 : f32
    %478 = arith.addf %475, %477 : f32
    %479 = arith.mulf %289, %379 : f32
    %cst_238 = arith.constant 5.000000e+00 : f32
    %480 = arith.subf %cst_238, %478 : f32
    %cst_239 = arith.constant 0.000000e+00 : f32
    %481 = arith.maximumf %480, %cst_239 : f32
    %482 = arith.mulf %479, %481 : f32
    %483 = arith.addf %471, %482 : f32
    %484 = arith.addf %472, %479 : f32
    %485 = arith.subf %342, %252 : f32
    %486 = math.absf %485 : f32
    %cst_240 = arith.constant 0.000000e+00 : f32
    %487 = arith.addf %cst_240, %486 : f32
    %488 = arith.subf %348, %258 : f32
    %489 = math.absf %488 : f32
    %490 = arith.addf %487, %489 : f32
    %491 = arith.mulf %334, %244 : f32
    %cst_241 = arith.constant 5.000000e+00 : f32
    %492 = arith.subf %cst_241, %490 : f32
    %cst_242 = arith.constant 0.000000e+00 : f32
    %493 = arith.maximumf %492, %cst_242 : f32
    %494 = arith.mulf %491, %493 : f32
    %495 = arith.addf %483, %494 : f32
    %496 = arith.addf %484, %491 : f32
    %497 = arith.subf %342, %297 : f32
    %498 = math.absf %497 : f32
    %cst_243 = arith.constant 0.000000e+00 : f32
    %499 = arith.addf %cst_243, %498 : f32
    %500 = arith.subf %348, %303 : f32
    %501 = math.absf %500 : f32
    %502 = arith.addf %499, %501 : f32
    %503 = arith.mulf %334, %289 : f32
    %cst_244 = arith.constant 5.000000e+00 : f32
    %504 = arith.subf %cst_244, %502 : f32
    %cst_245 = arith.constant 0.000000e+00 : f32
    %505 = arith.maximumf %504, %cst_245 : f32
    %506 = arith.mulf %503, %505 : f32
    %507 = arith.addf %495, %506 : f32
    %508 = arith.addf %496, %503 : f32
    %509 = arith.subf %342, %387 : f32
    %510 = math.absf %509 : f32
    %cst_246 = arith.constant 0.000000e+00 : f32
    %511 = arith.addf %cst_246, %510 : f32
    %512 = arith.subf %348, %393 : f32
    %513 = math.absf %512 : f32
    %514 = arith.addf %511, %513 : f32
    %515 = arith.mulf %334, %379 : f32
    %cst_247 = arith.constant 5.000000e+00 : f32
    %516 = arith.subf %cst_247, %514 : f32
    %cst_248 = arith.constant 0.000000e+00 : f32
    %517 = arith.maximumf %516, %cst_248 : f32
    %518 = arith.mulf %515, %517 : f32
    %519 = arith.addf %507, %518 : f32
    %520 = arith.addf %508, %515 : f32
    %521 = arith.subf %387, %252 : f32
    %522 = math.absf %521 : f32
    %cst_249 = arith.constant 0.000000e+00 : f32
    %523 = arith.addf %cst_249, %522 : f32
    %524 = arith.subf %393, %258 : f32
    %525 = math.absf %524 : f32
    %526 = arith.addf %523, %525 : f32
    %527 = arith.mulf %379, %244 : f32
    %cst_250 = arith.constant 5.000000e+00 : f32
    %528 = arith.subf %cst_250, %526 : f32
    %cst_251 = arith.constant 0.000000e+00 : f32
    %529 = arith.maximumf %528, %cst_251 : f32
    %530 = arith.mulf %527, %529 : f32
    %531 = arith.addf %519, %530 : f32
    %532 = arith.addf %520, %527 : f32
    %533 = arith.subf %387, %297 : f32
    %534 = math.absf %533 : f32
    %cst_252 = arith.constant 0.000000e+00 : f32
    %535 = arith.addf %cst_252, %534 : f32
    %536 = arith.subf %393, %303 : f32
    %537 = math.absf %536 : f32
    %538 = arith.addf %535, %537 : f32
    %539 = arith.mulf %379, %289 : f32
    %cst_253 = arith.constant 5.000000e+00 : f32
    %540 = arith.subf %cst_253, %538 : f32
    %cst_254 = arith.constant 0.000000e+00 : f32
    %541 = arith.maximumf %540, %cst_254 : f32
    %542 = arith.mulf %539, %541 : f32
    %543 = arith.addf %531, %542 : f32
    %544 = arith.addf %532, %539 : f32
    %545 = arith.subf %387, %342 : f32
    %546 = math.absf %545 : f32
    %cst_255 = arith.constant 0.000000e+00 : f32
    %547 = arith.addf %cst_255, %546 : f32
    %548 = arith.subf %393, %348 : f32
    %549 = math.absf %548 : f32
    %550 = arith.addf %547, %549 : f32
    %551 = arith.mulf %379, %334 : f32
    %cst_256 = arith.constant 5.000000e+00 : f32
    %552 = arith.subf %cst_256, %550 : f32
    %cst_257 = arith.constant 0.000000e+00 : f32
    %553 = arith.maximumf %552, %cst_257 : f32
    %554 = arith.mulf %551, %553 : f32
    %555 = arith.addf %543, %554 : f32
    %556 = arith.addf %544, %551 : f32
    %557 = vector.broadcast %412 : f32 to vector<1x128xf32>
    %558 = arith.mulf %557, %4 : vector<1x128xf32>
    %559 = vector.broadcast %555 : f32 to vector<1x128xf32>
    %560 = arith.mulf %559, %4 : vector<1x128xf32>
    %561 = vector.broadcast %556 : f32 to vector<1x128xf32>
    %562 = arith.mulf %561, %4 : vector<1x128xf32>
    %c0_258 = arith.constant 0 : index
    %c0_259 = arith.constant 0 : index
    %c0_260 = arith.constant 0 : index
    %c0_261 = arith.constant 0 : index
    %563 = vector.load %arg3[%c0_258, %c0_259, %c0_260, %c0_261] : memref<1x4x8x128xf32, #tpu.memory_space<vmem>>, vector<1x1x8x128xf32>
    %564 = vector.shape_cast %563 : vector<1x1x8x128xf32> to vector<8x128xf32>
    %c5 = arith.constant 5 : index
    %c0_262 = arith.constant 0 : index
    %565 = memref.load %arg1[%c5, %c0_262] : memref<8x4xf32, #tpu.memory_space<smem>>
    %566 = vector.broadcast %565 : f32 to vector<8x128xf32>
    %567 = arith.mulf %564, %566 : vector<8x128xf32>
    %c0_263 = arith.constant 0 : index
    %c1_264 = arith.constant 1 : index
    %c0_265 = arith.constant 0 : index
    %c0_266 = arith.constant 0 : index
    %568 = vector.load %arg3[%c0_263, %c1_264, %c0_265, %c0_266] : memref<1x4x8x128xf32, #tpu.memory_space<vmem>>, vector<1x1x8x128xf32>
    %569 = vector.shape_cast %568 : vector<1x1x8x128xf32> to vector<8x128xf32>
    %c5_267 = arith.constant 5 : index
    %c1_268 = arith.constant 1 : index
    %570 = memref.load %arg1[%c5_267, %c1_268] : memref<8x4xf32, #tpu.memory_space<smem>>
    %571 = vector.broadcast %570 : f32 to vector<8x128xf32>
    %572 = arith.mulf %569, %571 : vector<8x128xf32>
    %573 = arith.addf %567, %572 : vector<8x128xf32>
    %c0_269 = arith.constant 0 : index
    %c2_270 = arith.constant 2 : index
    %c0_271 = arith.constant 0 : index
    %c0_272 = arith.constant 0 : index
    %574 = vector.load %arg3[%c0_269, %c2_270, %c0_271, %c0_272] : memref<1x4x8x128xf32, #tpu.memory_space<vmem>>, vector<1x1x8x128xf32>
    %575 = vector.shape_cast %574 : vector<1x1x8x128xf32> to vector<8x128xf32>
    %c5_273 = arith.constant 5 : index
    %c2_274 = arith.constant 2 : index
    %576 = memref.load %arg1[%c5_273, %c2_274] : memref<8x4xf32, #tpu.memory_space<smem>>
    %577 = vector.broadcast %576 : f32 to vector<8x128xf32>
    %578 = arith.mulf %575, %577 : vector<8x128xf32>
    %579 = arith.addf %573, %578 : vector<8x128xf32>
    %c0_275 = arith.constant 0 : index
    %c3_276 = arith.constant 3 : index
    %c0_277 = arith.constant 0 : index
    %c0_278 = arith.constant 0 : index
    %580 = vector.load %arg3[%c0_275, %c3_276, %c0_277, %c0_278] : memref<1x4x8x128xf32, #tpu.memory_space<vmem>>, vector<1x1x8x128xf32>
    %581 = vector.shape_cast %580 : vector<1x1x8x128xf32> to vector<8x128xf32>
    %c5_279 = arith.constant 5 : index
    %c3_280 = arith.constant 3 : index
    %582 = memref.load %arg1[%c5_279, %c3_280] : memref<8x4xf32, #tpu.memory_space<smem>>
    %583 = vector.broadcast %582 : f32 to vector<8x128xf32>
    %584 = arith.mulf %581, %583 : vector<8x128xf32>
    %585 = arith.addf %579, %584 : vector<8x128xf32>
    %c5_281 = arith.constant 5 : index
    %586 = memref.load %arg2[%c5_281] : memref<8xf32, #tpu.memory_space<smem>>
    %587 = vector.broadcast %586 : f32 to vector<8x128xf32>
    %588 = arith.addf %585, %587 : vector<8x128xf32>
    %c0_282 = arith.constant 0 : index
    %c0_283 = arith.constant 0 : index
    %c0_284 = arith.constant 0 : index
    %589 = vector.load %arg8[%c0_282, %c0_283, %c0_284] : memref<1x8x128xf32, #tpu.memory_space<vmem>>, vector<1x8x128xf32>
    %590 = vector.shape_cast %589 : vector<1x8x128xf32> to vector<8x128xf32>
    %591 = math.absf %588 : vector<8x128xf32>
    %cst_285 = arith.constant 0.000000e+00 : f32
    %592 = vector.broadcast %cst_285 : f32 to vector<8x128xf32>
    %593 = arith.subf %592, %591 : vector<8x128xf32>
    %594 = math.exp %593 : vector<8x128xf32>
    %cst_286 = arith.constant 0.000000e+00 : f32
    %595 = vector.broadcast %cst_286 : f32 to vector<8x128xf32>
    %596 = arith.subf %595, %588 : vector<8x128xf32>
    %cst_287 = arith.constant 0.000000e+00 : f32
    %597 = vector.broadcast %cst_287 : f32 to vector<8x128xf32>
    %598 = arith.maximumf %596, %597 : vector<8x128xf32>
    %cst_288 = arith.constant 1.000000e+00 : f32
    %599 = vector.broadcast %cst_288 : f32 to vector<8x128xf32>
    %600 = arith.addf %599, %594 : vector<8x128xf32>
    %601 = math.log %600 : vector<8x128xf32>
    %602 = arith.addf %598, %601 : vector<8x128xf32>
    %cst_289 = arith.constant 1.000000e+00 : f32
    %603 = vector.broadcast %cst_289 : f32 to vector<8x128xf32>
    %604 = arith.subf %603, %590 : vector<8x128xf32>
    %605 = arith.mulf %604, %588 : vector<8x128xf32>
    %cst_290 = arith.constant 9.000000e+00 : f32
    %606 = vector.broadcast %cst_290 : f32 to vector<8x128xf32>
    %607 = arith.mulf %606, %590 : vector<8x128xf32>
    %cst_291 = arith.constant 1.000000e+00 : f32
    %608 = vector.broadcast %cst_291 : f32 to vector<8x128xf32>
    %609 = arith.addf %608, %607 : vector<8x128xf32>
    %610 = arith.mulf %609, %602 : vector<8x128xf32>
    %611 = arith.addf %605, %610 : vector<8x128xf32>
    %cst_292 = arith.constant 0.000000e+00 : f32
    %612 = vector.broadcast %cst_292 : f32 to vector<8x128xf32>
    %613 = arith.cmpf oge, %588, %612 : vector<8x128xf32>
    %cst_293 = arith.constant 1.000000e+00 : f32
    %614 = vector.broadcast %cst_293 : f32 to vector<8x128xf32>
    %615 = arith.select %613, %614, %594 : vector<8x128xi1>, vector<8x128xf32>
    %cst_294 = arith.constant 1.000000e+00 : f32
    %616 = vector.broadcast %cst_294 : f32 to vector<8x128xf32>
    %617 = arith.addf %616, %594 : vector<8x128xf32>
    %618 = tpu.reciprocal %617 {approx = true} : vector<8x128xf32> -> vector<8x128xf32>
    %619 = arith.mulf %615, %618 : vector<8x128xf32>
    %620 = arith.mulf %611, %9 : vector<8x128xf32>
    %621 = arith.mulf %619, %9 : vector<8x128xf32>
    %cst_295 = arith.constant dense<0.000000e+00> : vector<128xf32>
    %622 = vector.multi_reduction <add>, %620, %cst_295 [0] : vector<8x128xf32> to vector<128xf32>
    %623 = vector.shape_cast %622 : vector<128xf32> to vector<1x128xf32>
    %624 = arith.mulf %619, %590 : vector<8x128xf32>
    %cst_296 = arith.constant dense<0.000000e+00> : vector<128xf32>
    %625 = vector.multi_reduction <add>, %624, %cst_296 [0] : vector<8x128xf32> to vector<128xf32>
    %626 = vector.shape_cast %625 : vector<128xf32> to vector<1x128xf32>
    %cst_297 = arith.constant dense<0.000000e+00> : vector<128xf32>
    %627 = vector.multi_reduction <add>, %621, %cst_297 [0] : vector<8x128xf32> to vector<128xf32>
    %628 = vector.shape_cast %627 : vector<128xf32> to vector<1x128xf32>
    %cst_298 = arith.constant dense<0.000000e+00> : vector<128xf32>
    %629 = vector.multi_reduction <add>, %590, %cst_298 [0] : vector<8x128xf32> to vector<128xf32>
    %630 = vector.shape_cast %629 : vector<128xf32> to vector<1x128xf32>
    %c0_299 = arith.constant 0 : index
    %c0_300 = arith.constant 0 : index
    %c0_301 = arith.constant 0 : index
    %c0_302 = arith.constant 0 : index
    %631 = vector.load %arg3[%c0_299, %c0_300, %c0_301, %c0_302] : memref<1x4x8x128xf32, #tpu.memory_space<vmem>>, vector<1x1x8x128xf32>
    %632 = vector.shape_cast %631 : vector<1x1x8x128xf32> to vector<8x128xf32>
    %c6 = arith.constant 6 : index
    %c0_303 = arith.constant 0 : index
    %633 = memref.load %arg1[%c6, %c0_303] : memref<8x4xf32, #tpu.memory_space<smem>>
    %634 = vector.broadcast %633 : f32 to vector<8x128xf32>
    %635 = arith.mulf %632, %634 : vector<8x128xf32>
    %c0_304 = arith.constant 0 : index
    %c1_305 = arith.constant 1 : index
    %c0_306 = arith.constant 0 : index
    %c0_307 = arith.constant 0 : index
    %636 = vector.load %arg3[%c0_304, %c1_305, %c0_306, %c0_307] : memref<1x4x8x128xf32, #tpu.memory_space<vmem>>, vector<1x1x8x128xf32>
    %637 = vector.shape_cast %636 : vector<1x1x8x128xf32> to vector<8x128xf32>
    %c6_308 = arith.constant 6 : index
    %c1_309 = arith.constant 1 : index
    %638 = memref.load %arg1[%c6_308, %c1_309] : memref<8x4xf32, #tpu.memory_space<smem>>
    %639 = vector.broadcast %638 : f32 to vector<8x128xf32>
    %640 = arith.mulf %637, %639 : vector<8x128xf32>
    %641 = arith.addf %635, %640 : vector<8x128xf32>
    %c0_310 = arith.constant 0 : index
    %c2_311 = arith.constant 2 : index
    %c0_312 = arith.constant 0 : index
    %c0_313 = arith.constant 0 : index
    %642 = vector.load %arg3[%c0_310, %c2_311, %c0_312, %c0_313] : memref<1x4x8x128xf32, #tpu.memory_space<vmem>>, vector<1x1x8x128xf32>
    %643 = vector.shape_cast %642 : vector<1x1x8x128xf32> to vector<8x128xf32>
    %c6_314 = arith.constant 6 : index
    %c2_315 = arith.constant 2 : index
    %644 = memref.load %arg1[%c6_314, %c2_315] : memref<8x4xf32, #tpu.memory_space<smem>>
    %645 = vector.broadcast %644 : f32 to vector<8x128xf32>
    %646 = arith.mulf %643, %645 : vector<8x128xf32>
    %647 = arith.addf %641, %646 : vector<8x128xf32>
    %c0_316 = arith.constant 0 : index
    %c3_317 = arith.constant 3 : index
    %c0_318 = arith.constant 0 : index
    %c0_319 = arith.constant 0 : index
    %648 = vector.load %arg3[%c0_316, %c3_317, %c0_318, %c0_319] : memref<1x4x8x128xf32, #tpu.memory_space<vmem>>, vector<1x1x8x128xf32>
    %649 = vector.shape_cast %648 : vector<1x1x8x128xf32> to vector<8x128xf32>
    %c6_320 = arith.constant 6 : index
    %c3_321 = arith.constant 3 : index
    %650 = memref.load %arg1[%c6_320, %c3_321] : memref<8x4xf32, #tpu.memory_space<smem>>
    %651 = vector.broadcast %650 : f32 to vector<8x128xf32>
    %652 = arith.mulf %649, %651 : vector<8x128xf32>
    %653 = arith.addf %647, %652 : vector<8x128xf32>
    %c6_322 = arith.constant 6 : index
    %654 = memref.load %arg2[%c6_322] : memref<8xf32, #tpu.memory_space<smem>>
    %655 = vector.broadcast %654 : f32 to vector<8x128xf32>
    %656 = arith.addf %653, %655 : vector<8x128xf32>
    %c0_323 = arith.constant 0 : index
    %c0_324 = arith.constant 0 : index
    %c0_325 = arith.constant 0 : index
    %c0_326 = arith.constant 0 : index
    %657 = vector.load %arg3[%c0_323, %c0_324, %c0_325, %c0_326] : memref<1x4x8x128xf32, #tpu.memory_space<vmem>>, vector<1x1x8x128xf32>
    %658 = vector.shape_cast %657 : vector<1x1x8x128xf32> to vector<8x128xf32>
    %c7 = arith.constant 7 : index
    %c0_327 = arith.constant 0 : index
    %659 = memref.load %arg1[%c7, %c0_327] : memref<8x4xf32, #tpu.memory_space<smem>>
    %660 = vector.broadcast %659 : f32 to vector<8x128xf32>
    %661 = arith.mulf %658, %660 : vector<8x128xf32>
    %c0_328 = arith.constant 0 : index
    %c1_329 = arith.constant 1 : index
    %c0_330 = arith.constant 0 : index
    %c0_331 = arith.constant 0 : index
    %662 = vector.load %arg3[%c0_328, %c1_329, %c0_330, %c0_331] : memref<1x4x8x128xf32, #tpu.memory_space<vmem>>, vector<1x1x8x128xf32>
    %663 = vector.shape_cast %662 : vector<1x1x8x128xf32> to vector<8x128xf32>
    %c7_332 = arith.constant 7 : index
    %c1_333 = arith.constant 1 : index
    %664 = memref.load %arg1[%c7_332, %c1_333] : memref<8x4xf32, #tpu.memory_space<smem>>
    %665 = vector.broadcast %664 : f32 to vector<8x128xf32>
    %666 = arith.mulf %663, %665 : vector<8x128xf32>
    %667 = arith.addf %661, %666 : vector<8x128xf32>
    %c0_334 = arith.constant 0 : index
    %c2_335 = arith.constant 2 : index
    %c0_336 = arith.constant 0 : index
    %c0_337 = arith.constant 0 : index
    %668 = vector.load %arg3[%c0_334, %c2_335, %c0_336, %c0_337] : memref<1x4x8x128xf32, #tpu.memory_space<vmem>>, vector<1x1x8x128xf32>
    %669 = vector.shape_cast %668 : vector<1x1x8x128xf32> to vector<8x128xf32>
    %c7_338 = arith.constant 7 : index
    %c2_339 = arith.constant 2 : index
    %670 = memref.load %arg1[%c7_338, %c2_339] : memref<8x4xf32, #tpu.memory_space<smem>>
    %671 = vector.broadcast %670 : f32 to vector<8x128xf32>
    %672 = arith.mulf %669, %671 : vector<8x128xf32>
    %673 = arith.addf %667, %672 : vector<8x128xf32>
    %c0_340 = arith.constant 0 : index
    %c3_341 = arith.constant 3 : index
    %c0_342 = arith.constant 0 : index
    %c0_343 = arith.constant 0 : index
    %674 = vector.load %arg3[%c0_340, %c3_341, %c0_342, %c0_343] : memref<1x4x8x128xf32, #tpu.memory_space<vmem>>, vector<1x1x8x128xf32>
    %675 = vector.shape_cast %674 : vector<1x1x8x128xf32> to vector<8x128xf32>
    %c7_344 = arith.constant 7 : index
    %c3_345 = arith.constant 3 : index
    %676 = memref.load %arg1[%c7_344, %c3_345] : memref<8x4xf32, #tpu.memory_space<smem>>
    %677 = vector.broadcast %676 : f32 to vector<8x128xf32>
    %678 = arith.mulf %675, %677 : vector<8x128xf32>
    %679 = arith.addf %673, %678 : vector<8x128xf32>
    %c7_346 = arith.constant 7 : index
    %680 = memref.load %arg2[%c7_346] : memref<8xf32, #tpu.memory_space<smem>>
    %681 = vector.broadcast %680 : f32 to vector<8x128xf32>
    %682 = arith.addf %679, %681 : vector<8x128xf32>
    %c0_347 = arith.constant 0 : index
    %c0_348 = arith.constant 0 : index
    %c0_349 = arith.constant 0 : index
    %683 = vector.load %arg9[%c0_347, %c0_348, %c0_349] : memref<1x8x128xf32, #tpu.memory_space<vmem>>, vector<1x8x128xf32>
    %684 = vector.shape_cast %683 : vector<1x8x128xf32> to vector<8x128xf32>
    %cst_350 = arith.constant 2.000000e+02 : f32
    %685 = vector.broadcast %cst_350 : f32 to vector<8x128xf32>
    %686 = arith.cmpf olt, %684, %685 : vector<8x128xf32>
    %cst_351 = arith.constant 1.000000e+00 : f32
    %cst_352 = arith.constant 0.000000e+00 : f32
    %687 = vector.broadcast %cst_351 : f32 to vector<8x128xf32>
    %688 = vector.broadcast %cst_352 : f32 to vector<8x128xf32>
    %689 = arith.select %686, %687, %688 : vector<8x128xi1>, vector<8x128xf32>
    %cst_353 = arith.constant 0.000000e+00 : f32
    %690 = vector.broadcast %cst_353 : f32 to vector<1x128xf32>
    %cst_354 = arith.constant 1.000000e+00 : f32
    %691 = vector.broadcast %cst_354 : f32 to vector<8x128xf32>
    %692 = arith.cmpf oeq, %684, %691 : vector<8x128xf32>
    %cst_355 = arith.constant 1.000000e+00 : f32
    %cst_356 = arith.constant 0.000000e+00 : f32
    %693 = vector.broadcast %cst_355 : f32 to vector<8x128xf32>
    %694 = vector.broadcast %cst_356 : f32 to vector<8x128xf32>
    %695 = arith.select %692, %693, %694 : vector<8x128xi1>, vector<8x128xf32>
    %696 = arith.mulf %695, %689 : vector<8x128xf32>
    %697 = vector.shape_cast %696 : vector<8x128xf32> to vector<1x8x128xf32>
    %cst_357 = arith.constant dense<0.000000e+00> : vector<1xf32>
    %698 = vector.multi_reduction <add>, %697, %cst_357 [1, 2] : vector<1x8x128xf32> to vector<1xf32>
    %699 = vector.shape_cast %698 : vector<1xf32> to vector<1x1x1xf32>
    %700 = vector.extract %699[0, 0, 0] : f32 from vector<1x1x1xf32>
    %cst_358 = arith.constant 0.000000e+00 : f32
    %701 = arith.cmpf ogt, %700, %cst_358 : f32
    %cst_359 = arith.constant 1.000000e+00 : f32
    %cst_360 = arith.constant 0.000000e+00 : f32
    %702 = arith.select %701, %cst_359, %cst_360 : f32
    %cst_361 = arith.constant 1.000000e+00 : f32
    %703 = arith.maximumf %700, %cst_361 : f32
    %cst_362 = arith.constant 1.000000e+00 : f32
    %704 = arith.divf %cst_362, %703 : f32
    %705 = arith.mulf %656, %696 : vector<8x128xf32>
    %706 = vector.shape_cast %705 : vector<8x128xf32> to vector<1x8x128xf32>
    %cst_363 = arith.constant dense<0.000000e+00> : vector<1xf32>
    %707 = vector.multi_reduction <add>, %706, %cst_363 [1, 2] : vector<1x8x128xf32> to vector<1xf32>
    %708 = vector.shape_cast %707 : vector<1xf32> to vector<1x1x1xf32>
    %709 = vector.extract %708[0, 0, 0] : f32 from vector<1x1x1xf32>
    %710 = arith.mulf %709, %704 : f32
    %711 = arith.mulf %682, %696 : vector<8x128xf32>
    %712 = vector.shape_cast %711 : vector<8x128xf32> to vector<1x8x128xf32>
    %cst_364 = arith.constant dense<0.000000e+00> : vector<1xf32>
    %713 = vector.multi_reduction <add>, %712, %cst_364 [1, 2] : vector<1x8x128xf32> to vector<1xf32>
    %714 = vector.shape_cast %713 : vector<1xf32> to vector<1x1x1xf32>
    %715 = vector.extract %714[0, 0, 0] : f32 from vector<1x1x1xf32>
    %716 = arith.mulf %715, %704 : f32
    %717 = vector.broadcast %710 : f32 to vector<8x128xf32>
    %718 = arith.subf %656, %717 : vector<8x128xf32>
    %719 = math.absf %718 : vector<8x128xf32>
    %720 = vector.broadcast %716 : f32 to vector<8x128xf32>
    %721 = arith.subf %682, %720 : vector<8x128xf32>
    %722 = math.absf %721 : vector<8x128xf32>
    %723 = arith.addf %719, %722 : vector<8x128xf32>
    %cst_365 = arith.constant 1.000000e+00 : f32
    %724 = vector.broadcast %cst_365 : f32 to vector<8x128xf32>
    %725 = arith.subf %723, %724 : vector<8x128xf32>
    %cst_366 = arith.constant 0.000000e+00 : f32
    %726 = vector.broadcast %cst_366 : f32 to vector<8x128xf32>
    %727 = arith.maximumf %725, %726 : vector<8x128xf32>
    %728 = arith.mulf %727, %696 : vector<8x128xf32>
    %729 = arith.mulf %702, %704 : f32
    %cst_367 = arith.constant dense<0.000000e+00> : vector<128xf32>
    %730 = vector.multi_reduction <add>, %728, %cst_367 [0] : vector<8x128xf32> to vector<128xf32>
    %731 = vector.shape_cast %730 : vector<128xf32> to vector<1x128xf32>
    %732 = vector.broadcast %729 : f32 to vector<1x128xf32>
    %733 = arith.mulf %732, %731 : vector<1x128xf32>
    %734 = arith.addf %690, %733 : vector<1x128xf32>
    %cst_368 = arith.constant 0.000000e+00 : f32
    %735 = arith.addf %cst_368, %702 : f32
    %cst_369 = arith.constant 2.000000e+00 : f32
    %736 = vector.broadcast %cst_369 : f32 to vector<8x128xf32>
    %737 = arith.cmpf oeq, %684, %736 : vector<8x128xf32>
    %cst_370 = arith.constant 1.000000e+00 : f32
    %cst_371 = arith.constant 0.000000e+00 : f32
    %738 = vector.broadcast %cst_370 : f32 to vector<8x128xf32>
    %739 = vector.broadcast %cst_371 : f32 to vector<8x128xf32>
    %740 = arith.select %737, %738, %739 : vector<8x128xi1>, vector<8x128xf32>
    %741 = arith.mulf %740, %689 : vector<8x128xf32>
    %742 = vector.shape_cast %741 : vector<8x128xf32> to vector<1x8x128xf32>
    %cst_372 = arith.constant dense<0.000000e+00> : vector<1xf32>
    %743 = vector.multi_reduction <add>, %742, %cst_372 [1, 2] : vector<1x8x128xf32> to vector<1xf32>
    %744 = vector.shape_cast %743 : vector<1xf32> to vector<1x1x1xf32>
    %745 = vector.extract %744[0, 0, 0] : f32 from vector<1x1x1xf32>
    %cst_373 = arith.constant 0.000000e+00 : f32
    %746 = arith.cmpf ogt, %745, %cst_373 : f32
    %cst_374 = arith.constant 1.000000e+00 : f32
    %cst_375 = arith.constant 0.000000e+00 : f32
    %747 = arith.select %746, %cst_374, %cst_375 : f32
    %cst_376 = arith.constant 1.000000e+00 : f32
    %748 = arith.maximumf %745, %cst_376 : f32
    %cst_377 = arith.constant 1.000000e+00 : f32
    %749 = arith.divf %cst_377, %748 : f32
    %750 = arith.mulf %656, %741 : vector<8x128xf32>
    %751 = vector.shape_cast %750 : vector<8x128xf32> to vector<1x8x128xf32>
    %cst_378 = arith.constant dense<0.000000e+00> : vector<1xf32>
    %752 = vector.multi_reduction <add>, %751, %cst_378 [1, 2] : vector<1x8x128xf32> to vector<1xf32>
    %753 = vector.shape_cast %752 : vector<1xf32> to vector<1x1x1xf32>
    %754 = vector.extract %753[0, 0, 0] : f32 from vector<1x1x1xf32>
    %755 = arith.mulf %754, %749 : f32
    %756 = arith.mulf %682, %741 : vector<8x128xf32>
    %757 = vector.shape_cast %756 : vector<8x128xf32> to vector<1x8x128xf32>
    %cst_379 = arith.constant dense<0.000000e+00> : vector<1xf32>
    %758 = vector.multi_reduction <add>, %757, %cst_379 [1, 2] : vector<1x8x128xf32> to vector<1xf32>
    %759 = vector.shape_cast %758 : vector<1xf32> to vector<1x1x1xf32>
    %760 = vector.extract %759[0, 0, 0] : f32 from vector<1x1x1xf32>
    %761 = arith.mulf %760, %749 : f32
    %762 = vector.broadcast %755 : f32 to vector<8x128xf32>
    %763 = arith.subf %656, %762 : vector<8x128xf32>
    %764 = math.absf %763 : vector<8x128xf32>
    %765 = vector.broadcast %761 : f32 to vector<8x128xf32>
    %766 = arith.subf %682, %765 : vector<8x128xf32>
    %767 = math.absf %766 : vector<8x128xf32>
    %768 = arith.addf %764, %767 : vector<8x128xf32>
    %cst_380 = arith.constant 1.000000e+00 : f32
    %769 = vector.broadcast %cst_380 : f32 to vector<8x128xf32>
    %770 = arith.subf %768, %769 : vector<8x128xf32>
    %cst_381 = arith.constant 0.000000e+00 : f32
    %771 = vector.broadcast %cst_381 : f32 to vector<8x128xf32>
    %772 = arith.maximumf %770, %771 : vector<8x128xf32>
    %773 = arith.mulf %772, %741 : vector<8x128xf32>
    %774 = arith.mulf %747, %749 : f32
    %cst_382 = arith.constant dense<0.000000e+00> : vector<128xf32>
    %775 = vector.multi_reduction <add>, %773, %cst_382 [0] : vector<8x128xf32> to vector<128xf32>
    %776 = vector.shape_cast %775 : vector<128xf32> to vector<1x128xf32>
    %777 = vector.broadcast %774 : f32 to vector<1x128xf32>
    %778 = arith.mulf %777, %776 : vector<1x128xf32>
    %779 = arith.addf %734, %778 : vector<1x128xf32>
    %780 = arith.addf %735, %747 : f32
    %cst_383 = arith.constant 3.000000e+00 : f32
    %781 = vector.broadcast %cst_383 : f32 to vector<8x128xf32>
    %782 = arith.cmpf oeq, %684, %781 : vector<8x128xf32>
    %cst_384 = arith.constant 1.000000e+00 : f32
    %cst_385 = arith.constant 0.000000e+00 : f32
    %783 = vector.broadcast %cst_384 : f32 to vector<8x128xf32>
    %784 = vector.broadcast %cst_385 : f32 to vector<8x128xf32>
    %785 = arith.select %782, %783, %784 : vector<8x128xi1>, vector<8x128xf32>
    %786 = arith.mulf %785, %689 : vector<8x128xf32>
    %787 = vector.shape_cast %786 : vector<8x128xf32> to vector<1x8x128xf32>
    %cst_386 = arith.constant dense<0.000000e+00> : vector<1xf32>
    %788 = vector.multi_reduction <add>, %787, %cst_386 [1, 2] : vector<1x8x128xf32> to vector<1xf32>
    %789 = vector.shape_cast %788 : vector<1xf32> to vector<1x1x1xf32>
    %790 = vector.extract %789[0, 0, 0] : f32 from vector<1x1x1xf32>
    %cst_387 = arith.constant 0.000000e+00 : f32
    %791 = arith.cmpf ogt, %790, %cst_387 : f32
    %cst_388 = arith.constant 1.000000e+00 : f32
    %cst_389 = arith.constant 0.000000e+00 : f32
    %792 = arith.select %791, %cst_388, %cst_389 : f32
    %cst_390 = arith.constant 1.000000e+00 : f32
    %793 = arith.maximumf %790, %cst_390 : f32
    %cst_391 = arith.constant 1.000000e+00 : f32
    %794 = arith.divf %cst_391, %793 : f32
    %795 = arith.mulf %656, %786 : vector<8x128xf32>
    %796 = vector.shape_cast %795 : vector<8x128xf32> to vector<1x8x128xf32>
    %cst_392 = arith.constant dense<0.000000e+00> : vector<1xf32>
    %797 = vector.multi_reduction <add>, %796, %cst_392 [1, 2] : vector<1x8x128xf32> to vector<1xf32>
    %798 = vector.shape_cast %797 : vector<1xf32> to vector<1x1x1xf32>
    %799 = vector.extract %798[0, 0, 0] : f32 from vector<1x1x1xf32>
    %800 = arith.mulf %799, %794 : f32
    %801 = arith.mulf %682, %786 : vector<8x128xf32>
    %802 = vector.shape_cast %801 : vector<8x128xf32> to vector<1x8x128xf32>
    %cst_393 = arith.constant dense<0.000000e+00> : vector<1xf32>
    %803 = vector.multi_reduction <add>, %802, %cst_393 [1, 2] : vector<1x8x128xf32> to vector<1xf32>
    %804 = vector.shape_cast %803 : vector<1xf32> to vector<1x1x1xf32>
    %805 = vector.extract %804[0, 0, 0] : f32 from vector<1x1x1xf32>
    %806 = arith.mulf %805, %794 : f32
    %807 = vector.broadcast %800 : f32 to vector<8x128xf32>
    %808 = arith.subf %656, %807 : vector<8x128xf32>
    %809 = math.absf %808 : vector<8x128xf32>
    %810 = vector.broadcast %806 : f32 to vector<8x128xf32>
    %811 = arith.subf %682, %810 : vector<8x128xf32>
    %812 = math.absf %811 : vector<8x128xf32>
    %813 = arith.addf %809, %812 : vector<8x128xf32>
    %cst_394 = arith.constant 1.000000e+00 : f32
    %814 = vector.broadcast %cst_394 : f32 to vector<8x128xf32>
    %815 = arith.subf %813, %814 : vector<8x128xf32>
    %cst_395 = arith.constant 0.000000e+00 : f32
    %816 = vector.broadcast %cst_395 : f32 to vector<8x128xf32>
    %817 = arith.maximumf %815, %816 : vector<8x128xf32>
    %818 = arith.mulf %817, %786 : vector<8x128xf32>
    %819 = arith.mulf %792, %794 : f32
    %cst_396 = arith.constant dense<0.000000e+00> : vector<128xf32>
    %820 = vector.multi_reduction <add>, %818, %cst_396 [0] : vector<8x128xf32> to vector<128xf32>
    %821 = vector.shape_cast %820 : vector<128xf32> to vector<1x128xf32>
    %822 = vector.broadcast %819 : f32 to vector<1x128xf32>
    %823 = arith.mulf %822, %821 : vector<1x128xf32>
    %824 = arith.addf %779, %823 : vector<1x128xf32>
    %825 = arith.addf %780, %792 : f32
    %cst_397 = arith.constant 4.000000e+00 : f32
    %826 = vector.broadcast %cst_397 : f32 to vector<8x128xf32>
    %827 = arith.cmpf oeq, %684, %826 : vector<8x128xf32>
    %cst_398 = arith.constant 1.000000e+00 : f32
    %cst_399 = arith.constant 0.000000e+00 : f32
    %828 = vector.broadcast %cst_398 : f32 to vector<8x128xf32>
    %829 = vector.broadcast %cst_399 : f32 to vector<8x128xf32>
    %830 = arith.select %827, %828, %829 : vector<8x128xi1>, vector<8x128xf32>
    %831 = arith.mulf %830, %689 : vector<8x128xf32>
    %832 = vector.shape_cast %831 : vector<8x128xf32> to vector<1x8x128xf32>
    %cst_400 = arith.constant dense<0.000000e+00> : vector<1xf32>
    %833 = vector.multi_reduction <add>, %832, %cst_400 [1, 2] : vector<1x8x128xf32> to vector<1xf32>
    %834 = vector.shape_cast %833 : vector<1xf32> to vector<1x1x1xf32>
    %835 = vector.extract %834[0, 0, 0] : f32 from vector<1x1x1xf32>
    %cst_401 = arith.constant 0.000000e+00 : f32
    %836 = arith.cmpf ogt, %835, %cst_401 : f32
    %cst_402 = arith.constant 1.000000e+00 : f32
    %cst_403 = arith.constant 0.000000e+00 : f32
    %837 = arith.select %836, %cst_402, %cst_403 : f32
    %cst_404 = arith.constant 1.000000e+00 : f32
    %838 = arith.maximumf %835, %cst_404 : f32
    %cst_405 = arith.constant 1.000000e+00 : f32
    %839 = arith.divf %cst_405, %838 : f32
    %840 = arith.mulf %656, %831 : vector<8x128xf32>
    %841 = vector.shape_cast %840 : vector<8x128xf32> to vector<1x8x128xf32>
    %cst_406 = arith.constant dense<0.000000e+00> : vector<1xf32>
    %842 = vector.multi_reduction <add>, %841, %cst_406 [1, 2] : vector<1x8x128xf32> to vector<1xf32>
    %843 = vector.shape_cast %842 : vector<1xf32> to vector<1x1x1xf32>
    %844 = vector.extract %843[0, 0, 0] : f32 from vector<1x1x1xf32>
    %845 = arith.mulf %844, %839 : f32
    %846 = arith.mulf %682, %831 : vector<8x128xf32>
    %847 = vector.shape_cast %846 : vector<8x128xf32> to vector<1x8x128xf32>
    %cst_407 = arith.constant dense<0.000000e+00> : vector<1xf32>
    %848 = vector.multi_reduction <add>, %847, %cst_407 [1, 2] : vector<1x8x128xf32> to vector<1xf32>
    %849 = vector.shape_cast %848 : vector<1xf32> to vector<1x1x1xf32>
    %850 = vector.extract %849[0, 0, 0] : f32 from vector<1x1x1xf32>
    %851 = arith.mulf %850, %839 : f32
    %852 = vector.broadcast %845 : f32 to vector<8x128xf32>
    %853 = arith.subf %656, %852 : vector<8x128xf32>
    %854 = math.absf %853 : vector<8x128xf32>
    %855 = vector.broadcast %851 : f32 to vector<8x128xf32>
    %856 = arith.subf %682, %855 : vector<8x128xf32>
    %857 = math.absf %856 : vector<8x128xf32>
    %858 = arith.addf %854, %857 : vector<8x128xf32>
    %cst_408 = arith.constant 1.000000e+00 : f32
    %859 = vector.broadcast %cst_408 : f32 to vector<8x128xf32>
    %860 = arith.subf %858, %859 : vector<8x128xf32>
    %cst_409 = arith.constant 0.000000e+00 : f32
    %861 = vector.broadcast %cst_409 : f32 to vector<8x128xf32>
    %862 = arith.maximumf %860, %861 : vector<8x128xf32>
    %863 = arith.mulf %862, %831 : vector<8x128xf32>
    %864 = arith.mulf %837, %839 : f32
    %cst_410 = arith.constant dense<0.000000e+00> : vector<128xf32>
    %865 = vector.multi_reduction <add>, %863, %cst_410 [0] : vector<8x128xf32> to vector<128xf32>
    %866 = vector.shape_cast %865 : vector<128xf32> to vector<1x128xf32>
    %867 = vector.broadcast %864 : f32 to vector<1x128xf32>
    %868 = arith.mulf %867, %866 : vector<1x128xf32>
    %869 = arith.addf %824, %868 : vector<1x128xf32>
    %870 = arith.addf %825, %837 : f32
    %871 = arith.subf %710, %755 : f32
    %872 = math.absf %871 : f32
    %cst_411 = arith.constant 0.000000e+00 : f32
    %873 = arith.addf %cst_411, %872 : f32
    %874 = arith.subf %716, %761 : f32
    %875 = math.absf %874 : f32
    %876 = arith.addf %873, %875 : f32
    %877 = arith.mulf %702, %747 : f32
    %cst_412 = arith.constant 5.000000e+00 : f32
    %878 = arith.subf %cst_412, %876 : f32
    %cst_413 = arith.constant 0.000000e+00 : f32
    %879 = arith.maximumf %878, %cst_413 : f32
    %880 = arith.mulf %877, %879 : f32
    %cst_414 = arith.constant 0.000000e+00 : f32
    %881 = arith.addf %cst_414, %880 : f32
    %cst_415 = arith.constant 0.000000e+00 : f32
    %882 = arith.addf %cst_415, %877 : f32
    %883 = arith.subf %710, %800 : f32
    %884 = math.absf %883 : f32
    %cst_416 = arith.constant 0.000000e+00 : f32
    %885 = arith.addf %cst_416, %884 : f32
    %886 = arith.subf %716, %806 : f32
    %887 = math.absf %886 : f32
    %888 = arith.addf %885, %887 : f32
    %889 = arith.mulf %702, %792 : f32
    %cst_417 = arith.constant 5.000000e+00 : f32
    %890 = arith.subf %cst_417, %888 : f32
    %cst_418 = arith.constant 0.000000e+00 : f32
    %891 = arith.maximumf %890, %cst_418 : f32
    %892 = arith.mulf %889, %891 : f32
    %893 = arith.addf %881, %892 : f32
    %894 = arith.addf %882, %889 : f32
    %895 = arith.subf %710, %845 : f32
    %896 = math.absf %895 : f32
    %cst_419 = arith.constant 0.000000e+00 : f32
    %897 = arith.addf %cst_419, %896 : f32
    %898 = arith.subf %716, %851 : f32
    %899 = math.absf %898 : f32
    %900 = arith.addf %897, %899 : f32
    %901 = arith.mulf %702, %837 : f32
    %cst_420 = arith.constant 5.000000e+00 : f32
    %902 = arith.subf %cst_420, %900 : f32
    %cst_421 = arith.constant 0.000000e+00 : f32
    %903 = arith.maximumf %902, %cst_421 : f32
    %904 = arith.mulf %901, %903 : f32
    %905 = arith.addf %893, %904 : f32
    %906 = arith.addf %894, %901 : f32
    %907 = arith.subf %755, %710 : f32
    %908 = math.absf %907 : f32
    %cst_422 = arith.constant 0.000000e+00 : f32
    %909 = arith.addf %cst_422, %908 : f32
    %910 = arith.subf %761, %716 : f32
    %911 = math.absf %910 : f32
    %912 = arith.addf %909, %911 : f32
    %913 = arith.mulf %747, %702 : f32
    %cst_423 = arith.constant 5.000000e+00 : f32
    %914 = arith.subf %cst_423, %912 : f32
    %cst_424 = arith.constant 0.000000e+00 : f32
    %915 = arith.maximumf %914, %cst_424 : f32
    %916 = arith.mulf %913, %915 : f32
    %917 = arith.addf %905, %916 : f32
    %918 = arith.addf %906, %913 : f32
    %919 = arith.subf %755, %800 : f32
    %920 = math.absf %919 : f32
    %cst_425 = arith.constant 0.000000e+00 : f32
    %921 = arith.addf %cst_425, %920 : f32
    %922 = arith.subf %761, %806 : f32
    %923 = math.absf %922 : f32
    %924 = arith.addf %921, %923 : f32
    %925 = arith.mulf %747, %792 : f32
    %cst_426 = arith.constant 5.000000e+00 : f32
    %926 = arith.subf %cst_426, %924 : f32
    %cst_427 = arith.constant 0.000000e+00 : f32
    %927 = arith.maximumf %926, %cst_427 : f32
    %928 = arith.mulf %925, %927 : f32
    %929 = arith.addf %917, %928 : f32
    %930 = arith.addf %918, %925 : f32
    %931 = arith.subf %755, %845 : f32
    %932 = math.absf %931 : f32
    %cst_428 = arith.constant 0.000000e+00 : f32
    %933 = arith.addf %cst_428, %932 : f32
    %934 = arith.subf %761, %851 : f32
    %935 = math.absf %934 : f32
    %936 = arith.addf %933, %935 : f32
    %937 = arith.mulf %747, %837 : f32
    %cst_429 = arith.constant 5.000000e+00 : f32
    %938 = arith.subf %cst_429, %936 : f32
    %cst_430 = arith.constant 0.000000e+00 : f32
    %939 = arith.maximumf %938, %cst_430 : f32
    %940 = arith.mulf %937, %939 : f32
    %941 = arith.addf %929, %940 : f32
    %942 = arith.addf %930, %937 : f32
    %943 = arith.subf %800, %710 : f32
    %944 = math.absf %943 : f32
    %cst_431 = arith.constant 0.000000e+00 : f32
    %945 = arith.addf %cst_431, %944 : f32
    %946 = arith.subf %806, %716 : f32
    %947 = math.absf %946 : f32
    %948 = arith.addf %945, %947 : f32
    %949 = arith.mulf %792, %702 : f32
    %cst_432 = arith.constant 5.000000e+00 : f32
    %950 = arith.subf %cst_432, %948 : f32
    %cst_433 = arith.constant 0.000000e+00 : f32
    %951 = arith.maximumf %950, %cst_433 : f32
    %952 = arith.mulf %949, %951 : f32
    %953 = arith.addf %941, %952 : f32
    %954 = arith.addf %942, %949 : f32
    %955 = arith.subf %800, %755 : f32
    %956 = math.absf %955 : f32
    %cst_434 = arith.constant 0.000000e+00 : f32
    %957 = arith.addf %cst_434, %956 : f32
    %958 = arith.subf %806, %761 : f32
    %959 = math.absf %958 : f32
    %960 = arith.addf %957, %959 : f32
    %961 = arith.mulf %792, %747 : f32
    %cst_435 = arith.constant 5.000000e+00 : f32
    %962 = arith.subf %cst_435, %960 : f32
    %cst_436 = arith.constant 0.000000e+00 : f32
    %963 = arith.maximumf %962, %cst_436 : f32
    %964 = arith.mulf %961, %963 : f32
    %965 = arith.addf %953, %964 : f32
    %966 = arith.addf %954, %961 : f32
    %967 = arith.subf %800, %845 : f32
    %968 = math.absf %967 : f32
    %cst_437 = arith.constant 0.000000e+00 : f32
    %969 = arith.addf %cst_437, %968 : f32
    %970 = arith.subf %806, %851 : f32
    %971 = math.absf %970 : f32
    %972 = arith.addf %969, %971 : f32
    %973 = arith.mulf %792, %837 : f32
    %cst_438 = arith.constant 5.000000e+00 : f32
    %974 = arith.subf %cst_438, %972 : f32
    %cst_439 = arith.constant 0.000000e+00 : f32
    %975 = arith.maximumf %974, %cst_439 : f32
    %976 = arith.mulf %973, %975 : f32
    %977 = arith.addf %965, %976 : f32
    %978 = arith.addf %966, %973 : f32
    %979 = arith.subf %845, %710 : f32
    %980 = math.absf %979 : f32
    %cst_440 = arith.constant 0.000000e+00 : f32
    %981 = arith.addf %cst_440, %980 : f32
    %982 = arith.subf %851, %716 : f32
    %983 = math.absf %982 : f32
    %984 = arith.addf %981, %983 : f32
    %985 = arith.mulf %837, %702 : f32
    %cst_441 = arith.constant 5.000000e+00 : f32
    %986 = arith.subf %cst_441, %984 : f32
    %cst_442 = arith.constant 0.000000e+00 : f32
    %987 = arith.maximumf %986, %cst_442 : f32
    %988 = arith.mulf %985, %987 : f32
    %989 = arith.addf %977, %988 : f32
    %990 = arith.addf %978, %985 : f32
    %991 = arith.subf %845, %755 : f32
    %992 = math.absf %991 : f32
    %cst_443 = arith.constant 0.000000e+00 : f32
    %993 = arith.addf %cst_443, %992 : f32
    %994 = arith.subf %851, %761 : f32
    %995 = math.absf %994 : f32
    %996 = arith.addf %993, %995 : f32
    %997 = arith.mulf %837, %747 : f32
    %cst_444 = arith.constant 5.000000e+00 : f32
    %998 = arith.subf %cst_444, %996 : f32
    %cst_445 = arith.constant 0.000000e+00 : f32
    %999 = arith.maximumf %998, %cst_445 : f32
    %1000 = arith.mulf %997, %999 : f32
    %1001 = arith.addf %989, %1000 : f32
    %1002 = arith.addf %990, %997 : f32
    %1003 = arith.subf %845, %800 : f32
    %1004 = math.absf %1003 : f32
    %cst_446 = arith.constant 0.000000e+00 : f32
    %1005 = arith.addf %cst_446, %1004 : f32
    %1006 = arith.subf %851, %806 : f32
    %1007 = math.absf %1006 : f32
    %1008 = arith.addf %1005, %1007 : f32
    %1009 = arith.mulf %837, %792 : f32
    %cst_447 = arith.constant 5.000000e+00 : f32
    %1010 = arith.subf %cst_447, %1008 : f32
    %cst_448 = arith.constant 0.000000e+00 : f32
    %1011 = arith.maximumf %1010, %cst_448 : f32
    %1012 = arith.mulf %1009, %1011 : f32
    %1013 = arith.addf %1001, %1012 : f32
    %1014 = arith.addf %1002, %1009 : f32
    %1015 = vector.broadcast %870 : f32 to vector<1x128xf32>
    %1016 = arith.mulf %1015, %4 : vector<1x128xf32>
    %1017 = vector.broadcast %1013 : f32 to vector<1x128xf32>
    %1018 = arith.mulf %1017, %4 : vector<1x128xf32>
    %1019 = vector.broadcast %1014 : f32 to vector<1x128xf32>
    %1020 = arith.mulf %1019, %4 : vector<1x128xf32>
    %1021 = tpu.concatenate %73, %76, %78, %80, %139, %172, %411, %558, %560, %562, %623, %626, %628, %630, %869, %1016 in 0 : vector<1x128xf32>, vector<1x128xf32>, vector<1x128xf32>, vector<1x128xf32>, vector<1x128xf32>, vector<1x128xf32>, vector<1x128xf32>, vector<1x128xf32>, vector<1x128xf32>, vector<1x128xf32>, vector<1x128xf32>, vector<1x128xf32>, vector<1x128xf32>, vector<1x128xf32>, vector<1x128xf32>, vector<1x128xf32> -> vector<16x128xf32>
    %1022 = tpu.concatenate %1018, %1020 in 0 : vector<1x128xf32>, vector<1x128xf32> -> vector<2x128xf32>
    %1023 = tpu.concatenate %1021, %1022 in 0 : vector<16x128xf32>, vector<2x128xf32> -> vector<18x128xf32>
    %c0_449 = arith.constant 0 : index
    %c0_450 = arith.constant 0 : index
    %c0_451 = arith.constant 0 : index
    %1024 = vector.load %arg11[%c0_449, %c0_450, %c0_451] : memref<1x18x128xf32, #tpu.memory_space<vmem>>, vector<1x18x128xf32>
    %1025 = vector.shape_cast %1024 : vector<1x18x128xf32> to vector<18x128xf32>
    %1026 = vector.shape_cast %1023 : vector<18x128xf32> to vector<1x18x128xf32>
    tpu.vector_store %arg11[%c0_449, %c0_450, %c0_451], %1026 {strides = array<i32>} : memref<1x18x128xf32, #tpu.memory_space<vmem>>, vector<1x18x128xf32>,
    return
  }
  func.func @transform_0(%arg0: i32) -> (i32, i32) {
    %c0_i32 = arith.constant 0 : i32
    %c0_i32_0 = arith.constant 0 : i32
    %c0_i32_1 = arith.constant 0 : i32
    return %c0_i32, %c0_i32_0 : i32, i32
  }
  func.func @transform_1(%arg0: i32) -> i32 {
    %c0_i32 = arith.constant 0 : i32
    %c0_i32_0 = arith.constant 0 : i32
    return %c0_i32 : i32
  }
  func.func @transform_2(%arg0: i32) -> (i32, i32, i32, i32) {
    %c0_i32 = arith.constant 0 : i32
    %c0_i32_0 = arith.constant 0 : i32
    %c0_i32_1 = arith.constant 0 : i32
    %c0_i32_2 = arith.constant 0 : i32
    return %arg0, %c0_i32, %c0_i32_0, %c0_i32_1 : i32, i32, i32, i32
  }
  func.func @transform_3(%arg0: i32) -> (i32, i32, i32) {
    %c0_i32 = arith.constant 0 : i32
    %c0_i32_0 = arith.constant 0 : i32
    %c0_i32_1 = arith.constant 0 : i32
    return %arg0, %c0_i32, %c0_i32_0 : i32, i32, i32
  }
  func.func @transform_4(%arg0: i32) -> (i32, i32, i32) {
    %c0_i32 = arith.constant 0 : i32
    %c0_i32_0 = arith.constant 0 : i32
    %c0_i32_1 = arith.constant 0 : i32
    return %arg0, %c0_i32, %c0_i32_0 : i32, i32, i32
  }
  func.func @transform_5(%arg0: i32) -> (i32, i32, i32) {
    %c0_i32 = arith.constant 0 : i32
    %c0_i32_0 = arith.constant 0 : i32
    %c0_i32_1 = arith.constant 0 : i32
    return %arg0, %c0_i32, %c0_i32_0 : i32, i32, i32
  }
  func.func @transform_6(%arg0: i32) -> (i32, i32, i32) {
    %c0_i32 = arith.constant 0 : i32
    %c0_i32_0 = arith.constant 0 : i32
    %c0_i32_1 = arith.constant 0 : i32
    return %arg0, %c0_i32, %c0_i32_0 : i32, i32, i32
  }
  func.func @transform_7(%arg0: i32) -> (i32, i32, i32) {
    %c0_i32 = arith.constant 0 : i32
    %c0_i32_0 = arith.constant 0 : i32
    %c0_i32_1 = arith.constant 0 : i32
    return %arg0, %c0_i32, %c0_i32_0 : i32, i32, i32
  }
  func.func @transform_8(%arg0: i32) -> (i32, i32, i32) {
    %c0_i32 = arith.constant 0 : i32
    %c0_i32_0 = arith.constant 0 : i32
    %c0_i32_1 = arith.constant 0 : i32
    return %arg0, %c0_i32, %c0_i32_0 : i32, i32, i32
  }
  func.func @transform_9(%arg0: i32) -> (i32, i32, i32) {
    %c0_i32 = arith.constant 0 : i32
    %c0_i32_0 = arith.constant 0 : i32
    %c0_i32_1 = arith.constant 0 : i32
    return %arg0, %c0_i32, %c0_i32_0 : i32, i32, i32
  }
  func.func @transform_10(%arg0: i32) -> (i32, i32, i32) {
    %c0_i32 = arith.constant 0 : i32
    %c0_i32_0 = arith.constant 0 : i32
    %c0_i32_1 = arith.constant 0 : i32
    return %arg0, %c0_i32, %c0_i32_0 : i32, i32, i32
  }
}

</mosaic_0001>

<llo_original>
// kernel: tpu_custom_call.1
$region0: #{tpu_custom_call.1}
  #allocation0 [shape = 'u32[]', space=smem, size = 0x4, offset = 0x4, fixed_abs, tag = 'smem constant byte address 0x4 - core index']
  #allocation1 [shape = 'u32[144,128]{1,0:T(1,128)}', space=vmem, size = 0x12000, scoped, tag = 'internal scratch']
  %s0 = inlined_call_operand.vmem [shape: f32[8,4], index: 0, kind: input, shape index: {}]
  %s1 = inlined_call_operand.vmem [shape: f32[8], index: 1, kind: input, shape index: {}]
  %s2 = inlined_call_operand.hbm [shape: f32[2,4,8,128], index: 2, kind: input, shape index: {}]
  %s3 = inlined_call_operand.vmem [shape: f32[2,8,128], index: 3, kind: input, shape index: {}]
  %s4 = inlined_call_operand.hbm [shape: f32[2,8,128], index: 4, kind: input, shape index: {}]
  %s5 = inlined_call_operand.hbm [shape: f32[2,8,128], index: 5, kind: input, shape index: {}]
  %s6 = inlined_call_operand.hbm [shape: f32[2,8,128], index: 6, kind: input, shape index: {}]
  %s7 = inlined_call_operand.hbm [shape: f32[2,8,128], index: 7, kind: input, shape index: {}]
  %s8 = inlined_call_operand.hbm [shape: f32[2,8,128], index: 8, kind: input, shape index: {}]
  %s9 = inlined_call_operand.hbm [shape: f32[2,8,128], index: 9, kind: output, shape index: {0}]
  %s10 = inlined_call_operand.vmem [shape: f32[2,18,128], index: 10, kind: output, shape index: {1}]
  %11 = xla_tuple %s9, %s10
  %s12 = sld [smem:[#allocation0]]
  $region109: #{tpu_custom_call.1} parent=0
    _
  %s14 = ssub.s32 1, %s12
  %s15 = scalar_select 0, %s14, %s12
  $region1: #{tpu_custom_call.1} parent=0
    #allocation2 [shape = 'u8[4096]{0}', space=smem, size = 0x1000, scoped, tag = 'input window, operand 0, single buffered']
    #allocation3 [shape = 's32[2]{0}', space=sflag, size = 0x8, scoped, tag = 'scoped memory for tpu_custom_call.1']
    #allocation4 [shape = 's32[2]{0}', space=sflag, size = 0x8, scoped, tag = 'scoped memory for tpu_custom_call.1']
    #allocation5 [shape = 's32[2]{0}', space=sflag, size = 0x8, scoped, tag = 'scoped memory for tpu_custom_call.1']
    #allocation6 [shape = 'u8[512]{0}', space=smem, size = 0x200, scoped, tag = 'input window, operand 1, single buffered']
    #allocation7 [shape = 's32[1]{0}', space=sflag, size = 0x4, scoped, tag = 'scoped memory for tpu_custom_call.1']
    #allocation8 [shape = 'u8[32768]{0}', space=vmem, size = 0x8000, scoped, tag = 'input window, operand 2']
    #allocation9 [shape = 'u8[8192]{0}', space=vmem, size = 0x2000, scoped, tag = 'input window, operand 4']
    #allocation10 [shape = 's32[2]{0}', space=sflag, size = 0x8, scoped, tag = 'scoped memory for tpu_custom_call.1']
    #allocation11 [shape = 'u8[8192]{0}', space=vmem, size = 0x2000, scoped, tag = 'input window, operand 5']
    #allocation12 [shape = 'u8[8192]{0}', space=vmem, size = 0x2000, scoped, tag = 'input window, operand 6']
    #allocation13 [shape = 's32[2]{0}', space=sflag, size = 0x8, scoped, tag = 'scoped memory for tpu_custom_call.1']
    #allocation14 [shape = 'u8[8192]{0}', space=vmem, size = 0x2000, scoped, tag = 'input window, operand 7']
    #allocation15 [shape = 'u8[8192]{0}', space=vmem, size = 0x2000, scoped, tag = 'input window, operand 8']
    #allocation16 [shape = 's32[2]{0}', space=sflag, size = 0x8, scoped, tag = 'scoped memory for tpu_custom_call.1']
    #allocation17 [shape = 'u8[8192]{0}', space=vmem, size = 0x2000, scoped, tag = 'output window, operand 0']
    %16 = vsyncpa [#allocation5], 0
    %17 = vsyncpa [#allocation7], 0
    %18 = vsyncpa [#allocation3], 0
    %s19 = scalar_lea.sflag [#allocation3], 1
    %20 = vsyncpa %s19, 0
    %21 = vsyncpa [#allocation10], 0
    %s22 = scalar_lea.sflag [#allocation10], 1
    %23 = vsyncpa %s22, 0
    %24 = vsyncpa [#allocation13], 0
    %s25 = scalar_lea.sflag [#allocation13], 1
    %26 = vsyncpa %s25, 0
    %27 = vsyncpa [#allocation16], 0
    %s28 = scalar_lea.sflag [#allocation16], 1
    %29 = vsyncpa %s28, 0
    %30 = vsyncpa [#allocation4], 0
    %s31 = scalar_lea.sflag [#allocation4], 1
    %32 = vsyncpa %s31, 0
    loop: start=0, step=1, limit=4
    $region2: #{tpu_custom_call.1} parent=1 // loop_pre_header
      _
    $region3: #{tpu_custom_call.1} parent=1 // loop_header
      %s34 = sphi 0, %s38
      %p35 = scmp.ge.s32.totalorder %s34, 4
      %s42 = sphi 0, %s42
      %s44 = sphi 0, %s42
      %s45 = sphi 0, %s44
      %s59 = sphi 0, %s45
      %s63 = sphi 0, %s63
      %s65 = sphi 0, %s63
      %s66 = sphi 0, %s65
      %s80 = sphi 0, %s66
      %s86 = sphi 0, %s88
      %s89 = sphi 0, %s86
      %s90 = sphi 0, %s89
      %s106 = sphi 0, %s90
      %s112 = sphi 0, %s114
      %s115 = sphi 0, %s112
      %s116 = sphi 0, %s115
      %s132 = sphi 0, %s116
      %s138 = sphi 0, %s140
      %s141 = sphi 0, %s138
      %s142 = sphi 0, %s141
      %s158 = sphi 0, %s142
      %s164 = sphi 0, %s166
      %s167 = sphi 0, %s164
      %s168 = sphi 0, %s167
      %s184 = sphi 0, %s168
      %s190 = sphi 0, %s192
      %s193 = sphi 0, %s190
      %s194 = sphi 0, %s193
      %s210 = sphi 0, %s194
      %s216 = sphi 0, %s218
      %s219 = sphi 0, %s216
      %s220 = sphi 0, %s219
      %s236 = sphi 0, %s220
      %s242 = sphi 0, %s244
      %s245 = sphi 0, %s242
      %s246 = sphi 0, %s245
      %s262 = sphi 0, %s246
      %s268 = sphi 0, %s270
      %s271 = sphi 0, %s268
      %s272 = sphi 0, %s271
      %s288 = sphi 0, %s272
      %s294 = sphi 0, %s296
      %s297 = sphi 0, %s294
      %s298 = sphi 0, %s297
      %s314 = sphi 0, %s298
    $region4: #{tpu_custom_call.1} parent=1 // loop_header_branch
      %37 = sbr.rel (%p35) target = $region8
    $region5: #{tpu_custom_call.1} parent=1 // loop_body
      %s39 = ssub.s32 %s34, 1
      %s40 = ssub.s32 %s34, 2
      %s41 = sadd.s32 %s34, 1
      %s43 = sadd.s32 %s42, 1
      %p46 = scmp.eq.s32.totalorder %s34, 1
      %p47 = scmp.ne.s32.totalorder %s42, %s44
      %p48 = scmp.eq.s32.totalorder %s34, 0
      %p49 = por %p47, %p48
      %p50 = scmp.ne.s32.totalorder %s42, %s44
      %p51 = scmp.eq.s32.totalorder %s39, 1
      %p52 = por %p50, %p51
      %p53 = scmp.ne.s32.totalorder %s44, %s45
      %p54 = scmp.eq.s32.totalorder %s39, 0
      %p55 = por %p53, %p54
      %p56 = scmp.ne.s32.totalorder %s44, %s45
      %p57 = scmp.eq.s32.totalorder %s40, 1
      %p58 = por %p56, %p57
      %p60 = scmp.ne.s32.totalorder %s45, %s59
      %p61 = scmp.eq.s32.totalorder %s40, 0
      %p62 = por %p60, %p61
      %s64 = sadd.s32 %s63, 1
      %p67 = scmp.eq.s32.totalorder %s34, 1
      %p68 = scmp.ne.s32.totalorder %s63, %s65
      %p69 = scmp.eq.s32.totalorder %s34, 0
      %p70 = por %p68, %p69
      %p71 = scmp.ne.s32.totalorder %s63, %s65
      %p72 = scmp.eq.s32.totalorder %s39, 1
      %p73 = por %p71, %p72
      %p74 = scmp.ne.s32.totalorder %s65, %s66
      %p75 = scmp.eq.s32.totalorder %s39, 0
      %p76 = por %p74, %p75
      %p77 = scmp.ne.s32.totalorder %s65, %s66
      %p78 = scmp.eq.s32.totalorder %s40, 1
      %p79 = por %p77, %p78
      %p81 = scmp.ne.s32.totalorder %s66, %s80
      %p82 = scmp.eq.s32.totalorder %s40, 0
      %p83 = por %p81, %p82
      %s84 = ssub.s32 %s34, %s41
      %p85 = scmp.eq.s32.totalorder %s84, 0
      %s87 = sadd.s32 %s86, 1
      %s88 = scalar_select %p85, %s86, %s87
      %p91 = pneg %p85
      %p92 = scmp.eq.s32.totalorder %s34, 1
      %p93 = por %p91, %p92
      %p94 = scmp.ne.s32.totalorder %s86, %s89
      %p95 = scmp.eq.s32.totalorder %s34, 0
      %p96 = por %p94, %p95
      %p97 = scmp.ne.s32.totalorder %s86, %s89
      %p98 = scmp.eq.s32.totalorder %s39, 1
      %p99 = por %p97, %p98
      %p100 = scmp.ne.s32.totalorder %s89, %s90
      %p101 = scmp.eq.s32.totalorder %s39, 0
      %p102 = por %p100, %p101
      %p103 = scmp.ne.s32.totalorder %s89, %s90
      %p104 = scmp.eq.s32.totalorder %s40, 1
      %p105 = por %p103, %p104
      %p107 = scmp.ne.s32.totalorder %s90, %s106
      %p108 = scmp.eq.s32.totalorder %s40, 0
      %p109 = por %p107, %p108
      %s110 = ssub.s32 %s34, %s41
      %p111 = scmp.eq.s32.totalorder %s110, 0
      %s113 = sadd.s32 %s112, 1
      %s114 = scalar_select %p111, %s112, %s113
      %p117 = pneg %p111
      %p118 = scmp.eq.s32.totalorder %s34, 1
      %p119 = por %p117, %p118
      %p120 = scmp.ne.s32.totalorder %s112, %s115
      %p121 = scmp.eq.s32.totalorder %s34, 0
      %p122 = por %p120, %p121
      %p123 = scmp.ne.s32.totalorder %s112, %s115
      %p124 = scmp.eq.s32.totalorder %s39, 1
      %p125 = por %p123, %p124
      %p126 = scmp.ne.s32.totalorder %s115, %s116
      %p127 = scmp.eq.s32.totalorder %s39, 0
      %p128 = por %p126, %p127
      %p129 = scmp.ne.s32.totalorder %s115, %s116
      %p130 = scmp.eq.s32.totalorder %s40, 1
      %p131 = por %p129, %p130
      %p133 = scmp.ne.s32.totalorder %s116, %s132
      %p134 = scmp.eq.s32.totalorder %s40, 0
      %p135 = por %p133, %p134
      %s136 = ssub.s32 %s34, %s41
      %p137 = scmp.eq.s32.totalorder %s136, 0
      %s139 = sadd.s32 %s138, 1
      %s140 = scalar_select %p137, %s138, %s139
      %p143 = pneg %p137
      %p144 = scmp.eq.s32.totalorder %s34, 1
      %p145 = por %p143, %p144
      %p146 = scmp.ne.s32.totalorder %s138, %s141
      %p147 = scmp.eq.s32.totalorder %s34, 0
      %p148 = por %p146, %p147
      %p149 = scmp.ne.s32.totalorder %s138, %s141
      %p150 = scmp.eq.s32.totalorder %s39, 1
      %p151 = por %p149, %p150
      %p152 = scmp.ne.s32.totalorder %s141, %s142
      %p153 = scmp.eq.s32.totalorder %s39, 0
      %p154 = por %p152, %p153
      %p155 = scmp.ne.s32.totalorder %s141, %s142
      %p156 = scmp.eq.s32.totalorder %s40, 1
      %p157 = por %p155, %p156
      %p159 = scmp.ne.s32.totalorder %s142, %s158
      %p160 = scmp.eq.s32.totalorder %s40, 0
      %p161 = por %p159, %p160
      %s162 = ssub.s32 %s34, %s41
      %p163 = scmp.eq.s32.totalorder %s162, 0
      %s165 = sadd.s32 %s164, 1
      %s166 = scalar_select %p163, %s164, %s165
      %p169 = pneg %p163
      %p170 = scmp.eq.s32.totalorder %s34, 1
      %p171 = por %p169, %p170
      %p172 = scmp.ne.s32.totalorder %s164, %s167
      %p173 = scmp.eq.s32.totalorder %s34, 0
      %p174 = por %p172, %p173
      %p175 = scmp.ne.s32.totalorder %s164, %s167
      %p176 = scmp.eq.s32.totalorder %s39, 1
      %p177 = por %p175, %p176
      %p178 = scmp.ne.s32.totalorder %s167, %s168
      %p179 = scmp.eq.s32.totalorder %s39, 0
      %p180 = por %p178, %p179
      %p181 = scmp.ne.s32.totalorder %s167, %s168
      %p182 = scmp.eq.s32.totalorder %s40, 1
      %p183 = por %p181, %p182
      %p185 = scmp.ne.s32.totalorder %s168, %s184
      %p186 = scmp.eq.s32.totalorder %s40, 0
      %p187 = por %p185, %p186
      %s188 = ssub.s32 %s34, %s41
      %p189 = scmp.eq.s32.totalorder %s188, 0
      %s191 = sadd.s32 %s190, 1
      %s192 = scalar_select %p189, %s190, %s191
      %p195 = pneg %p189
      %p196 = scmp.eq.s32.totalorder %s34, 1
      %p197 = por %p195, %p196
      %p198 = scmp.ne.s32.totalorder %s190, %s193
      %p199 = scmp.eq.s32.totalorder %s34, 0
      %p200 = por %p198, %p199
      %p201 = scmp.ne.s32.totalorder %s190, %s193
      %p202 = scmp.eq.s32.totalorder %s39, 1
      %p203 = por %p201, %p202
      %p204 = scmp.ne.s32.totalorder %s193, %s194
      %p205 = scmp.eq.s32.totalorder %s39, 0
      %p206 = por %p204, %p205
      %p207 = scmp.ne.s32.totalorder %s193, %s194
      %p208 = scmp.eq.s32.totalorder %s40, 1
      %p209 = por %p207, %p208
      %p211 = scmp.ne.s32.totalorder %s194, %s210
      %p212 = scmp.eq.s32.totalorder %s40, 0
      %p213 = por %p211, %p212
      %s214 = ssub.s32 %s34, %s41
      %p215 = scmp.eq.s32.totalorder %s214, 0
      %s217 = sadd.s32 %s216, 1
      %s218 = scalar_select %p215, %s216, %s217
      %p221 = pneg %p215
      %p222 = scmp.eq.s32.totalorder %s34, 1
      %p223 = por %p221, %p222
      %p224 = scmp.ne.s32.totalorder %s216, %s219
      %p225 = scmp.eq.s32.totalorder %s34, 0
      %p226 = por %p224, %p225
      %p227 = scmp.ne.s32.totalorder %s216, %s219
      %p228 = scmp.eq.s32.totalorder %s39, 1
      %p229 = por %p227, %p228
      %p230 = scmp.ne.s32.totalorder %s219, %s220
      %p231 = scmp.eq.s32.totalorder %s39, 0
      %p232 = por %p230, %p231
      %p233 = scmp.ne.s32.totalorder %s219, %s220
      %p234 = scmp.eq.s32.totalorder %s40, 1
      %p235 = por %p233, %p234
      %p237 = scmp.ne.s32.totalorder %s220, %s236
      %p238 = scmp.eq.s32.totalorder %s40, 0
      %p239 = por %p237, %p238
      %s240 = ssub.s32 %s34, %s41
      %p241 = scmp.eq.s32.totalorder %s240, 0
      %s243 = sadd.s32 %s242, 1
      %s244 = scalar_select %p241, %s242, %s243
      %p247 = pneg %p241
      %p248 = scmp.eq.s32.totalorder %s34, 1
      %p249 = por %p247, %p248
      %p250 = scmp.ne.s32.totalorder %s242, %s245
      %p251 = scmp.eq.s32.totalorder %s34, 0
      %p252 = por %p250, %p251
      %p253 = scmp.ne.s32.totalorder %s242, %s245
      %p254 = scmp.eq.s32.totalorder %s39, 1
      %p255 = por %p253, %p254
      %p256 = scmp.ne.s32.totalorder %s245, %s246
      %p257 = scmp.eq.s32.totalorder %s39, 0
      %p258 = por %p256, %p257
      %p259 = scmp.ne.s32.totalorder %s245, %s246
      %p260 = scmp.eq.s32.totalorder %s40, 1
      %p261 = por %p259, %p260
      %p263 = scmp.ne.s32.totalorder %s246, %s262
      %p264 = scmp.eq.s32.totalorder %s40, 0
      %p265 = por %p263, %p264
      %s266 = ssub.s32 %s34, %s41
      %p267 = scmp.eq.s32.totalorder %s266, 0
      %s269 = sadd.s32 %s268, 1
      %s270 = scalar_select %p267, %s268, %s269
      %p273 = pneg %p267
      %p274 = scmp.eq.s32.totalorder %s34, 1
      %p275 = por %p273, %p274
      %p276 = scmp.ne.s32.totalorder %s268, %s271
      %p277 = scmp.eq.s32.totalorder %s34, 0
      %p278 = por %p276, %p277
      %p279 = scmp.ne.s32.totalorder %s268, %s271
      %p280 = scmp.eq.s32.totalorder %s39, 1
      %p281 = por %p279, %p280
      %p282 = scmp.ne.s32.totalorder %s271, %s272
      %p283 = scmp.eq.s32.totalorder %s39, 0
      %p284 = por %p282, %p283
      %p285 = scmp.ne.s32.totalorder %s271, %s272
      %p286 = scmp.eq.s32.totalorder %s40, 1
      %p287 = por %p285, %p286
      %p289 = scmp.ne.s32.totalorder %s272, %s288
      %p290 = scmp.eq.s32.totalorder %s40, 0
      %p291 = por %p289, %p290
      %s292 = ssub.s32 %s34, %s41
      %p293 = scmp.eq.s32.totalorder %s292, 0
      %s295 = sadd.s32 %s294, 1
      %s296 = scalar_select %p293, %s294, %s295
      %p299 = pneg %p293
      %p300 = scmp.eq.s32.totalorder %s34, 1
      %p301 = por %p299, %p300
      %p302 = scmp.ne.s32.totalorder %s294, %s297
      %p303 = scmp.eq.s32.totalorder %s34, 0
      %p304 = por %p302, %p303
      %p305 = scmp.ne.s32.totalorder %s294, %s297
      %p306 = scmp.eq.s32.totalorder %s39, 1
      %p307 = por %p305, %p306
      %p308 = scmp.ne.s32.totalorder %s297, %s298
      %p309 = scmp.eq.s32.totalorder %s39, 0
      %p310 = por %p308, %p309
      %p311 = scmp.ne.s32.totalorder %s297, %s298
      %p312 = scmp.eq.s32.totalorder %s40, 1
      %p313 = por %p311, %p312
      %p315 = scmp.ne.s32.totalorder %s298, %s314
      %p316 = scmp.eq.s32.totalorder %s40, 0
      %p317 = por %p315, %p316
      %p318 = scmp.le.s32.totalorder 1, %s34
      %p319 = scmp.lt.s32.totalorder %s34, 3
      %p320 = pnand %p318, %p319
      %p321 = pneg %p320
      // Predicated region
      $region9: #{tpu_custom_call.1} parent=5 // pred_check
        _
      $region10: #{tpu_custom_call.1} parent=5 // pred_check_branch
        %323 = sbr.rel (%p320) target = $region12
      $region11: #{tpu_custom_call.1} parent=5 // pred_region
        %s324 = ssub.s32 %s34, 1
        // Predicated region
        $region13: #{tpu_custom_call.1} parent=11 // pred_check
          %p325 = pneg %p55
        $region14: #{tpu_custom_call.1} parent=11 // pred_check_branch
          %327 = sbr.rel (%p325) target = $region16
        $region15: #{tpu_custom_call.1} parent=11 // pred_region
          %s329 = ssub.s32 128, 128
          %330 = vsyncadd [#allocation5], %s329
          %s332 = sshll.u32 %s0, 4
          %s333 = int_to_ptr.vmem [resolvable:$true] %s332
          %335 = dma.vmem_to_smem %s333, 128, [#allocation2], [#allocation5]
        $region16: #{tpu_custom_call.1} parent=11 // pred_fallthru
          _
        // Predicated region
        $region17: #{tpu_custom_call.1} parent=11 // pred_check
          %p336 = pneg %p76
        $region18: #{tpu_custom_call.1} parent=11 // pred_check_branch
          %338 = sbr.rel (%p336) target = $region20
        $region19: #{tpu_custom_call.1} parent=11 // pred_region
          %s340 = ssub.s32 16, 16
          %341 = vsyncadd [#allocation7], %s340
          %s343 = sshll.u32 %s1, 4
          %s344 = int_to_ptr.vmem [resolvable:$true] %s343
          %346 = dma.vmem_to_smem %s344, 16, [#allocation6], [#allocation7]
        $region20: #{tpu_custom_call.1} parent=11 // pred_fallthru
          _
      $region12: #{tpu_custom_call.1} parent=5 // pred_fallthru
        _
      %p347 = scmp.lt.s32.totalorder %s34, 2
      // Predicated region
      $region21: #{tpu_custom_call.1} parent=5 // pred_check
        %p348 = pneg %p347
      $region22: #{tpu_custom_call.1} parent=5 // pred_check_branch
        %350 = sbr.rel (%p348) target = $region24
      $region23: #{tpu_custom_call.1} parent=5 // pred_region
        // Predicated region
        $region25: #{tpu_custom_call.1} parent=23 // pred_check
          %p351 = pneg %p96
        $region26: #{tpu_custom_call.1} parent=23 // pred_check_branch
          %353 = sbr.rel (%p351) target = $region28
        $region27: #{tpu_custom_call.1} parent=23 // pred_region
          %s354 = sand.u32 %s86, 1
          %s355 = scalar_lea.sflag [#allocation3], %s354
          %s356 = sand.u32 %s86, 1
          %s357 = smul.addr %s356, 32
          %s358 = scalar_lea.vmem [#allocation8], %s357
          %s360 = ssub.s32 512, 512
          %361 = vsyncadd %s355, %s360
          %s362 = smul.addr %s34, 4
          %s363 = smul.addr %s362, 128
          %s364 = scalar_lea.hbm %s2, %s363
          %s365 = sshll.u32 %s358, 4
          %s366 = int_to_ptr.vmem [resolvable:$true] %s365
          %371 = dma.hbm_to_vmem [thread:$0]  %s364, 512, %s366, %s355, 128, 128, 8
        $region28: #{tpu_custom_call.1} parent=23 // pred_fallthru
          _
        // Predicated region
        $region29: #{tpu_custom_call.1} parent=23 // pred_check
          %p372 = pneg %p122
        $region30: #{tpu_custom_call.1} parent=23 // pred_check_branch
          %374 = sbr.rel (%p372) target = $region32
        $region31: #{tpu_custom_call.1} parent=23 // pred_region
          %p375 = scmp.lt.s32.totalorder %s34, 1
          %s376 = scalar_select %p375, %s34, 1
          %s377 = smul.addr %s376, 8
          %s378 = scalar_lea.vmem %s3, %s377
        $region32: #{tpu_custom_call.1} parent=23 // pred_fallthru
          _
        // Predicated region
        $region33: #{tpu_custom_call.1} parent=23 // pred_check
          %p379 = pneg %p148
        $region34: #{tpu_custom_call.1} parent=23 // pred_check_branch
          %381 = sbr.rel (%p379) target = $region36
        $region35: #{tpu_custom_call.1} parent=23 // pred_region
          %s382 = sand.u32 %s34, 1
          %s383 = scalar_lea.sflag [#allocation10], %s382
          %s384 = sand.u32 %s138, 1
          %s385 = smul.addr %s384, 8
          %s386 = scalar_lea.vmem [#allocation9], %s385
          %s388 = ssub.s32 128, 128
          %389 = vsyncadd %s383, %s388
          %s390 = smul.addr %s34, 128
          %s391 = scalar_lea.hbm %s4, %s390
          %s393 = sshll.u32 %s386, 4
          %s394 = int_to_ptr.vmem [resolvable:$true] %s393
          %396 = dma.hbm_to_vmem [thread:$0]  %s391, 128, %s394, %s383
        $region36: #{tpu_custom_call.1} parent=23 // pred_fallthru
          _
        // Predicated region
        $region37: #{tpu_custom_call.1} parent=23 // pred_check
          %p397 = pneg %p174
        $region38: #{tpu_custom_call.1} parent=23 // pred_check_branch
          %399 = sbr.rel (%p397) target = $region40
        $region39: #{tpu_custom_call.1} parent=23 // pred_region
          %s400 = sand.u32 %s34, 1
          %s401 = scalar_lea.sflag [#allocation10], %s400
          %s402 = sand.u32 %s164, 1
          %s403 = smul.addr %s402, 8
          %s404 = scalar_lea.vmem [#allocation11], %s403
          %s406 = ssub.s32 128, 128
          %407 = vsyncadd %s401, %s406
          %s408 = smul.addr %s34, 128
          %s409 = scalar_lea.hbm %s5, %s408
          %s411 = sshll.u32 %s404, 4
          %s412 = int_to_ptr.vmem [resolvable:$true] %s411
          %414 = dma.hbm_to_vmem [thread:$0]  %s409, 128, %s412, %s401
        $region40: #{tpu_custom_call.1} parent=23 // pred_fallthru
          _
        // Predicated region
        $region41: #{tpu_custom_call.1} parent=23 // pred_check
          %p415 = pneg %p200
        $region42: #{tpu_custom_call.1} parent=23 // pred_check_branch
          %417 = sbr.rel (%p415) target = $region44
        $region43: #{tpu_custom_call.1} parent=23 // pred_region
          %s418 = sand.u32 %s34, 1
          %s419 = scalar_lea.sflag [#allocation13], %s418
          %s420 = sand.u32 %s190, 1
          %s421 = smul.addr %s420, 8
          %s422 = scalar_lea.vmem [#allocation12], %s421
          %s424 = ssub.s32 128, 128
          %425 = vsyncadd %s419, %s424
          %s426 = smul.addr %s34, 128
          %s427 = scalar_lea.hbm %s6, %s426
          %s429 = sshll.u32 %s422, 4
          %s430 = int_to_ptr.vmem [resolvable:$true] %s429
          %432 = dma.hbm_to_vmem [thread:$0]  %s427, 128, %s430, %s419
        $region44: #{tpu_custom_call.1} parent=23 // pred_fallthru
          _
        // Predicated region
        $region45: #{tpu_custom_call.1} parent=23 // pred_check
          %p433 = pneg %p226
        $region46: #{tpu_custom_call.1} parent=23 // pred_check_branch
          %435 = sbr.rel (%p433) target = $region48
        $region47: #{tpu_custom_call.1} parent=23 // pred_region
          %s436 = sand.u32 %s34, 1
          %s437 = scalar_lea.sflag [#allocation13], %s436
          %s438 = sand.u32 %s216, 1
          %s439 = smul.addr %s438, 8
          %s440 = scalar_lea.vmem [#allocation14], %s439
          %s442 = ssub.s32 128, 128
          %443 = vsyncadd %s437, %s442
          %s444 = smul.addr %s34, 128
          %s445 = scalar_lea.hbm %s7, %s444
          %s447 = sshll.u32 %s440, 4
          %s448 = int_to_ptr.vmem [resolvable:$true] %s447
          %450 = dma.hbm_to_vmem [thread:$0]  %s445, 128, %s448, %s437
        $region48: #{tpu_custom_call.1} parent=23 // pred_fallthru
          _
        // Predicated region
        $region49: #{tpu_custom_call.1} parent=23 // pred_check
          %p451 = pneg %p252
        $region50: #{tpu_custom_call.1} parent=23 // pred_check_branch
          %453 = sbr.rel (%p451) target = $region52
        $region51: #{tpu_custom_call.1} parent=23 // pred_region
          %s454 = sand.u32 %s242, 1
          %s455 = scalar_lea.sflag [#allocation16], %s454
          %s456 = sand.u32 %s242, 1
          %s457 = smul.addr %s456, 8
          %s458 = scalar_lea.vmem [#allocation15], %s457
          %s460 = ssub.s32 128, 128
          %461 = vsyncadd %s455, %s460
          %s462 = smul.addr %s34, 128
          %s463 = scalar_lea.hbm %s8, %s462
          %s465 = sshll.u32 %s458, 4
          %s466 = int_to_ptr.vmem [resolvable:$true] %s465
          %468 = dma.hbm_to_vmem [thread:$0]  %s463, 128, %s466, %s455
        $region52: #{tpu_custom_call.1} parent=23 // pred_fallthru
          _
      $region24: #{tpu_custom_call.1} parent=5 // pred_fallthru
        _
      %p469 = scmp.le.s32.totalorder 1, %s34
      %p470 = scmp.lt.s32.totalorder %s34, 3
      %p471 = pnand %p469, %p470
      %p472 = pneg %p471
      // Predicated region
      $region53: #{tpu_custom_call.1} parent=5 // pred_check
        _
      $region54: #{tpu_custom_call.1} parent=5 // pred_check_branch
        %474 = sbr.rel (%p471) target = $region56
      $region55: #{tpu_custom_call.1} parent=5 // pred_region
        %s475 = ssub.s32 %s34, 1
        // Predicated region
        $region57: #{tpu_custom_call.1} parent=55 // pred_check
          %p476 = pneg %p55
        $region58: #{tpu_custom_call.1} parent=55 // pred_check_branch
          %478 = sbr.rel (%p476) target = $region60
        $region59: #{tpu_custom_call.1} parent=55 // pred_region
          %479 = dma.done [#allocation5], 128
        $region60: #{tpu_custom_call.1} parent=55 // pred_fallthru
          _
        // Predicated region
        $region61: #{tpu_custom_call.1} parent=55 // pred_check
          %p480 = pneg %p76
        $region62: #{tpu_custom_call.1} parent=55 // pred_check_branch
          %482 = sbr.rel (%p480) target = $region64
        $region63: #{tpu_custom_call.1} parent=55 // pred_region
          %483 = dma.done [#allocation7], 16
        $region64: #{tpu_custom_call.1} parent=55 // pred_fallthru
          _
        %s484 = sand.u32 %s89, 1
        %s485 = scalar_lea.sflag [#allocation3], %s484
        %s486 = sand.u32 %s89, 1
        %s487 = smul.addr %s486, 32
        %s488 = scalar_lea.vmem [#allocation8], %s487
        // Predicated region
        $region65: #{tpu_custom_call.1} parent=55 // pred_check
          %p489 = pneg %p102
        $region66: #{tpu_custom_call.1} parent=55 // pred_check_branch
          %491 = sbr.rel (%p489) target = $region68
        $region67: #{tpu_custom_call.1} parent=55 // pred_region
          %492 = dma.done %s485, 512
        $region68: #{tpu_custom_call.1} parent=55 // pred_fallthru
          _
        %s493 = sand.u32 %s39, 1
        %s494 = scalar_lea.sflag [#allocation10], %s493
        %s495 = sand.u32 %s141, 1
        %s496 = smul.addr %s495, 8
        %s497 = scalar_lea.vmem [#allocation9], %s496
        // Predicated region
        $region69: #{tpu_custom_call.1} parent=55 // pred_check
          %p498 = pneg %p154
        $region70: #{tpu_custom_call.1} parent=55 // pred_check_branch
          %500 = sbr.rel (%p498) target = $region72
        $region71: #{tpu_custom_call.1} parent=55 // pred_region
          %501 = dma.done %s494, 128
        $region72: #{tpu_custom_call.1} parent=55 // pred_fallthru
          _
        %s502 = sand.u32 %s39, 1
        %s503 = scalar_lea.sflag [#allocation10], %s502
        %s504 = sand.u32 %s167, 1
        %s505 = smul.addr %s504, 8
        %s506 = scalar_lea.vmem [#allocation11], %s505
        // Predicated region
        $region73: #{tpu_custom_call.1} parent=55 // pred_check
          %p507 = pneg %p180
        $region74: #{tpu_custom_call.1} parent=55 // pred_check_branch
          %509 = sbr.rel (%p507) target = $region76
        $region75: #{tpu_custom_call.1} parent=55 // pred_region
          %510 = dma.done %s503, 128
        $region76: #{tpu_custom_call.1} parent=55 // pred_fallthru
          _
        %s511 = sand.u32 %s39, 1
        %s512 = scalar_lea.sflag [#allocation13], %s511
        %s513 = sand.u32 %s193, 1
        %s514 = smul.addr %s513, 8
        %s515 = scalar_lea.vmem [#allocation12], %s514
        // Predicated region
        $region77: #{tpu_custom_call.1} parent=55 // pred_check
          %p516 = pneg %p206
        $region78: #{tpu_custom_call.1} parent=55 // pred_check_branch
          %518 = sbr.rel (%p516) target = $region80
        $region79: #{tpu_custom_call.1} parent=55 // pred_region
          %519 = dma.done %s512, 128
        $region80: #{tpu_custom_call.1} parent=55 // pred_fallthru
          _
        %s520 = sand.u32 %s39, 1
        %s521 = scalar_lea.sflag [#allocation13], %s520
        %s522 = sand.u32 %s219, 1
        %s523 = smul.addr %s522, 8
        %s524 = scalar_lea.vmem [#allocation14], %s523
        // Predicated region
        $region81: #{tpu_custom_call.1} parent=55 // pred_check
          %p525 = pneg %p232
        $region82: #{tpu_custom_call.1} parent=55 // pred_check_branch
          %527 = sbr.rel (%p525) target = $region84
        $region83: #{tpu_custom_call.1} parent=55 // pred_region
          %528 = dma.done %s521, 128
        $region84: #{tpu_custom_call.1} parent=55 // pred_fallthru
          _
        %s529 = sand.u32 %s245, 1
        %s530 = scalar_lea.sflag [#allocation16], %s529
        %s531 = sand.u32 %s245, 1
        %s532 = smul.addr %s531, 8
        %s533 = scalar_lea.vmem [#allocation15], %s532
        // Predicated region
        $region85: #{tpu_custom_call.1} parent=55 // pred_check
          %p534 = pneg %p258
        $region86: #{tpu_custom_call.1} parent=55 // pred_check_branch
          %536 = sbr.rel (%p534) target = $region88
        $region87: #{tpu_custom_call.1} parent=55 // pred_region
          %537 = dma.done %s530, 128
        $region88: #{tpu_custom_call.1} parent=55 // pred_fallthru
          _
        %538 = sfence
        %p539 = pneg %p55
        %p540 = pneg %p52
        %p541 = pneg %p76
        %p542 = pneg %p73
        %s543 = sand.u32 %s89, 1
        %s544 = scalar_lea.sflag [#allocation3], %s543
        %s545 = sand.u32 %s89, 1
        %s546 = smul.addr %s545, 32
        %s547 = scalar_lea.vmem [#allocation8], %s546
        %p548 = pneg %p102
        %p549 = pneg %p99
        %p550 = scmp.lt.s32.totalorder %s39, 1
        %s551 = scalar_select %p550, %s39, 1
        %s552 = smul.addr %s551, 8
        %s553 = scalar_lea.vmem %s3, %s552
        %p554 = pneg %p128
        %p555 = pneg %p125
        %s556 = sand.u32 %s39, 1
        %s557 = scalar_lea.sflag [#allocation10], %s556
        %s558 = sand.u32 %s141, 1
        %s559 = smul.addr %s558, 8
        %s560 = scalar_lea.vmem [#allocation9], %s559
        %p561 = pneg %p154
        %p562 = pneg %p151
        %s563 = sand.u32 %s39, 1
        %s564 = scalar_lea.sflag [#allocation10], %s563
        %s565 = sand.u32 %s167, 1
        %s566 = smul.addr %s565, 8
        %s567 = scalar_lea.vmem [#allocation11], %s566
        %p568 = pneg %p180
        %p569 = pneg %p177
        %s570 = sand.u32 %s39, 1
        %s571 = scalar_lea.sflag [#allocation13], %s570
        %s572 = sand.u32 %s193, 1
        %s573 = smul.addr %s572, 8
        %s574 = scalar_lea.vmem [#allocation12], %s573
        %p575 = pneg %p206
        %p576 = pneg %p203
        %s577 = sand.u32 %s39, 1
        %s578 = scalar_lea.sflag [#allocation13], %s577
        %s579 = sand.u32 %s219, 1
        %s580 = smul.addr %s579, 8
        %s581 = scalar_lea.vmem [#allocation14], %s580
        %p582 = pneg %p232
        %p583 = pneg %p229
        %s584 = sand.u32 %s245, 1
        %s585 = scalar_lea.sflag [#allocation16], %s584
        %s586 = sand.u32 %s245, 1
        %s587 = smul.addr %s586, 8
        %s588 = scalar_lea.vmem [#allocation15], %s587
        %p589 = pneg %p258
        %p590 = pneg %p255
        %p591 = pneg %p284
        %p592 = pneg %p281
        %s593 = sand.u32 %s271, 1
        %s594 = scalar_lea.sflag [#allocation4], %s593
        %s595 = sand.u32 %s271, 1
        %s596 = smul.addr %s595, 8
        %s597 = scalar_lea.vmem [#allocation17], %s596
        %p598 = pneg %p310
        %p599 = pneg %p307
        %p600 = scmp.lt.s32.totalorder %s39, 1
        %s601 = scalar_select %p600, %s39, 1
        %s602 = smul.addr %s601, 3
        %s603 = smul.addr %s602, 8
        %s604 = scalar_lea.vmem %s10, %s603
        %p605 = scmp.lt.s32.totalorder %s39, 1
        %s606 = scalar_select %p605, %s39, 1
        %s607 = smul.addr %s606, 8
        %s608 = scalar_lea.vmem %s3, %s607
        %p609 = scmp.lt.s32.totalorder %s39, 1
        %s610 = scalar_select %p609, %s39, 1
        %s611 = smul.addr %s610, 3
        %s612 = smul.addr %s611, 8
        %s613 = scalar_lea.vmem %s10, %s612
        %v614 = vlaneseq
        %v615 = vand.u32 %v614, 127
        %vm616 = vcmp.eq.s32.totalorder %v615, 0
        %v617 = vsel %vm616, 1, 0
        %v618 = vcvt.s32.f32 %v617
        %v619 = vlaneseq
        %v620 = vshrl.u32 %v619, 7
        %vm621 = vcmp.lt.s32.totalorder %v620, 2
        %v622 = vsel %vm621, 1, 0
        %v623 = vcvt.s32.f32 %v622
        %v624 = vld [vmem:[%s608] sm:$0xff]
        %v625 = vld [vmem:[%s488] sm:$0xff]
        %s626 = sld [smem:[#allocation2]]
        %v627 = vstv %s626
        %v628 = vmul.f32 %v625, %v627
        %s629 = scalar_lea.vmem %s488, 8 [#allocation8]
        %v630 = vld [vmem:[%s629] sm:$0xff]
        %s631 = sld [smem:[#allocation2 + $0x1]]
        %v632 = vstv %s631
        %v633 = vmul.f32 %v630, %v632
        %v634 = vadd.f32 %v628, %v633
        %s635 = scalar_lea.vmem %s488, 16 [#allocation8]
        %v636 = vld [vmem:[%s635] sm:$0xff]
        %s637 = sld [smem:[#allocation2 + $0x2]]
        %v638 = vstv %s637
        %v639 = vmul.f32 %v636, %v638
        %v640 = vadd.f32 %v634, %v639
        %s641 = scalar_lea.vmem %s488, 24 [#allocation8]
        %v642 = vld [vmem:[%s641] sm:$0xff]
        %s643 = sld [smem:[#allocation2 + $0x3]]
        %v644 = vstv %s643
        %v645 = vmul.f32 %v642, %v644
        %v646 = vadd.f32 %v640, %v645
        %s647 = sld [smem:[#allocation6]]
        %v648 = vstv %s647
        %v649 = vadd.f32 %v646, %v648
        %650 = vst [vmem:[%s597] sm:$0xff] %v649
        %v651 = vand.u32 2147483647, %v649
        %v652 = vsub.f32 0.0, %v651
        %v653 = vmul.f32 %v652, 1.442695
        %v654 = vpow.pop %v653
        %v655 = vsub.f32 0.0, %v649
        %v656 = vmax.f32 %v655, 0.0
        %v657 = vadd.f32 %v654, 1.0
        %v658 = vlog2.pop %v657
        %v659 = vmul.f32 %v658, 0.6931472
        %v660 = vadd.f32 %v656, %v659
        %v661 = vsub.f32 1.0, %v624
        %v662 = vmul.f32 %v661, %v649
        %v663 = vmul.f32 %v624, 9.0
        %v664 = vadd.f32 %v663, 1.0
        %v665 = vmul.f32 %v664, %v660
        %v666 = vadd.f32 %v662, %v665
        %vm667 = vcmp.ge.f32.partialorder %v649, 0.0
        %v668 = vsel %vm667, 1.0, %v654
        %v669 = vrcp.pop %v657
        %v670 = vmul.f32 %v668, %v669
        %v671 = vmul.f32 %v666, %v623
        %v672 = vmul.f32 %v670, %v623
        %v673 = vrot.slane %v671, 4
        %v674 = vadd.f32 %v671, %v673
        %v675 = vrot.slane %v674, 2
        %v676 = vadd.f32 %v674, %v675
        %v677 = vrot.slane %v676, 1
        %v678 = vadd.f32 %v676, %v677
        %v679 = vmul.f32 %v670, %v624
        %v680 = vrot.slane %v679, 4
        %v681 = vadd.f32 %v679, %v680
        %v682 = vrot.slane %v681, 2
        %v683 = vadd.f32 %v681, %v682
        %v684 = vrot.slane %v683, 1
        %v685 = vadd.f32 %v683, %v684
        %v686 = vrot.slane %v672, 4
        %v687 = vadd.f32 %v672, %v686
        %v688 = vrot.slane %v687, 2
        %v689 = vadd.f32 %v687, %v688
        %v690 = vrot.slane %v689, 1
        %v691 = vadd.f32 %v689, %v690
        %v692 = vrot.slane %v624, 4
        %v693 = vadd.f32 %v624, %v692
        %v694 = vrot.slane %v693, 2
        %v695 = vadd.f32 %v693, %v694
        %v696 = vrot.slane %v695, 1
        %v697 = vadd.f32 %v695, %v696
        %v698 = vld [vmem:[%s488] sm:$0xff]
        %s699 = sld [smem:[#allocation2 + $0x180]]
        %v700 = vstv %s699
        %v701 = vmul.f32 %v698, %v700
        %v702 = vld [vmem:[%s629] sm:$0xff]
        %s703 = sld [smem:[#allocation2 + $0x181]]
        %v704 = vstv %s703
        %v705 = vmul.f32 %v702, %v704
        %v706 = vadd.f32 %v701, %v705
        %v707 = vld [vmem:[%s635] sm:$0xff]
        %s708 = sld [smem:[#allocation2 + $0x182]]
        %v709 = vstv %s708
        %v710 = vmul.f32 %v707, %v709
        %v711 = vadd.f32 %v706, %v710
        %v712 = vld [vmem:[%s641] sm:$0xff]
        %s713 = sld [smem:[#allocation2 + $0x183]]
        %v714 = vstv %s713
        %v715 = vmul.f32 %v712, %v714
        %v716 = vadd.f32 %v711, %v715
        %s717 = sld [smem:[#allocation6 + $0x3]]
        %v718 = vstv %s717
        %v719 = vadd.f32 %v716, %v718
        %v720 = vld [vmem:[%s506] sm:$0xff]
        %v721 = vand.u32 2147483647, %v719
        %v722 = vsub.f32 0.0, %v721
        %v723 = vmul.f32 %v722, 1.442695
        %v724 = vpow.pop %v723
        %v725 = vsub.f32 0.0, %v719
        %v726 = vmax.f32 %v725, 0.0
        %v727 = vadd.f32 %v724, 1.0
        %v728 = vlog2.pop %v727
        %v729 = vmul.f32 %v728, 0.6931472
        %v730 = vadd.f32 %v726, %v729
        %v731 = vadd.f32 %v730, %v719
        %v732 = vmin.f32 %v730, 100.0
        %v733 = vmin.f32 %v731, 100.0
        %v734 = vmul.f32 %v720, %v732
        %v735 = vsub.f32 1.0, %v720
        %v736 = vmul.f32 %v735, %v733
        %v737 = vadd.f32 %v734, %v736
        %v738 = vmul.f32 %v624, %v737
        %v739 = vmul.f32 %v720, 100.0
        %v740 = vmul.f32 %v661, %v739
        %v741 = vadd.f32 %v738, %v740
        %v742 = vrot.slane %v741, 4
        %v743 = vadd.f32 %v741, %v742
        %v744 = vrot.slane %v743, 2
        %v745 = vadd.f32 %v743, %v744
        %v746 = vrot.slane %v745, 1
        %v747 = vadd.f32 %v745, %v746
        %s748 = sld [smem:[#allocation2 + $0x200]]
        %v749 = vstv %s748
        %v750 = vmul.f32 %v698, %v749
        %s751 = sld [smem:[#allocation2 + $0x201]]
        %v752 = vstv %s751
        %v753 = vmul.f32 %v702, %v752
        %v754 = vadd.f32 %v750, %v753
        %s755 = sld [smem:[#allocation2 + $0x202]]
        %v756 = vstv %s755
        %v757 = vmul.f32 %v707, %v756
        %v758 = vadd.f32 %v754, %v757
        %s759 = sld [smem:[#allocation2 + $0x203]]
        %v760 = vstv %s759
        %v761 = vmul.f32 %v712, %v760
        %v762 = vadd.f32 %v758, %v761
        %s763 = sld [smem:[#allocation6 + $0x4]]
        %v764 = vstv %s763
        %v765 = vadd.f32 %v762, %v764
        %v766 = vmul.f32 %v624, %v765
        %v767 = vld [vmem:[%s515] sm:$0xff]
        %v768 = vsub.f32 %v766, %v767
        %v769 = vmul.f32 %v768, %v768
        %v770 = vrot.slane %v769, 4
        %v771 = vadd.f32 %v769, %v770
        %v772 = vrot.slane %v771, 2
        %v773 = vadd.f32 %v771, %v772
        %v774 = vrot.slane %v773, 1
        %v775 = vadd.f32 %v773, %v774
        %s776 = sld [smem:[#allocation2 + $0x80]]
        %v777 = vstv %s776
        %v778 = vmul.f32 %v698, %v777
        %s779 = sld [smem:[#allocation2 + $0x81]]
        %v780 = vstv %s779
        %v781 = vmul.f32 %v702, %v780
        %v782 = vadd.f32 %v778, %v781
        %s783 = sld [smem:[#allocation2 + $0x82]]
        %v784 = vstv %s783
        %v785 = vmul.f32 %v707, %v784
        %v786 = vadd.f32 %v782, %v785
        %s787 = sld [smem:[#allocation2 + $0x83]]
        %v788 = vstv %s787
        %v789 = vmul.f32 %v712, %v788
        %v790 = vadd.f32 %v786, %v789
        %s791 = sld [smem:[#allocation6 + $0x1]]
        %v792 = vstv %s791
        %v793 = vadd.f32 %v790, %v792
        %s794 = sld [smem:[#allocation2 + $0x100]]
        %v795 = vstv %s794
        %v796 = vmul.f32 %v698, %v795
        %s797 = sld [smem:[#allocation2 + $0x101]]
        %v798 = vstv %s797
        %v799 = vmul.f32 %v702, %v798
        %v800 = vadd.f32 %v796, %v799
        %s801 = sld [smem:[#allocation2 + $0x102]]
        %v802 = vstv %s801
        %v803 = vmul.f32 %v707, %v802
        %v804 = vadd.f32 %v800, %v803
        %s805 = sld [smem:[#allocation2 + $0x103]]
        %v806 = vstv %s805
        %v807 = vmul.f32 %v712, %v806
        %v808 = vadd.f32 %v804, %v807
        %s809 = sld [smem:[#allocation6 + $0x2]]
        %v810 = vstv %s809
        %v811 = vadd.f32 %v808, %v810
        %v812 = vld [vmem:[%s497] sm:$0xff]
        %vm813 = vcmp.lt.f32.partialorder %v812, 200.0
        %v814 = vsel %vm813, 1.0, 0.0
        %vm815 = vcmp.eq.f32.partialorder %v812, 1.0
        %v816 = vsel %vm815, 1.0, 0.0
        %v817 = vmul.f32 %v816, %v814
        %818 = vadd.xlane.f32.xlu0 %v817
        %v819 = vpop.xlane.xlu0 %818
        %v820 = vrot.slane %v819, 4
        %v821 = vadd.f32 %v819, %v820
        %v822 = vrot.slane %v821, 2
        %v823 = vadd.f32 %v821, %v822
        %v824 = vrot.slane %v823, 1
        %v825 = vadd.f32 %v823, %v824
        %s826 = vtos %v825
        %p827 = scmp.gt.f32.partialorder %s826, 0.0
        %s828 = scalar_select %p827, 1.0, 0.0
        %s829 = smax.f32 %s826, 1.0
        %v830 = vstv %s829
        %v831 = vrcp.pop %v830
        %s832 = vtos %v831
        %v833 = vmul.f32 %v793, %v817
        %834 = vadd.xlane.f32.xlu0 %v833
        %v835 = vpop.xlane.xlu0 %834
        %v836 = vrot.slane %v835, 4
        %v837 = vadd.f32 %v835, %v836
        %v838 = vrot.slane %v837, 2
        %v839 = vadd.f32 %v837, %v838
        %v840 = vrot.slane %v839, 1
        %v841 = vadd.f32 %v839, %v840
        %s842 = vtos %v841
        %s843 = smul.f32 %s842, %s832
        %v844 = vmul.f32 %v811, %v817
        %845 = vadd.xlane.f32.xlu0 %v844
        %v846 = vpop.xlane.xlu0 %845
        %v847 = vrot.slane %v846, 4
        %v848 = vadd.f32 %v846, %v847
        %v849 = vrot.slane %v848, 2
        %v850 = vadd.f32 %v848, %v849
        %v851 = vrot.slane %v850, 1
        %v852 = vadd.f32 %v850, %v851
        %s853 = vtos %v852
        %s854 = smul.f32 %s853, %s832
        %v855 = vstv %s843
        %v856 = vsub.f32 %v793, %v855
        %v857 = vand.u32 2147483647, %v856
        %v858 = vstv %s854
        %v859 = vsub.f32 %v811, %v858
        %v860 = vand.u32 2147483647, %v859
        %v861 = vadd.f32 %v857, %v860
        %v862 = vsub.f32 %v861, 1.0
        %v863 = vmax.f32 %v862, 0.0
        %v864 = vmul.f32 %v863, %v817
        %s865 = smul.f32 %s828, %s832
        %v866 = vrot.slane %v864, 4
        %v867 = vadd.f32 %v864, %v866
        %v868 = vrot.slane %v867, 2
        %v869 = vadd.f32 %v867, %v868
        %v870 = vrot.slane %v869, 1
        %v871 = vadd.f32 %v869, %v870
        %v872 = vstv %s865
        %v873 = vmul.f32 %v872, %v871
        %v874 = vadd.f32 %v873, 0.0
        %s875 = sadd.f32 %s828, 0.0
        %vm876 = vcmp.eq.f32.partialorder %v812, 2.0
        %v877 = vsel %vm876, 1.0, 0.0
        %v878 = vmul.f32 %v877, %v814
        %879 = vadd.xlane.f32.xlu0 %v878
        %v880 = vpop.xlane.xlu0 %879
        %v881 = vrot.slane %v880, 4
        %v882 = vadd.f32 %v880, %v881
        %v883 = vrot.slane %v882, 2
        %v884 = vadd.f32 %v882, %v883
        %v885 = vrot.slane %v884, 1
        %v886 = vadd.f32 %v884, %v885
        %s887 = vtos %v886
        %p888 = scmp.gt.f32.partialorder %s887, 0.0
        %s889 = scalar_select %p888, 1.0, 0.0
        %s890 = smax.f32 %s887, 1.0
        %v891 = vstv %s890
        %v892 = vrcp.pop %v891
        %s893 = vtos %v892
        %v894 = vmul.f32 %v793, %v878
        %895 = vadd.xlane.f32.xlu0 %v894
        %v896 = vpop.xlane.xlu0 %895
        %v897 = vrot.slane %v896, 4
        %v898 = vadd.f32 %v896, %v897
        %v899 = vrot.slane %v898, 2
        %v900 = vadd.f32 %v898, %v899
        %v901 = vrot.slane %v900, 1
        %v902 = vadd.f32 %v900, %v901
        %s903 = vtos %v902
        %s904 = smul.f32 %s903, %s893
        %v905 = vmul.f32 %v811, %v878
        %906 = vadd.xlane.f32.xlu0 %v905
        %v907 = vpop.xlane.xlu0 %906
        %v908 = vrot.slane %v907, 4
        %v909 = vadd.f32 %v907, %v908
        %v910 = vrot.slane %v909, 2
        %v911 = vadd.f32 %v909, %v910
        %v912 = vrot.slane %v911, 1
        %v913 = vadd.f32 %v911, %v912
        %s914 = vtos %v913
        %s915 = smul.f32 %s914, %s893
        %v916 = vstv %s904
        %v917 = vsub.f32 %v793, %v916
        %v918 = vand.u32 2147483647, %v917
        %v919 = vstv %s915
        %v920 = vsub.f32 %v811, %v919
        %v921 = vand.u32 2147483647, %v920
        %v922 = vadd.f32 %v918, %v921
        %v923 = vsub.f32 %v922, 1.0
        %v924 = vmax.f32 %v923, 0.0
        %v925 = vmul.f32 %v924, %v878
        %s926 = smul.f32 %s889, %s893
        %v927 = vrot.slane %v925, 4
        %v928 = vadd.f32 %v925, %v927
        %v929 = vrot.slane %v928, 2
        %v930 = vadd.f32 %v928, %v929
        %v931 = vrot.slane %v930, 1
        %v932 = vadd.f32 %v930, %v931
        %v933 = vstv %s926
        %v934 = vmul.f32 %v933, %v932
        %v935 = vadd.f32 %v874, %v934
        %s936 = sadd.f32 %s875, %s889
        %vm937 = vcmp.eq.f32.partialorder %v812, 3.0
        %v938 = vsel %vm937, 1.0, 0.0
        %v939 = vmul.f32 %v938, %v814
        %940 = vadd.xlane.f32.xlu0 %v939
        %v941 = vpop.xlane.xlu0 %940
        %v942 = vrot.slane %v941, 4
        %v943 = vadd.f32 %v941, %v942
        %v944 = vrot.slane %v943, 2
        %v945 = vadd.f32 %v943, %v944
        %v946 = vrot.slane %v945, 1
        %v947 = vadd.f32 %v945, %v946
        %s948 = vtos %v947
        %p949 = scmp.gt.f32.partialorder %s948, 0.0
        %s950 = scalar_select %p949, 1.0, 0.0
        %s951 = smax.f32 %s948, 1.0
        %v952 = vstv %s951
        %v953 = vrcp.pop %v952
        %s954 = vtos %v953
        %v955 = vmul.f32 %v793, %v939
        %956 = vadd.xlane.f32.xlu0 %v955
        %v957 = vpop.xlane.xlu0 %956
        %v958 = vrot.slane %v957, 4
        %v959 = vadd.f32 %v957, %v958
        %v960 = vrot.slane %v959, 2
        %v961 = vadd.f32 %v959, %v960
        %v962 = vrot.slane %v961, 1
        %v963 = vadd.f32 %v961, %v962
        %s964 = vtos %v963
        %s965 = smul.f32 %s964, %s954
        %v966 = vmul.f32 %v811, %v939
        %967 = vadd.xlane.f32.xlu0 %v966
        %v968 = vpop.xlane.xlu0 %967
        %v969 = vrot.slane %v968, 4
        %v970 = vadd.f32 %v968, %v969
        %v971 = vrot.slane %v970, 2
        %v972 = vadd.f32 %v970, %v971
        %v973 = vrot.slane %v972, 1
        %v974 = vadd.f32 %v972, %v973
        %s975 = vtos %v974
        %s976 = smul.f32 %s975, %s954
        %v977 = vstv %s965
        %v978 = vsub.f32 %v793, %v977
        %v979 = vand.u32 2147483647, %v978
        %v980 = vstv %s976
        %v981 = vsub.f32 %v811, %v980
        %v982 = vand.u32 2147483647, %v981
        %v983 = vadd.f32 %v979, %v982
        %v984 = vsub.f32 %v983, 1.0
        %v985 = vmax.f32 %v984, 0.0
        %v986 = vmul.f32 %v985, %v939
        %s987 = smul.f32 %s950, %s954
        %v988 = vrot.slane %v986, 4
        %v989 = vadd.f32 %v986, %v988
        %v990 = vrot.slane %v989, 2
        %v991 = vadd.f32 %v989, %v990
        %v992 = vrot.slane %v991, 1
        %v993 = vadd.f32 %v991, %v992
        %v994 = vstv %s987
        %v995 = vmul.f32 %v994, %v993
        %v996 = vadd.f32 %v935, %v995
        %s997 = sadd.f32 %s936, %s950
        %vm998 = vcmp.eq.f32.partialorder %v812, 4.0
        %v999 = vsel %vm998, 1.0, 0.0
        %v1000 = vmul.f32 %v999, %v814
        %1001 = vadd.xlane.f32.xlu0 %v1000
        %v1002 = vpop.xlane.xlu0 %1001
        %v1003 = vrot.slane %v1002, 4
        %v1004 = vadd.f32 %v1002, %v1003
        %v1005 = vrot.slane %v1004, 2
        %v1006 = vadd.f32 %v1004, %v1005
        %v1007 = vrot.slane %v1006, 1
        %v1008 = vadd.f32 %v1006, %v1007
        %s1009 = vtos %v1008
        %p1010 = scmp.gt.f32.partialorder %s1009, 0.0
        %s1011 = scalar_select %p1010, 1.0, 0.0
        %s1012 = smax.f32 %s1009, 1.0
        %v1013 = vstv %s1012
        %v1014 = vrcp.pop %v1013
        %s1015 = vtos %v1014
        %v1016 = vmul.f32 %v793, %v1000
        %1017 = vadd.xlane.f32.xlu0 %v1016
        %v1018 = vpop.xlane.xlu0 %1017
        %v1019 = vrot.slane %v1018, 4
        %v1020 = vadd.f32 %v1018, %v1019
        %v1021 = vrot.slane %v1020, 2
        %v1022 = vadd.f32 %v1020, %v1021
        %v1023 = vrot.slane %v1022, 1
        %v1024 = vadd.f32 %v1022, %v1023
        %s1025 = vtos %v1024
        %s1026 = smul.f32 %s1025, %s1015
        %v1027 = vmul.f32 %v811, %v1000
        %1028 = vadd.xlane.f32.xlu0 %v1027
        %v1029 = vpop.xlane.xlu0 %1028
        %v1030 = vrot.slane %v1029, 4
        %v1031 = vadd.f32 %v1029, %v1030
        %v1032 = vrot.slane %v1031, 2
        %v1033 = vadd.f32 %v1031, %v1032
        %v1034 = vrot.slane %v1033, 1
        %v1035 = vadd.f32 %v1033, %v1034
        %s1036 = vtos %v1035
        %s1037 = smul.f32 %s1036, %s1015
        %v1038 = vstv %s1026
        %v1039 = vsub.f32 %v793, %v1038
        %v1040 = vand.u32 2147483647, %v1039
        %v1041 = vstv %s1037
        %v1042 = vsub.f32 %v811, %v1041
        %v1043 = vand.u32 2147483647, %v1042
        %v1044 = vadd.f32 %v1040, %v1043
        %v1045 = vsub.f32 %v1044, 1.0
        %v1046 = vmax.f32 %v1045, 0.0
        %v1047 = vmul.f32 %v1046, %v1000
        %s1048 = smul.f32 %s1011, %s1015
        %v1049 = vrot.slane %v1047, 4
        %v1050 = vadd.f32 %v1047, %v1049
        %v1051 = vrot.slane %v1050, 2
        %v1052 = vadd.f32 %v1050, %v1051
        %v1053 = vrot.slane %v1052, 1
        %v1054 = vadd.f32 %v1052, %v1053
        %v1055 = vstv %s1048
        %v1056 = vmul.f32 %v1055, %v1054
        %v1057 = vadd.f32 %v996, %v1056
        %s1058 = sadd.f32 %s997, %s1011
        %s1059 = ssub.f32 %s843, %s904
        %s1060 = sand.u32 2147483647, %s1059
        %s1061 = sadd.f32 %s1060, 0.0
        %s1062 = ssub.f32 %s854, %s915
        %s1063 = sand.u32 2147483647, %s1062
        %s1064 = sadd.f32 %s1061, %s1063
        %s1065 = smul.f32 %s828, %s889
        %s1066 = ssub.f32 5.0, %s1064
        %s1067 = smax.f32 %s1066, 0.0
        %s1068 = smul.f32 %s1065, %s1067
        %s1069 = sadd.f32 %s1068, 0.0
        %s1070 = sadd.f32 %s1065, 0.0
        %s1071 = ssub.f32 %s843, %s965
        %s1072 = sand.u32 2147483647, %s1071
        %s1073 = sadd.f32 %s1072, 0.0
        %s1074 = ssub.f32 %s854, %s976
        %s1075 = sand.u32 2147483647, %s1074
        %s1076 = sadd.f32 %s1073, %s1075
        %s1077 = smul.f32 %s828, %s950
        %s1078 = ssub.f32 5.0, %s1076
        %s1079 = smax.f32 %s1078, 0.0
        %s1080 = smul.f32 %s1077, %s1079
        %s1081 = sadd.f32 %s1069, %s1080
        %s1082 = sadd.f32 %s1070, %s1077
        %s1083 = ssub.f32 %s843, %s1026
        %s1084 = sand.u32 2147483647, %s1083
        %s1085 = sadd.f32 %s1084, 0.0
        %s1086 = ssub.f32 %s854, %s1037
        %s1087 = sand.u32 2147483647, %s1086
        %s1088 = sadd.f32 %s1085, %s1087
        %s1089 = smul.f32 %s828, %s1011
        %s1090 = ssub.f32 5.0, %s1088
        %s1091 = smax.f32 %s1090, 0.0
        %s1092 = smul.f32 %s1089, %s1091
        %s1093 = sadd.f32 %s1081, %s1092
        %s1094 = sadd.f32 %s1082, %s1089
        %s1095 = ssub.f32 %s904, %s843
        %s1096 = sand.u32 2147483647, %s1095
        %s1097 = sadd.f32 %s1096, 0.0
        %s1098 = ssub.f32 %s915, %s854
        %s1099 = sand.u32 2147483647, %s1098
        %s1100 = sadd.f32 %s1097, %s1099
        %s1101 = ssub.f32 5.0, %s1100
        %s1102 = smax.f32 %s1101, 0.0
        %s1103 = smul.f32 %s1065, %s1102
        %s1104 = sadd.f32 %s1093, %s1103
        %s1105 = sadd.f32 %s1094, %s1065
        %s1106 = ssub.f32 %s904, %s965
        %s1107 = sand.u32 2147483647, %s1106
        %s1108 = sadd.f32 %s1107, 0.0
        %s1109 = ssub.f32 %s915, %s976
        %s1110 = sand.u32 2147483647, %s1109
        %s1111 = sadd.f32 %s1108, %s1110
        %s1112 = smul.f32 %s889, %s950
        %s1113 = ssub.f32 5.0, %s1111
        %s1114 = smax.f32 %s1113, 0.0
        %s1115 = smul.f32 %s1112, %s1114
        %s1116 = sadd.f32 %s1104, %s1115
        %s1117 = sadd.f32 %s1105, %s1112
        %s1118 = ssub.f32 %s904, %s1026
        %s1119 = sand.u32 2147483647, %s1118
        %s1120 = sadd.f32 %s1119, 0.0
        %s1121 = ssub.f32 %s915, %s1037
        %s1122 = sand.u32 2147483647, %s1121
        %s1123 = sadd.f32 %s1120, %s1122
        %s1124 = smul.f32 %s889, %s1011
        %s1125 = ssub.f32 5.0, %s1123
        %s1126 = smax.f32 %s1125, 0.0
        %s1127 = smul.f32 %s1124, %s1126
        %s1128 = sadd.f32 %s1116, %s1127
        %s1129 = sadd.f32 %s1117, %s1124
        %s1130 = ssub.f32 %s965, %s843
        %s1131 = sand.u32 2147483647, %s1130
        %s1132 = sadd.f32 %s1131, 0.0
        %s1133 = ssub.f32 %s976, %s854
        %s1134 = sand.u32 2147483647, %s1133
        %s1135 = sadd.f32 %s1132, %s1134
        %s1136 = ssub.f32 5.0, %s1135
        %s1137 = smax.f32 %s1136, 0.0
        %s1138 = smul.f32 %s1077, %s1137
        %s1139 = sadd.f32 %s1128, %s1138
        %s1140 = sadd.f32 %s1129, %s1077
        %s1141 = ssub.f32 %s965, %s904
        %s1142 = sand.u32 2147483647, %s1141
        %s1143 = sadd.f32 %s1142, 0.0
        %s1144 = ssub.f32 %s976, %s915
        %s1145 = sand.u32 2147483647, %s1144
        %s1146 = sadd.f32 %s1143, %s1145
        %s1147 = ssub.f32 5.0, %s1146
        %s1148 = smax.f32 %s1147, 0.0
        %s1149 = smul.f32 %s1112, %s1148
        %s1150 = sadd.f32 %s1139, %s1149
        %s1151 = sadd.f32 %s1140, %s1112
        %s1152 = ssub.f32 %s965, %s1026
        %s1153 = sand.u32 2147483647, %s1152
        %s1154 = sadd.f32 %s1153, 0.0
        %s1155 = ssub.f32 %s976, %s1037
        %s1156 = sand.u32 2147483647, %s1155
        %s1157 = sadd.f32 %s1154, %s1156
        %s1158 = smul.f32 %s950, %s1011
        %s1159 = ssub.f32 5.0, %s1157
        %s1160 = smax.f32 %s1159, 0.0
        %s1161 = smul.f32 %s1158, %s1160
        %s1162 = sadd.f32 %s1150, %s1161
        %s1163 = sadd.f32 %s1151, %s1158
        %s1164 = ssub.f32 %s1026, %s843
        %s1165 = sand.u32 2147483647, %s1164
        %s1166 = sadd.f32 %s1165, 0.0
        %s1167 = ssub.f32 %s1037, %s854
        %s1168 = sand.u32 2147483647, %s1167
        %s1169 = sadd.f32 %s1166, %s1168
        %s1170 = ssub.f32 5.0, %s1169
        %s1171 = smax.f32 %s1170, 0.0
        %s1172 = smul.f32 %s1089, %s1171
        %s1173 = sadd.f32 %s1162, %s1172
        %s1174 = sadd.f32 %s1163, %s1089
        %s1175 = ssub.f32 %s1026, %s904
        %s1176 = sand.u32 2147483647, %s1175
        %s1177 = sadd.f32 %s1176, 0.0
        %s1178 = ssub.f32 %s1037, %s915
        %s1179 = sand.u32 2147483647, %s1178
        %s1180 = sadd.f32 %s1177, %s1179
        %s1181 = ssub.f32 5.0, %s1180
        %s1182 = smax.f32 %s1181, 0.0
        %s1183 = smul.f32 %s1124, %s1182
        %s1184 = sadd.f32 %s1173, %s1183
        %s1185 = sadd.f32 %s1174, %s1124
        %s1186 = ssub.f32 %s1026, %s965
        %s1187 = sand.u32 2147483647, %s1186
        %s1188 = sadd.f32 %s1187, 0.0
        %s1189 = ssub.f32 %s1037, %s976
        %s1190 = sand.u32 2147483647, %s1189
        %s1191 = sadd.f32 %s1188, %s1190
        %s1192 = ssub.f32 5.0, %s1191
        %s1193 = smax.f32 %s1192, 0.0
        %s1194 = smul.f32 %s1158, %s1193
        %s1195 = sadd.f32 %s1184, %s1194
        %s1196 = sadd.f32 %s1185, %s1158
        %v1197 = vstv %s1058
        %v1198 = vmul.f32 %v1197, %v618
        %v1199 = vstv %s1195
        %v1200 = vmul.f32 %v1199, %v618
        %v1201 = vstv %s1196
        %v1202 = vmul.f32 %v1201, %v618
        %s1203 = sld [smem:[#allocation2 + $0x280]]
        %v1204 = vstv %s1203
        %v1205 = vmul.f32 %v698, %v1204
        %s1206 = sld [smem:[#allocation2 + $0x281]]
        %v1207 = vstv %s1206
        %v1208 = vmul.f32 %v702, %v1207
        %v1209 = vadd.f32 %v1205, %v1208
        %s1210 = sld [smem:[#allocation2 + $0x282]]
        %v1211 = vstv %s1210
        %v1212 = vmul.f32 %v707, %v1211
        %v1213 = vadd.f32 %v1209, %v1212
        %s1214 = sld [smem:[#allocation2 + $0x283]]
        %v1215 = vstv %s1214
        %v1216 = vmul.f32 %v712, %v1215
        %v1217 = vadd.f32 %v1213, %v1216
        %s1218 = sld [smem:[#allocation6 + $0x5]]
        %v1219 = vstv %s1218
        %v1220 = vadd.f32 %v1217, %v1219
        %v1221 = vld [vmem:[%s524] sm:$0xff]
        %v1222 = vand.u32 2147483647, %v1220
        %v1223 = vsub.f32 0.0, %v1222
        %v1224 = vmul.f32 %v1223, 1.442695
        %v1225 = vpow.pop %v1224
        %v1226 = vsub.f32 0.0, %v1220
        %v1227 = vmax.f32 %v1226, 0.0
        %v1228 = vadd.f32 %v1225, 1.0
        %v1229 = vlog2.pop %v1228
        %v1230 = vmul.f32 %v1229, 0.6931472
        %v1231 = vadd.f32 %v1227, %v1230
        %v1232 = vsub.f32 1.0, %v1221
        %v1233 = vmul.f32 %v1232, %v1220
        %v1234 = vmul.f32 %v1221, 9.0
        %v1235 = vadd.f32 %v1234, 1.0
        %v1236 = vmul.f32 %v1235, %v1231
        %v1237 = vadd.f32 %v1233, %v1236
        %vm1238 = vcmp.ge.f32.partialorder %v1220, 0.0
        %v1239 = vsel %vm1238, 1.0, %v1225
        %v1240 = vrcp.pop %v1228
        %v1241 = vmul.f32 %v1239, %v1240
        %v1242 = vmul.f32 %v1237, %v623
        %v1243 = vmul.f32 %v1241, %v623
        %v1244 = vrot.slane %v1242, 4
        %v1245 = vadd.f32 %v1242, %v1244
        %v1246 = vrot.slane %v1245, 2
        %v1247 = vadd.f32 %v1245, %v1246
        %v1248 = vrot.slane %v1247, 1
        %v1249 = vadd.f32 %v1247, %v1248
        %v1250 = vmul.f32 %v1241, %v1221
        %v1251 = vrot.slane %v1250, 4
        %v1252 = vadd.f32 %v1250, %v1251
        %v1253 = vrot.slane %v1252, 2
        %v1254 = vadd.f32 %v1252, %v1253
        %v1255 = vrot.slane %v1254, 1
        %v1256 = vadd.f32 %v1254, %v1255
        %v1257 = vrot.slane %v1243, 4
        %v1258 = vadd.f32 %v1243, %v1257
        %v1259 = vrot.slane %v1258, 2
        %v1260 = vadd.f32 %v1258, %v1259
        %v1261 = vrot.slane %v1260, 1
        %v1262 = vadd.f32 %v1260, %v1261
        %v1263 = vrot.slane %v1221, 4
        %v1264 = vadd.f32 %v1221, %v1263
        %v1265 = vrot.slane %v1264, 2
        %v1266 = vadd.f32 %v1264, %v1265
        %v1267 = vrot.slane %v1266, 1
        %v1268 = vadd.f32 %v1266, %v1267
        %s1269 = sld [smem:[#allocation2 + $0x300]]
        %v1270 = vstv %s1269
        %v1271 = vmul.f32 %v698, %v1270
        %s1272 = sld [smem:[#allocation2 + $0x301]]
        %v1273 = vstv %s1272
        %v1274 = vmul.f32 %v702, %v1273
        %v1275 = vadd.f32 %v1271, %v1274
        %s1276 = sld [smem:[#allocation2 + $0x302]]
        %v1277 = vstv %s1276
        %v1278 = vmul.f32 %v707, %v1277
        %v1279 = vadd.f32 %v1275, %v1278
        %s1280 = sld [smem:[#allocation2 + $0x303]]
        %v1281 = vstv %s1280
        %v1282 = vmul.f32 %v712, %v1281
        %v1283 = vadd.f32 %v1279, %v1282
        %s1284 = sld [smem:[#allocation6 + $0x6]]
        %v1285 = vstv %s1284
        %v1286 = vadd.f32 %v1283, %v1285
        %s1287 = sld [smem:[#allocation2 + $0x380]]
        %v1288 = vstv %s1287
        %v1289 = vmul.f32 %v698, %v1288
        %s1290 = sld [smem:[#allocation2 + $0x381]]
        %v1291 = vstv %s1290
        %v1292 = vmul.f32 %v702, %v1291
        %v1293 = vadd.f32 %v1289, %v1292
        %s1294 = sld [smem:[#allocation2 + $0x382]]
        %v1295 = vstv %s1294
        %v1296 = vmul.f32 %v707, %v1295
        %v1297 = vadd.f32 %v1293, %v1296
        %s1298 = sld [smem:[#allocation2 + $0x383]]
        %v1299 = vstv %s1298
        %v1300 = vmul.f32 %v712, %v1299
        %v1301 = vadd.f32 %v1297, %v1300
        %s1302 = sld [smem:[#allocation6 + $0x7]]
        %v1303 = vstv %s1302
        %v1304 = vadd.f32 %v1301, %v1303
        %v1305 = vld [vmem:[%s533] sm:$0xff]
        %vm1306 = vcmp.lt.f32.partialorder %v1305, 200.0
        %v1307 = vsel %vm1306, 1.0, 0.0
        %vm1308 = vcmp.eq.f32.partialorder %v1305, 1.0
        %v1309 = vsel %vm1308, 1.0, 0.0
        %v1310 = vmul.f32 %v1309, %v1307
        %1311 = vadd.xlane.f32.xlu0 %v1310
        %v1312 = vpop.xlane.xlu0 %1311
        %v1313 = vrot.slane %v1312, 4
        %v1314 = vadd.f32 %v1312, %v1313
        %v1315 = vrot.slane %v1314, 2
        %v1316 = vadd.f32 %v1314, %v1315
        %v1317 = vrot.slane %v1316, 1
        %v1318 = vadd.f32 %v1316, %v1317
        %s1319 = vtos %v1318
        %p1320 = scmp.gt.f32.partialorder %s1319, 0.0
        %s1321 = scalar_select %p1320, 1.0, 0.0
        %s1322 = smax.f32 %s1319, 1.0
        %v1323 = vstv %s1322
        %v1324 = vrcp.pop %v1323
        %s1325 = vtos %v1324
        %v1326 = vmul.f32 %v1286, %v1310
        %1327 = vadd.xlane.f32.xlu0 %v1326
        %v1328 = vpop.xlane.xlu0 %1327
        %v1329 = vrot.slane %v1328, 4
        %v1330 = vadd.f32 %v1328, %v1329
        %v1331 = vrot.slane %v1330, 2
        %v1332 = vadd.f32 %v1330, %v1331
        %v1333 = vrot.slane %v1332, 1
        %v1334 = vadd.f32 %v1332, %v1333
        %s1335 = vtos %v1334
        %s1336 = smul.f32 %s1335, %s1325
        %v1337 = vmul.f32 %v1304, %v1310
        %1338 = vadd.xlane.f32.xlu0 %v1337
        %v1339 = vpop.xlane.xlu0 %1338
        %v1340 = vrot.slane %v1339, 4
        %v1341 = vadd.f32 %v1339, %v1340
        %v1342 = vrot.slane %v1341, 2
        %v1343 = vadd.f32 %v1341, %v1342
        %v1344 = vrot.slane %v1343, 1
        %v1345 = vadd.f32 %v1343, %v1344
        %s1346 = vtos %v1345
        %s1347 = smul.f32 %s1346, %s1325
        %v1348 = vstv %s1336
        %v1349 = vsub.f32 %v1286, %v1348
        %v1350 = vand.u32 2147483647, %v1349
        %v1351 = vstv %s1347
        %v1352 = vsub.f32 %v1304, %v1351
        %v1353 = vand.u32 2147483647, %v1352
        %v1354 = vadd.f32 %v1350, %v1353
        %v1355 = vsub.f32 %v1354, 1.0
        %v1356 = vmax.f32 %v1355, 0.0
        %v1357 = vmul.f32 %v1356, %v1310
        %s1358 = smul.f32 %s1321, %s1325
        %v1359 = vrot.slane %v1357, 4
        %v1360 = vadd.f32 %v1357, %v1359
        %v1361 = vrot.slane %v1360, 2
        %v1362 = vadd.f32 %v1360, %v1361
        %v1363 = vrot.slane %v1362, 1
        %v1364 = vadd.f32 %v1362, %v1363
        %v1365 = vstv %s1358
        %v1366 = vmul.f32 %v1365, %v1364
        %v1367 = vadd.f32 %v1366, 0.0
        %s1368 = sadd.f32 %s1321, 0.0
        %vm1369 = vcmp.eq.f32.partialorder %v1305, 2.0
        %v1370 = vsel %vm1369, 1.0, 0.0
        %v1371 = vmul.f32 %v1370, %v1307
        %1372 = vadd.xlane.f32.xlu0 %v1371
        %v1373 = vpop.xlane.xlu0 %1372
        %v1374 = vrot.slane %v1373, 4
        %v1375 = vadd.f32 %v1373, %v1374
        %v1376 = vrot.slane %v1375, 2
        %v1377 = vadd.f32 %v1375, %v1376
        %v1378 = vrot.slane %v1377, 1
        %v1379 = vadd.f32 %v1377, %v1378
        %s1380 = vtos %v1379
        %p1381 = scmp.gt.f32.partialorder %s1380, 0.0
        %s1382 = scalar_select %p1381, 1.0, 0.0
        %s1383 = smax.f32 %s1380, 1.0
        %v1384 = vstv %s1383
        %v1385 = vrcp.pop %v1384
        %s1386 = vtos %v1385
        %v1387 = vmul.f32 %v1286, %v1371
        %1388 = vadd.xlane.f32.xlu0 %v1387
        %v1389 = vpop.xlane.xlu0 %1388
        %v1390 = vrot.slane %v1389, 4
        %v1391 = vadd.f32 %v1389, %v1390
        %v1392 = vrot.slane %v1391, 2
        %v1393 = vadd.f32 %v1391, %v1392
        %v1394 = vrot.slane %v1393, 1
        %v1395 = vadd.f32 %v1393, %v1394
        %s1396 = vtos %v1395
        %s1397 = smul.f32 %s1396, %s1386
        %v1398 = vmul.f32 %v1304, %v1371
        %1399 = vadd.xlane.f32.xlu0 %v1398
        %v1400 = vpop.xlane.xlu0 %1399
        %v1401 = vrot.slane %v1400, 4
        %v1402 = vadd.f32 %v1400, %v1401
        %v1403 = vrot.slane %v1402, 2
        %v1404 = vadd.f32 %v1402, %v1403
        %v1405 = vrot.slane %v1404, 1
        %v1406 = vadd.f32 %v1404, %v1405
        %s1407 = vtos %v1406
        %s1408 = smul.f32 %s1407, %s1386
        %v1409 = vstv %s1397
        %v1410 = vsub.f32 %v1286, %v1409
        %v1411 = vand.u32 2147483647, %v1410
        %v1412 = vstv %s1408
        %v1413 = vsub.f32 %v1304, %v1412
        %v1414 = vand.u32 2147483647, %v1413
        %v1415 = vadd.f32 %v1411, %v1414
        %v1416 = vsub.f32 %v1415, 1.0
        %v1417 = vmax.f32 %v1416, 0.0
        %v1418 = vmul.f32 %v1417, %v1371
        %s1419 = smul.f32 %s1382, %s1386
        %v1420 = vrot.slane %v1418, 4
        %v1421 = vadd.f32 %v1418, %v1420
        %v1422 = vrot.slane %v1421, 2
        %v1423 = vadd.f32 %v1421, %v1422
        %v1424 = vrot.slane %v1423, 1
        %v1425 = vadd.f32 %v1423, %v1424
        %v1426 = vstv %s1419
        %v1427 = vmul.f32 %v1426, %v1425
        %v1428 = vadd.f32 %v1367, %v1427
        %s1429 = sadd.f32 %s1368, %s1382
        %vm1430 = vcmp.eq.f32.partialorder %v1305, 3.0
        %v1431 = vsel %vm1430, 1.0, 0.0
        %v1432 = vmul.f32 %v1431, %v1307
        %1433 = vadd.xlane.f32.xlu0 %v1432
        %v1434 = vpop.xlane.xlu0 %1433
        %v1435 = vrot.slane %v1434, 4
        %v1436 = vadd.f32 %v1434, %v1435
        %v1437 = vrot.slane %v1436, 2
        %v1438 = vadd.f32 %v1436, %v1437
        %v1439 = vrot.slane %v1438, 1
        %v1440 = vadd.f32 %v1438, %v1439
        %s1441 = vtos %v1440
        %p1442 = scmp.gt.f32.partialorder %s1441, 0.0
        %s1443 = scalar_select %p1442, 1.0, 0.0
        %s1444 = smax.f32 %s1441, 1.0
        %v1445 = vstv %s1444
        %v1446 = vrcp.pop %v1445
        %s1447 = vtos %v1446
        %v1448 = vmul.f32 %v1286, %v1432
        %1449 = vadd.xlane.f32.xlu0 %v1448
        %v1450 = vpop.xlane.xlu0 %1449
        %v1451 = vrot.slane %v1450, 4
        %v1452 = vadd.f32 %v1450, %v1451
        %v1453 = vrot.slane %v1452, 2
        %v1454 = vadd.f32 %v1452, %v1453
        %v1455 = vrot.slane %v1454, 1
        %v1456 = vadd.f32 %v1454, %v1455
        %s1457 = vtos %v1456
        %s1458 = smul.f32 %s1457, %s1447
        %v1459 = vmul.f32 %v1304, %v1432
        %1460 = vadd.xlane.f32.xlu0 %v1459
        %v1461 = vpop.xlane.xlu0 %1460
        %v1462 = vrot.slane %v1461, 4
        %v1463 = vadd.f32 %v1461, %v1462
        %v1464 = vrot.slane %v1463, 2
        %v1465 = vadd.f32 %v1463, %v1464
        %v1466 = vrot.slane %v1465, 1
        %v1467 = vadd.f32 %v1465, %v1466
        %s1468 = vtos %v1467
        %s1469 = smul.f32 %s1468, %s1447
        %v1470 = vstv %s1458
        %v1471 = vsub.f32 %v1286, %v1470
        %v1472 = vand.u32 2147483647, %v1471
        %v1473 = vstv %s1469
        %v1474 = vsub.f32 %v1304, %v1473
        %v1475 = vand.u32 2147483647, %v1474
        %v1476 = vadd.f32 %v1472, %v1475
        %v1477 = vsub.f32 %v1476, 1.0
        %v1478 = vmax.f32 %v1477, 0.0
        %v1479 = vmul.f32 %v1478, %v1432
        %s1480 = smul.f32 %s1443, %s1447
        %v1481 = vrot.slane %v1479, 4
        %v1482 = vadd.f32 %v1479, %v1481
        %v1483 = vrot.slane %v1482, 2
        %v1484 = vadd.f32 %v1482, %v1483
        %v1485 = vrot.slane %v1484, 1
        %v1486 = vadd.f32 %v1484, %v1485
        %v1487 = vstv %s1480
        %v1488 = vmul.f32 %v1487, %v1486
        %v1489 = vadd.f32 %v1428, %v1488
        %s1490 = sadd.f32 %s1429, %s1443
        %vm1491 = vcmp.eq.f32.partialorder %v1305, 4.0
        %v1492 = vsel %vm1491, 1.0, 0.0
        %v1493 = vmul.f32 %v1492, %v1307
        %1494 = vadd.xlane.f32.xlu0 %v1493
        %v1495 = vpop.xlane.xlu0 %1494
        %v1496 = vrot.slane %v1495, 4
        %v1497 = vadd.f32 %v1495, %v1496
        %v1498 = vrot.slane %v1497, 2
        %v1499 = vadd.f32 %v1497, %v1498
        %v1500 = vrot.slane %v1499, 1
        %v1501 = vadd.f32 %v1499, %v1500
        %s1502 = vtos %v1501
        %p1503 = scmp.gt.f32.partialorder %s1502, 0.0
        %s1504 = scalar_select %p1503, 1.0, 0.0
        %s1505 = smax.f32 %s1502, 1.0
        %v1506 = vstv %s1505
        %v1507 = vrcp.pop %v1506
        %s1508 = vtos %v1507
        %v1509 = vmul.f32 %v1286, %v1493
        %1510 = vadd.xlane.f32.xlu0 %v1509
        %v1511 = vpop.xlane.xlu0 %1510
        %v1512 = vrot.slane %v1511, 4
        %v1513 = vadd.f32 %v1511, %v1512
        %v1514 = vrot.slane %v1513, 2
        %v1515 = vadd.f32 %v1513, %v1514
        %v1516 = vrot.slane %v1515, 1
        %v1517 = vadd.f32 %v1515, %v1516
        %s1518 = vtos %v1517
        %s1519 = smul.f32 %s1518, %s1508
        %v1520 = vmul.f32 %v1304, %v1493
        %1521 = vadd.xlane.f32.xlu0 %v1520
        %v1522 = vpop.xlane.xlu0 %1521
        %v1523 = vrot.slane %v1522, 4
        %v1524 = vadd.f32 %v1522, %v1523
        %v1525 = vrot.slane %v1524, 2
        %v1526 = vadd.f32 %v1524, %v1525
        %v1527 = vrot.slane %v1526, 1
        %v1528 = vadd.f32 %v1526, %v1527
        %s1529 = vtos %v1528
        %s1530 = smul.f32 %s1529, %s1508
        %v1531 = vstv %s1519
        %v1532 = vsub.f32 %v1286, %v1531
        %v1533 = vand.u32 2147483647, %v1532
        %v1534 = vstv %s1530
        %v1535 = vsub.f32 %v1304, %v1534
        %v1536 = vand.u32 2147483647, %v1535
        %v1537 = vadd.f32 %v1533, %v1536
        %v1538 = vsub.f32 %v1537, 1.0
        %v1539 = vmax.f32 %v1538, 0.0
        %v1540 = vmul.f32 %v1539, %v1493
        %s1541 = smul.f32 %s1504, %s1508
        %v1542 = vrot.slane %v1540, 4
        %v1543 = vadd.f32 %v1540, %v1542
        %v1544 = vrot.slane %v1543, 2
        %v1545 = vadd.f32 %v1543, %v1544
        %v1546 = vrot.slane %v1545, 1
        %v1547 = vadd.f32 %v1545, %v1546
        %v1548 = vstv %s1541
        %v1549 = vmul.f32 %v1548, %v1547
        %v1550 = vadd.f32 %v1489, %v1549
        %s1551 = sadd.f32 %s1490, %s1504
        %s1552 = ssub.f32 %s1336, %s1397
        %s1553 = sand.u32 2147483647, %s1552
        %s1554 = sadd.f32 %s1553, 0.0
        %s1555 = ssub.f32 %s1347, %s1408
        %s1556 = sand.u32 2147483647, %s1555
        %s1557 = sadd.f32 %s1554, %s1556
        %s1558 = smul.f32 %s1321, %s1382
        %s1559 = ssub.f32 5.0, %s1557
        %s1560 = smax.f32 %s1559, 0.0
        %s1561 = smul.f32 %s1558, %s1560
        %s1562 = sadd.f32 %s1561, 0.0
        %s1563 = sadd.f32 %s1558, 0.0
        %s1564 = ssub.f32 %s1336, %s1458
        %s1565 = sand.u32 2147483647, %s1564
        %s1566 = sadd.f32 %s1565, 0.0
        %s1567 = ssub.f32 %s1347, %s1469
        %s1568 = sand.u32 2147483647, %s1567
        %s1569 = sadd.f32 %s1566, %s1568
        %s1570 = smul.f32 %s1321, %s1443
        %s1571 = ssub.f32 5.0, %s1569
        %s1572 = smax.f32 %s1571, 0.0
        %s1573 = smul.f32 %s1570, %s1572
        %s1574 = sadd.f32 %s1562, %s1573
        %s1575 = sadd.f32 %s1563, %s1570
        %s1576 = ssub.f32 %s1336, %s1519
        %s1577 = sand.u32 2147483647, %s1576
        %s1578 = sadd.f32 %s1577, 0.0
        %s1579 = ssub.f32 %s1347, %s1530
        %s1580 = sand.u32 2147483647, %s1579
        %s1581 = sadd.f32 %s1578, %s1580
        %s1582 = smul.f32 %s1321, %s1504
        %s1583 = ssub.f32 5.0, %s1581
        %s1584 = smax.f32 %s1583, 0.0
        %s1585 = smul.f32 %s1582, %s1584
        %s1586 = sadd.f32 %s1574, %s1585
        %s1587 = sadd.f32 %s1575, %s1582
        %s1588 = ssub.f32 %s1397, %s1336
        %s1589 = sand.u32 2147483647, %s1588
        %s1590 = sadd.f32 %s1589, 0.0
        %s1591 = ssub.f32 %s1408, %s1347
        %s1592 = sand.u32 2147483647, %s1591
        %s1593 = sadd.f32 %s1590, %s1592
        %s1594 = ssub.f32 5.0, %s1593
        %s1595 = smax.f32 %s1594, 0.0
        %s1596 = smul.f32 %s1558, %s1595
        %s1597 = sadd.f32 %s1586, %s1596
        %s1598 = sadd.f32 %s1587, %s1558
        %s1599 = ssub.f32 %s1397, %s1458
        %s1600 = sand.u32 2147483647, %s1599
        %s1601 = sadd.f32 %s1600, 0.0
        %s1602 = ssub.f32 %s1408, %s1469
        %s1603 = sand.u32 2147483647, %s1602
        %s1604 = sadd.f32 %s1601, %s1603
        %s1605 = smul.f32 %s1382, %s1443
        %s1606 = ssub.f32 5.0, %s1604
        %s1607 = smax.f32 %s1606, 0.0
        %s1608 = smul.f32 %s1605, %s1607
        %s1609 = sadd.f32 %s1597, %s1608
        %s1610 = sadd.f32 %s1598, %s1605
        %s1611 = ssub.f32 %s1397, %s1519
        %s1612 = sand.u32 2147483647, %s1611
        %s1613 = sadd.f32 %s1612, 0.0
        %s1614 = ssub.f32 %s1408, %s1530
        %s1615 = sand.u32 2147483647, %s1614
        %s1616 = sadd.f32 %s1613, %s1615
        %s1617 = smul.f32 %s1382, %s1504
        %s1618 = ssub.f32 5.0, %s1616
        %s1619 = smax.f32 %s1618, 0.0
        %s1620 = smul.f32 %s1617, %s1619
        %s1621 = sadd.f32 %s1609, %s1620
        %s1622 = sadd.f32 %s1610, %s1617
        %s1623 = ssub.f32 %s1458, %s1336
        %s1624 = sand.u32 2147483647, %s1623
        %s1625 = sadd.f32 %s1624, 0.0
        %s1626 = ssub.f32 %s1469, %s1347
        %s1627 = sand.u32 2147483647, %s1626
        %s1628 = sadd.f32 %s1625, %s1627
        %s1629 = ssub.f32 5.0, %s1628
        %s1630 = smax.f32 %s1629, 0.0
        %s1631 = smul.f32 %s1570, %s1630
        %s1632 = sadd.f32 %s1621, %s1631
        %s1633 = sadd.f32 %s1622, %s1570
        %s1634 = ssub.f32 %s1458, %s1397
        %s1635 = sand.u32 2147483647, %s1634
        %s1636 = sadd.f32 %s1635, 0.0
        %s1637 = ssub.f32 %s1469, %s1408
        %s1638 = sand.u32 2147483647, %s1637
        %s1639 = sadd.f32 %s1636, %s1638
        %s1640 = ssub.f32 5.0, %s1639
        %s1641 = smax.f32 %s1640, 0.0
        %s1642 = smul.f32 %s1605, %s1641
        %s1643 = sadd.f32 %s1632, %s1642
        %s1644 = sadd.f32 %s1633, %s1605
        %s1645 = ssub.f32 %s1458, %s1519
        %s1646 = sand.u32 2147483647, %s1645
        %s1647 = sadd.f32 %s1646, 0.0
        %s1648 = ssub.f32 %s1469, %s1530
        %s1649 = sand.u32 2147483647, %s1648
        %s1650 = sadd.f32 %s1647, %s1649
        %s1651 = smul.f32 %s1443, %s1504
        %s1652 = ssub.f32 5.0, %s1650
        %s1653 = smax.f32 %s1652, 0.0
        %s1654 = smul.f32 %s1651, %s1653
        %s1655 = sadd.f32 %s1643, %s1654
        %s1656 = sadd.f32 %s1644, %s1651
        %s1657 = ssub.f32 %s1519, %s1336
        %s1658 = sand.u32 2147483647, %s1657
        %s1659 = sadd.f32 %s1658, 0.0
        %s1660 = ssub.f32 %s1530, %s1347
        %s1661 = sand.u32 2147483647, %s1660
        %s1662 = sadd.f32 %s1659, %s1661
        %s1663 = ssub.f32 5.0, %s1662
        %s1664 = smax.f32 %s1663, 0.0
        %s1665 = smul.f32 %s1582, %s1664
        %s1666 = sadd.f32 %s1655, %s1665
        %s1667 = sadd.f32 %s1656, %s1582
        %s1668 = ssub.f32 %s1519, %s1397
        %s1669 = sand.u32 2147483647, %s1668
        %s1670 = sadd.f32 %s1669, 0.0
        %s1671 = ssub.f32 %s1530, %s1408
        %s1672 = sand.u32 2147483647, %s1671
        %s1673 = sadd.f32 %s1670, %s1672
        %s1674 = ssub.f32 5.0, %s1673
        %s1675 = smax.f32 %s1674, 0.0
        %s1676 = smul.f32 %s1617, %s1675
        %s1677 = sadd.f32 %s1666, %s1676
        %s1678 = sadd.f32 %s1667, %s1617
        %s1679 = ssub.f32 %s1519, %s1458
        %s1680 = sand.u32 2147483647, %s1679
        %s1681 = sadd.f32 %s1680, 0.0
        %s1682 = ssub.f32 %s1530, %s1469
        %s1683 = sand.u32 2147483647, %s1682
        %s1684 = sadd.f32 %s1681, %s1683
        %s1685 = ssub.f32 5.0, %s1684
        %s1686 = smax.f32 %s1685, 0.0
        %s1687 = smul.f32 %s1651, %s1686
        %s1688 = sadd.f32 %s1677, %s1687
        %s1689 = sadd.f32 %s1678, %s1651
        %v1690 = vstv %s1551
        %v1691 = vmul.f32 %v1690, %v618
        %v1692 = vstv %s1688
        %v1693 = vmul.f32 %v1692, %v618
        %v1694 = vstv %s1689
        %v1695 = vmul.f32 %v1694, %v618
        %vm1696 = vcmask 1040384
        %v1697 = vsel %vm1696, %v678, %v685
        %vm1698 = vcmask 1041408
        %v1699 = vsel %vm1698, %v1697, %v691
        %vm1700 = vcmask 1042432
        %v1701 = vsel %vm1700, %v1699, %v697
        %vm1702 = vcmask 1043456
        %v1703 = vsel %vm1702, %v1701, %v747
        %vm1704 = vcmask 1044480
        %v1705 = vsel %vm1704, %v1703, %v775
        %vm1706 = vcmask 1045504
        %v1707 = vsel %vm1706, %v1705, %v1057
        %vm1708 = vcmask 1046528
        %v1709 = vsel %vm1708, %v1707, %v1198
        %v1710 = vsel %vm1696, %v1200, %v1202
        %v1711 = vsel %vm1698, %v1710, %v1249
        %v1712 = vsel %vm1700, %v1711, %v1256
        %v1713 = vsel %vm1702, %v1712, %v1262
        %v1714 = vsel %vm1704, %v1713, %v1268
        %v1715 = vsel %vm1706, %v1714, %v1550
        %v1716 = vsel %vm1708, %v1715, %v1691
        %v1717 = vsel %vm1696, %v1693, %v1695
        %1718 = vst [vmem:[%s613] sm:$0xff] %v1709
        %1719 = vst [vmem:[%s613 + $0x8] sm:$0xff] %v1716
        %1720 = vst [vmem:[%s613 + $0x10] sm:$0x3] %v1717
        %s1721 = sand.u32 %s271, 1
        %s1722 = scalar_lea.sflag [#allocation4], %s1721
        %s1723 = sand.u32 %s271, 1
        %s1724 = smul.addr %s1723, 8
        %s1725 = scalar_lea.vmem [#allocation17], %s1724
        %p1726 = scmp.lt.s32.totalorder %s39, 1
        %s1727 = scalar_select %p1726, %s39, 1
        %s1728 = smul.addr %s1727, 3
        %s1729 = smul.addr %s1728, 8
        %s1730 = scalar_lea.vmem %s10, %s1729
        // Predicated region
        $region89: #{tpu_custom_call.1} parent=55 // pred_check
          %p1731 = pneg %p281
        $region90: #{tpu_custom_call.1} parent=55 // pred_check_branch
          %1733 = sbr.rel (%p1731) target = $region92
        $region91: #{tpu_custom_call.1} parent=55 // pred_region
          %s1735 = ssub.s32 128, 128
          %1736 = vsyncadd %s1722, %s1735
          %s1737 = smul.addr %s39, 128
          %s1738 = scalar_lea.hbm %s9, %s1737
          %s1740 = sshll.u32 %s1725, 4
          %s1741 = int_to_ptr.vmem [resolvable:$true] %s1740
          %1743 = dma.vmem_to_hbm [thread:$0]  %s1741, 128, %s1738, %s1722
        $region92: #{tpu_custom_call.1} parent=55 // pred_fallthru
          _
        // Predicated region
        $region93: #{tpu_custom_call.1} parent=55 // pred_check
          %p1744 = pneg %p307
        $region94: #{tpu_custom_call.1} parent=55 // pred_check_branch
          %1746 = sbr.rel (%p1744) target = $region96
        $region95: #{tpu_custom_call.1} parent=55 // pred_region
          _
        $region96: #{tpu_custom_call.1} parent=55 // pred_fallthru
          _
      $region56: #{tpu_custom_call.1} parent=5 // pred_fallthru
        _
      %p1747 = scmp.le.s32.totalorder 2, %s34
      // Predicated region
      $region97: #{tpu_custom_call.1} parent=5 // pred_check
        %p1748 = pneg %p1747
      $region98: #{tpu_custom_call.1} parent=5 // pred_check_branch
        %1750 = sbr.rel (%p1748) target = $region100
      $region99: #{tpu_custom_call.1} parent=5 // pred_region
        %s1751 = ssub.s32 %s34, 2
        // Predicated region
        $region101: #{tpu_custom_call.1} parent=99 // pred_check
          %p1752 = pneg %p287
        $region102: #{tpu_custom_call.1} parent=99 // pred_check_branch
          %1754 = sbr.rel (%p1752) target = $region104
        $region103: #{tpu_custom_call.1} parent=99 // pred_region
          %s1755 = sand.u32 %s272, 1
          %s1756 = scalar_lea.sflag [#allocation4], %s1755
          %s1757 = sand.u32 %s272, 1
          %s1758 = smul.addr %s1757, 8
          %s1759 = scalar_lea.vmem [#allocation17], %s1758
          %1760 = dma.done %s1756, 128
        $region104: #{tpu_custom_call.1} parent=99 // pred_fallthru
          _
        // Predicated region
        $region105: #{tpu_custom_call.1} parent=99 // pred_check
          %p1761 = pneg %p313
        $region106: #{tpu_custom_call.1} parent=99 // pred_check_branch
          %1763 = sbr.rel (%p1761) target = $region108
        $region107: #{tpu_custom_call.1} parent=99 // pred_region
          %p1764 = scmp.lt.s32.totalorder %s40, 1
          %s1765 = scalar_select %p1764, %s40, 1
          %s1766 = smul.addr %s1765, 3
          %s1767 = smul.addr %s1766, 8
          %s1768 = scalar_lea.vmem %s10, %s1767
        $region108: #{tpu_custom_call.1} parent=99 // pred_fallthru
          _
      $region100: #{tpu_custom_call.1} parent=5 // pred_fallthru
        _
    $region6: #{tpu_custom_call.1} parent=1 // loop_footer
      %s38 = sadd.s32 1, %s34
    $region7: #{tpu_custom_call.1} parent=1 // loop_footer_branch
      %33 = sbr.rel target = $region3
    $region8: #{tpu_custom_call.1} parent=1 // loop_exit
      _
    %1769 = vsyncpa [#allocation3], 1
    %s1770 = scalar_lea.sflag [#allocation3], 1
    %1771 = vsyncpa %s1770, 1
    %1772 = vsyncpa [#allocation10], 1
    %s1773 = scalar_lea.sflag [#allocation10], 1
    %1774 = vsyncpa %s1773, 1
    %1775 = vsyncpa [#allocation13], 1
    %s1776 = scalar_lea.sflag [#allocation13], 1
    %1777 = vsyncpa %s1776, 1
    %1778 = vsyncpa [#allocation16], 1
    %s1779 = scalar_lea.sflag [#allocation16], 1
    %1780 = vsyncpa %s1779, 1
    %1781 = vsyncpa [#allocation4], 1
    %s1782 = scalar_lea.sflag [#allocation4], 1
    %1783 = vsyncpa %s1782, 1
    %1784 = vsyncpa [#allocation5], 1
    %s1785 = scalar_lea.sflag [#allocation5], 1
    %1786 = vsyncpa %s1785, 1
    %1787 = vsyncpa [#allocation7], 1

</llo_original>
